<compile_context>
chip_gen: v7x
topology: tpu7x:2x2x1
jax: 0.10.0
libtpu: 0.0.40
codegen_flags: <defaults>
</compile_context>

<pallas_src>
import functools
import math

import jax
import jax.numpy as jnp
from jax import lax
from jax.experimental import pallas as pl
from jax.experimental.pallas import tpu as pltpu


# ----------------------------------------------------------------------------
# small in-kernel math helpers
# ----------------------------------------------------------------------------
def _gelu(x):
    # tanh-form GELU (what jax.nn.gelu uses by default): tanh runs on the EUP
    # slot instead of a ~10-op VALU erf polynomial.  |dev| from exact erf-GELU
    # is ~3e-4 absolute.
    c = 0.7978845608028654  # sqrt(2/pi)
    return 0.5 * x * (1.0 + jnp.tanh(c * (x + 0.044715 * x * x * x)))


def _layernorm(z, g, b, eps):
    mu = jnp.mean(z, axis=-1, keepdims=True)
    var = jnp.mean(jnp.square(z - mu), axis=-1, keepdims=True)
    return (z - mu) * lax.rsqrt(var + eps) * g + b


def _dot_nt(a, b):
    # a: (M, K), b: (N, K) -> (M, N) == a @ b.T without an explicit transpose.
    return lax.dot_general(a, b, (((1,), (1,)), ((), ())),
                           preferred_element_type=jnp.float32)


def _attend(q, k, v, wo, bias, n_head, d_k, d_v):
    """Multi-head attention core.  q:(Lq,H*dk) k:(Lk,H*dk) v:(Lk,H*dv)
    wo:(H*dv,D) bias broadcastable to (Lq,Lk).  Returns (Lq, D) (pre out-bias)."""
    scale = 1.0 / math.sqrt(d_k)
    out = None
    for i in range(n_head):                                     # static unroll
        qh = q[:, i * d_k:(i + 1) * d_k]
        kh = k[:, i * d_k:(i + 1) * d_k]
        vh = v[:, i * d_v:(i + 1) * d_v]
        s = _dot_nt(qh, kh) * scale + bias                      # (Lq, Lk)
        s = s - jnp.max(s, axis=-1, keepdims=True)
        p = jnp.exp(s)
        p = p * pl.reciprocal(jnp.sum(p, axis=-1, keepdims=True), approx=True)
        ctx = jnp.dot(p, vh, preferred_element_type=jnp.float32)     # (Lq, dv)
        contrib = jnp.dot(ctx, wo[i * d_v:(i + 1) * d_v, :],
                          preferred_element_type=jnp.float32)        # (Lq, D)
        out = contrib if out is None else out + contrib
    return out


# ----------------------------------------------------------------------------
# the fused whole-model kernel
# grid = (batch, n_layer); batch is "parallel", layers are the carried axis.
# ----------------------------------------------------------------------------
def _hypformer_kernel(
        # per-batch inputs
        q0_ref, xenc_ref, dec_kb_ref, enc_kb_ref,
        # shared inputs
        tgt_bias_ref,
        map_w1_ref, map_b1_ref, map_w2_ref, map_b2_ref,
        labels_ref, hq_w_ref, hq_b_ref, hk_w_ref, hk_b_ref,
        # per-layer stacked inputs (indexed by grid axis 1)
        sa_wqkv_ref, sa_bqkv_ref, sa_wo_ref, sa_bo_ref, ln1_g_ref, ln1_b_ref,
        ca_wq_ref, ca_bq_ref, ca_wkv_ref, ca_bkv_ref, ca_wo_ref, ca_bo_ref,
        ln2_g_ref, ln2_b_ref,
        ff_w1_ref, ff_b1_ref, ff_w2_ref, ff_b2_ref, ln3_g_ref, ln3_b_ref,
        # output
        logits_ref,
        # scratch (persists across the layer axis)
        h_sc, k_sc,
        *, n_head, d_k, d_v, eps):
    layer_idx = pl.program_id(1)
    n_layer = pl.num_programs(1)
    Hdk = n_head * d_k

    # ---- layer-0 prologue: encoder `map` MLP + decoder input into scratch ---
    @pl.when(layer_idx == 0)
    def _():
        x = xenc_ref[...]                                            # (Ls, De)
        hm = jnp.dot(x, map_w1_ref[...],
                     preferred_element_type=jnp.float32) + map_b1_ref[...]
        hm = _gelu(hm)
        k_sc[...] = jnp.dot(hm, map_w2_ref[...],
                            preferred_element_type=jnp.float32) + map_b2_ref[...]
        h_sc[...] = q0_ref[...]

    h = h_sc[...]                                                    # (Ld, D)
    k_enc = k_sc[...]                                                # (Ls, D)

    # ---- self attention (fused QKV projection) ------------------------------
    qkv = jnp.dot(h, sa_wqkv_ref[...],
                  preferred_element_type=jnp.float32) + sa_bqkv_ref[...]
    self_bias = tgt_bias_ref[...] + dec_kb_ref[...]           # (Ld,Ld) + (1,Ld)
    sa = _attend(qkv[:, :Hdk], qkv[:, Hdk:2 * Hdk], qkv[:, 2 * Hdk:],
                 sa_wo_ref[...], self_bias, n_head, d_k, d_v) + sa_bo_ref[...]
    h = _layernorm(h + sa, ln1_g_ref[...], ln1_b_ref[...], eps)

    # ---- cross attention (fused KV projection) ------------------------------
    q = jnp.dot(h, ca_wq_ref[...],
                preferred_element_type=jnp.float32) + ca_bq_ref[...]
    kv = jnp.dot(k_enc, ca_wkv_ref[...],
                 preferred_element_type=jnp.float32) + ca_bkv_ref[...]
    ca = _attend(q, kv[:, :Hdk], kv[:, Hdk:],
                 ca_wo_ref[...], enc_kb_ref[...], n_head, d_k, d_v) + ca_bo_ref[...]
    h = _layernorm(h + ca, ln2_g_ref[...], ln2_b_ref[...], eps)

    # ---- feed-forward --------------------------------------------------------
    f = jnp.dot(h, ff_w1_ref[...],
                preferred_element_type=jnp.float32) + ff_b1_ref[...]
    f = _gelu(f)
    f = jnp.dot(f, ff_w2_ref[...],
                preferred_element_type=jnp.float32) + ff_b2_ref[...]
    h = _layernorm(h + f, ln3_g_ref[...], ln3_b_ref[...], eps)

    h_sc[...] = h

    # ---- last-layer epilogue: scoring head, one full-width q @ k^T ----------
    @pl.when(layer_idx == n_layer - 1)
    def _():
        hq = jnp.dot(h, hq_w_ref[...],
                     preferred_element_type=jnp.float32) + hq_b_ref[...]
        hk = jnp.dot(labels_ref[...], hk_w_ref[...],
                     preferred_element_type=jnp.float32) + hk_b_ref[...]
        # sum over heads of (q_h @ k_h^T)/sqrt(d_k) == full-width contraction.
        logits_ref[...] = _dot_nt(hq, hk) * (1.0 / math.sqrt(d_k))


# ----------------------------------------------------------------------------
# Parameter construction (deterministic, in-script)
# ----------------------------------------------------------------------------
def init_params(key, cfg):
    d_encoder, d_eh, d_model = cfg["d_encoder"], cfg["d_eh"], cfg["d_model"]
    d_k, d_v, n_head, d_ff = cfg["d_k"], cfg["d_v"], cfg["n_head"], cfg["d_ff"]
    n_layer, n_label, max_depth = cfg["n_layer"], cfg["n_label"], cfg["max_depth"]

    keys = iter(jax.random.split(key, 256))

    def dense(din, dout):
        w = jax.random.normal(next(keys), (din, dout), jnp.float32) * 0.05
        b = jnp.zeros((dout,), jnp.float32)
        return w, b

    params = {}
    # torch.rand -> uniform [0, 1)
    params["labels"] = jax.random.uniform(next(keys), (n_label, d_model), jnp.float32)
    params["positional"] = jax.random.uniform(next(keys), (max_depth, d_model), jnp.float32)

    w1, b1 = dense(d_encoder, d_eh)
    w2, b2 = dense(d_eh, d_model)
    params["map"] = (w1, b1, w2, b2)

    layers = []
    for _ in range(n_layer):
        def attn_params():
            wq, bq = dense(d_model, n_head * d_k)
            wk, bk = dense(d_model, n_head * d_k)
            wv, bv = dense(d_model, n_head * d_v)
            wo, bo = dense(n_head * d_v, d_model)
            return (wq, bq, wk, bk, wv, bv, wo, bo)

        fw1, fb1 = dense(d_model, d_ff)
        fw2, fb2 = dense(d_ff, d_model)
        layers.append({
            "self": attn_params(),
            "ln1": (jnp.ones((d_model,), jnp.float32), jnp.zeros((d_model,), jnp.float32)),
            "cross": attn_params(),
            "ln2": (jnp.ones((d_model,), jnp.float32), jnp.zeros((d_model,), jnp.float32)),
            "ffn": (fw1, fb1, fw2, fb2),
            "ln3": (jnp.ones((d_model,), jnp.float32), jnp.zeros((d_model,), jnp.float32)),
        })
    params["layers"] = layers

    owq, obq = dense(d_model, n_head * d_k)
    owk, obk = dense(d_model, n_head * d_k)
    params["out"] = (owq, obq, owk, obk)
    return params


# ----------------------------------------------------------------------------
# Hypformer.forward
# ----------------------------------------------------------------------------
def hypformer_forward(params, cfg, bert_last_hidden_state, decoder_input_ids,
                      mask_bert=None, mask_decoder=None, mask_tgt=None, mask_label=None):
    n_head, d_k, d_v = cfg["n_head"], cfg["d_k"], cfg["d_v"]
    d_model, d_encoder = cfg["d_model"], cfg["d_encoder"]
    n_layer, n_label = cfg["n_layer"], cfg["n_label"]
    labels = params["labels"]
    B, Ld = decoder_input_ids.shape
    Ls = bert_last_hidden_state.shape[1]

    x_enc = bert_last_hidden_state.astype(jnp.float32)

    # q = self.labels[decoder_input_ids] + self.positional[:Ld]   (gather = glue)
    q0 = jnp.take(labels, decoder_input_ids, axis=0) + params["positional"][:Ld][None, :, :]

    # boolean masks (True == masked out) -> small additive biases.
    neg = jnp.float32(-1e9)
    tgt_bias = (jnp.where(mask_tgt, neg, 0.0).astype(jnp.float32)
                if mask_tgt is not None else jnp.zeros((Ld, Ld), jnp.float32))
    dec_kb = (jnp.where(mask_decoder, neg, 0.0).astype(jnp.float32)[:, None, :]
              if mask_decoder is not None else jnp.zeros((B, 1, Ld), jnp.float32))
    enc_kb = (jnp.where(mask_bert, neg, 0.0).astype(jnp.float32)[:, None, :]
              if mask_bert is not None else jnp.zeros((B, 1, Ls), jnp.float32))

    # zero-pad label rows to a multiple of 128 -> lane-dense logits store.
    n_pad = ((n_label + 127) // 128) * 128
    labels_p = jnp.zeros((n_pad, d_model), jnp.float32).at[:n_label, :].set(labels)

    # ---- pack / fuse weights (tiny one-off glue ops) -------------------------
    mw1, mb1, mw2, mb2 = params["map"]
    owq, obq, owk, obk = params["out"]
    L = params["layers"]

    def stk(fn):
        return jnp.stack([fn(y) for y in L], axis=0)

    sa_wqkv = stk(lambda y: jnp.concatenate([y["self"][0], y["self"][2], y["self"][4]], axis=1))
    sa_bqkv = stk(lambda y: jnp.concatenate([y["self"][1], y["self"][3], y["self"][5]])[None, :])
    sa_wo   = stk(lambda y: y["self"][6])
    sa_bo   = stk(lambda y: y["self"][7][None, :])
    ln1_g   = stk(lambda y: y["ln1"][0][None, :])
    ln1_b   = stk(lambda y: y["ln1"][1][None, :])
    ca_wq   = stk(lambda y: y["cross"][0])
    ca_bq   = stk(lambda y: y["cross"][1][None, :])
    ca_wkv  = stk(lambda y: jnp.concatenate([y["cross"][2], y["cross"][4]], axis=1))
    ca_bkv  = stk(lambda y: jnp.concatenate([y["cross"][3], y["cross"][5]])[None, :])
    ca_wo   = stk(lambda y: y["cross"][6])
    ca_bo   = stk(lambda y: y["cross"][7][None, :])
    ln2_g   = stk(lambda y: y["ln2"][0][None, :])
    ln2_b   = stk(lambda y: y["ln2"][1][None, :])
    ff_w1   = stk(lambda y: y["ffn"][0])
    ff_b1   = stk(lambda y: y["ffn"][1][None, :])
    ff_w2   = stk(lambda y: y["ffn"][2])
    ff_b2   = stk(lambda y: y["ffn"][3][None, :])
    ln3_g   = stk(lambda y: y["ln3"][0][None, :])
    ln3_b   = stk(lambda y: y["ln3"][1][None, :])

    # ---- BlockSpecs ----------------------------------------------------------
    def batch_spec(trailing):
        return pl.BlockSpec((None,) + tuple(trailing), lambda b, l: (b, 0, 0))

    def const_spec(arr):
        nd = arr.ndim
        return pl.BlockSpec(arr.shape, lambda b, l: (0,) * nd)

    def layer_spec(arr):
        return pl.BlockSpec((None,) + tuple(arr.shape[1:]), lambda b, l: (l, 0, 0))

    args, specs = [], []

    def add(arr, spec):
        args.append(arr)
        specs.append(spec)

    add(q0, batch_spec((Ld, d_model)))
    add(x_enc, batch_spec((Ls, d_encoder)))
    add(dec_kb, batch_spec((1, Ld)))
    add(enc_kb, batch_spec((1, Ls)))
    add(tgt_bias, const_spec(tgt_bias))
    for w in (mw1, mb1.reshape(1, -1), mw2, mb2.reshape(1, -1),
              labels_p, owq, obq.reshape(1, -1), owk, obk.reshape(1, -1)):
        add(w, const_spec(w))
    for w in (sa_wqkv, sa_bqkv, sa_wo, sa_bo, ln1_g, ln1_b,
              ca_wq, ca_bq, ca_wkv, ca_bkv, ca_wo, ca_bo, ln2_g, ln2_b,
              ff_w1, ff_b1, ff_w2, ff_b2, ln3_g, ln3_b):
        add(w, layer_spec(w))

    kernel = functools.partial(_hypformer_kernel,
                               n_head=n_head, d_k=d_k, d_v=d_v, eps=1e-5)

    logits_full = pl.pallas_call(
        kernel,
        out_shape=jax.ShapeDtypeStruct((B, Ld, n_pad), jnp.float32),
        grid=(B, n_layer),
        in_specs=specs,
        out_specs=pl.BlockSpec((None, Ld, n_pad), lambda b, l: (b, 0, 0)),
        scratch_shapes=[pltpu.VMEM((Ld, d_model), jnp.float32),   # carried h
                        pltpu.VMEM((Ls, d_model), jnp.float32)],  # encoder proj
        compiler_params=pltpu.CompilerParams(
            dimension_semantics=("parallel", "arbitrary")),
    )(*args)

    logits = logits_full[..., :n_label]

    # logits[mask_label] = -1000  (functional equivalent of in-place bool assign)
    if mask_label is not None:
        logits = jnp.where(mask_label, jnp.float32(-1000.0), logits)
    return logits


# ----------------------------------------------------------------------------
if __name__ == "__main__":
    cfg = dict(d_encoder=16, d_eh=32, d_model=32, d_k=8, d_v=8, n_head=4,
               d_ff=64, n_layer=2, n_label=10, max_depth=8)

    key = jax.random.PRNGKey(0)
    pkey, xkey, idkey = jax.random.split(key, 3)
    params = init_params(pkey, cfg)

    B, Ls, Ld = 2, 16, 8
    bert_last_hidden_state = jax.random.normal(xkey, (B, Ls, cfg["d_encoder"]), jnp.float32)
    decoder_input_ids = jax.random.randint(idkey, (B, Ld), 0, cfg["n_label"])
    mask_tgt = jnp.triu(jnp.ones((Ld, Ld), dtype=bool), k=1)   # causal target mask

    logits = hypformer_forward(params, cfg, bert_last_hidden_state, decoder_input_ids,
                               mask_bert=None, mask_decoder=None,
                               mask_tgt=mask_tgt, mask_label=None)
    logits = jax.block_until_ready(logits)

    assert logits.shape == (B, Ld, cfg["n_label"]), logits.shape
    assert bool(jnp.all(jnp.isfinite(logits)))
    print("KERNEL_OK")
</pallas_src>

<mosaic_0001>
module attributes {stable_mosaic.version = 11 : i64} {
  func.func @_hypformer_kernel(%arg0: i32, %arg1: i32, %arg2: memref<1x8x32xf32, #tpu.memory_space<vmem>>, %arg3: memref<1x16x16xf32, #tpu.memory_space<vmem>>, %arg4: memref<1x1x8xf32, #tpu.memory_space<vmem>>, %arg5: memref<1x1x16xf32, #tpu.memory_space<vmem>>, %arg6: memref<8x8xf32, #tpu.memory_space<vmem>>, %arg7: memref<16x32xf32, #tpu.memory_space<vmem>>, %arg8: memref<1x32xf32, #tpu.memory_space<vmem>>, %arg9: memref<32x32xf32, #tpu.memory_space<vmem>>, %arg10: memref<1x32xf32, #tpu.memory_space<vmem>>, %arg11: memref<128x32xf32, #tpu.memory_space<vmem>>, %arg12: memref<32x32xf32, #tpu.memory_space<vmem>>, %arg13: memref<1x32xf32, #tpu.memory_space<vmem>>, %arg14: memref<32x32xf32, #tpu.memory_space<vmem>>, %arg15: memref<1x32xf32, #tpu.memory_space<vmem>>, %arg16: memref<1x32x96xf32, #tpu.memory_space<vmem>>, %arg17: memref<1x1x96xf32, #tpu.memory_space<vmem>>, %arg18: memref<1x32x32xf32, #tpu.memory_space<vmem>>, %arg19: memref<1x1x32xf32, #tpu.memory_space<vmem>>, %arg20: memref<1x1x32xf32, #tpu.memory_space<vmem>>, %arg21: memref<1x1x32xf32, #tpu.memory_space<vmem>>, %arg22: memref<1x32x32xf32, #tpu.memory_space<vmem>>, %arg23: memref<1x1x32xf32, #tpu.memory_space<vmem>>, %arg24: memref<1x32x64xf32, #tpu.memory_space<vmem>>, %arg25: memref<1x1x64xf32, #tpu.memory_space<vmem>>, %arg26: memref<1x32x32xf32, #tpu.memory_space<vmem>>, %arg27: memref<1x1x32xf32, #tpu.memory_space<vmem>>, %arg28: memref<1x1x32xf32, #tpu.memory_space<vmem>>, %arg29: memref<1x1x32xf32, #tpu.memory_space<vmem>>, %arg30: memref<1x32x64xf32, #tpu.memory_space<vmem>>, %arg31: memref<1x1x64xf32, #tpu.memory_space<vmem>>, %arg32: memref<1x64x32xf32, #tpu.memory_space<vmem>>, %arg33: memref<1x1x32xf32, #tpu.memory_space<vmem>>, %arg34: memref<1x1x32xf32, #tpu.memory_space<vmem>>, %arg35: memref<1x1x32xf32, #tpu.memory_space<vmem>>, %arg36: memref<1x8x128xf32, #tpu.memory_space<vmem>>, %arg37: memref<8x32xf32, #tpu.memory_space<vmem>>, %arg38: memref<16x32xf32, #tpu.memory_space<vmem>>) attributes {dimension_semantics = [#tpu.dimension_semantics<parallel>, #tpu.dimension_semantics<arbitrary>], iteration_bounds = array<i64: 2, 2>, scalar_prefetch = 0 : i64, scratch_operands = 2 : i64, tpu.core_type = #tpu.core_type<tc>, window_params = [{transform_indices = @transform_0, window_bounds = array<i64: 1, 8, 32>}, {transform_indices = @transform_1, window_bounds = array<i64: 1, 16, 16>}, {transform_indices = @transform_2, window_bounds = array<i64: 1, 1, 8>}, {transform_indices = @transform_3, window_bounds = array<i64: 1, 1, 16>}, {pipeline_mode = #tpu.pipeline_mode<synchronous>, transform_indices = @transform_4, window_bounds = array<i64: 8, 8>}, {pipeline_mode = #tpu.pipeline_mode<synchronous>, transform_indices = @transform_5, window_bounds = array<i64: 16, 32>}, {pipeline_mode = #tpu.pipeline_mode<synchronous>, transform_indices = @transform_6, window_bounds = array<i64: 1, 32>}, {pipeline_mode = #tpu.pipeline_mode<synchronous>, transform_indices = @transform_7, window_bounds = array<i64: 32, 32>}, {pipeline_mode = #tpu.pipeline_mode<synchronous>, transform_indices = @transform_8, window_bounds = array<i64: 1, 32>}, {pipeline_mode = #tpu.pipeline_mode<synchronous>, transform_indices = @transform_9, window_bounds = array<i64: 128, 32>}, {pipeline_mode = #tpu.pipeline_mode<synchronous>, transform_indices = @transform_10, window_bounds = array<i64: 32, 32>}, {pipeline_mode = #tpu.pipeline_mode<synchronous>, transform_indices = @transform_11, window_bounds = array<i64: 1, 32>}, {pipeline_mode = #tpu.pipeline_mode<synchronous>, transform_indices = @transform_12, window_bounds = array<i64: 32, 32>}, {pipeline_mode = #tpu.pipeline_mode<synchronous>, transform_indices = @transform_13, window_bounds = array<i64: 1, 32>}, {transform_indices = @transform_14, window_bounds = array<i64: 1, 32, 96>}, {transform_indices = @transform_15, window_bounds = array<i64: 1, 1, 96>}, {transform_indices = @transform_16, window_bounds = array<i64: 1, 32, 32>}, {transform_indices = @transform_17, window_bounds = array<i64: 1, 1, 32>}, {transform_indices = @transform_18, window_bounds = array<i64: 1, 1, 32>}, {transform_indices = @transform_19, window_bounds = array<i64: 1, 1, 32>}, {transform_indices = @transform_20, window_bounds = array<i64: 1, 32, 32>}, {transform_indices = @transform_21, window_bounds = array<i64: 1, 1, 32>}, {transform_indices = @transform_22, window_bounds = array<i64: 1, 32, 64>}, {transform_indices = @transform_23, window_bounds = array<i64: 1, 1, 64>}, {transform_indices = @transform_24, window_bounds = array<i64: 1, 32, 32>}, {transform_indices = @transform_25, window_bounds = array<i64: 1, 1, 32>}, {transform_indices = @transform_26, window_bounds = array<i64: 1, 1, 32>}, {transform_indices = @transform_27, window_bounds = array<i64: 1, 1, 32>}, {transform_indices = @transform_28, window_bounds = array<i64: 1, 32, 64>}, {transform_indices = @transform_29, window_bounds = array<i64: 1, 1, 64>}, {transform_indices = @transform_30, window_bounds = array<i64: 1, 64, 32>}, {transform_indices = @transform_31, window_bounds = array<i64: 1, 1, 32>}, {transform_indices = @transform_32, window_bounds = array<i64: 1, 1, 32>}, {transform_indices = @transform_33, window_bounds = array<i64: 1, 1, 32>}, {transform_indices = @transform_34, window_bounds = array<i64: 1, 8, 128>}]} {
    %c0_i32 = arith.constant 0 : i32
    %0 = arith.cmpi eq, %arg1, %c0_i32 : i32
    %1 = arith.extui %0 : i1 to i32
    %c0_i32_0 = arith.constant 0 : i32
    %2 = arith.cmpi ne, %1, %c0_i32_0 : i32
    scf.if %2 {
      %c0_146 = arith.constant 0 : index
      %c0_147 = arith.constant 0 : index
      %c0_148 = arith.constant 0 : index
      %332 = vector.load %arg3[%c0_146, %c0_147, %c0_148] : memref<1x16x16xf32, #tpu.memory_space<vmem>>, vector<1x16x16xf32>
      %333 = vector.shape_cast %332 : vector<1x16x16xf32> to vector<16x16xf32>
      %c0_149 = arith.constant 0 : index
      %c0_150 = arith.constant 0 : index
      %334 = vector.load %arg7[%c0_149, %c0_150] : memref<16x32xf32, #tpu.memory_space<vmem>>, vector<16x32xf32>
      %cst_151 = arith.constant dense<0.000000e+00> : vector<16x32xf32>
      %335 = tpu.matmul %333, %334, %cst_151 {dimension_numbers = #tpu.dot_dimension_numbers<[1], [0], [0], [1], [0, 0, 1, 1], [], []>} : vector<16x16xf32>, vector<16x32xf32>, vector<16x32xf32> -> vector<16x32xf32>
      %c0_152 = arith.constant 0 : index
      %c0_153 = arith.constant 0 : index
      %336 = vector.load %arg8[%c0_152, %c0_153] : memref<1x32xf32, #tpu.memory_space<vmem>>, vector<1x32xf32>
      %337 = vector.broadcast %336 : vector<1x32xf32> to vector<16x32xf32>
      %338 = arith.addf %335, %337 : vector<16x32xf32>
      %cst_154 = arith.constant 5.000000e-01 : f32
      %339 = vector.broadcast %cst_154 : f32 to vector<16x32xf32>
      %340 = arith.mulf %339, %338 : vector<16x32xf32>
      %cst_155 = arith.constant 4.471500e-02 : f32
      %341 = vector.broadcast %cst_155 : f32 to vector<16x32xf32>
      %342 = arith.mulf %341, %338 : vector<16x32xf32>
      %343 = arith.mulf %342, %338 : vector<16x32xf32>
      %344 = arith.mulf %343, %338 : vector<16x32xf32>
      %345 = arith.addf %338, %344 : vector<16x32xf32>
      %cst_156 = arith.constant 0.797884583 : f32
      %346 = vector.broadcast %cst_156 : f32 to vector<16x32xf32>
      %347 = arith.mulf %346, %345 : vector<16x32xf32>
      %348 = math.tanh %347 : vector<16x32xf32>
      %cst_157 = arith.constant 1.000000e+00 : f32
      %349 = vector.broadcast %cst_157 : f32 to vector<16x32xf32>
      %350 = arith.addf %349, %348 : vector<16x32xf32>
      %351 = arith.mulf %340, %350 : vector<16x32xf32>
      %c0_158 = arith.constant 0 : index
      %c0_159 = arith.constant 0 : index
      %352 = vector.load %arg9[%c0_158, %c0_159] : memref<32x32xf32, #tpu.memory_space<vmem>>, vector<32x32xf32>
      %cst_160 = arith.constant dense<0.000000e+00> : vector<16x32xf32>
      %353 = tpu.matmul %351, %352, %cst_160 {dimension_numbers = #tpu.dot_dimension_numbers<[1], [0], [0], [1], [0, 0, 1, 1], [], []>} : vector<16x32xf32>, vector<32x32xf32>, vector<16x32xf32> -> vector<16x32xf32>
      %c0_161 = arith.constant 0 : index
      %c0_162 = arith.constant 0 : index
      %354 = vector.load %arg10[%c0_161, %c0_162] : memref<1x32xf32, #tpu.memory_space<vmem>>, vector<1x32xf32>
      %355 = vector.broadcast %354 : vector<1x32xf32> to vector<16x32xf32>
      %356 = arith.addf %353, %355 : vector<16x32xf32>
      %c0_163 = arith.constant 0 : index
      %c0_164 = arith.constant 0 : index
      %357 = vector.load %arg38[%c0_163, %c0_164] : memref<16x32xf32, #tpu.memory_space<vmem>>, vector<16x32xf32>
      tpu.vector_store %arg38[%c0_163, %c0_164], %356 {strides = array<i32>} : memref<16x32xf32, #tpu.memory_space<vmem>>, vector<16x32xf32>,
      %c0_165 = arith.constant 0 : index
      %c0_166 = arith.constant 0 : index
      %c0_167 = arith.constant 0 : index
      %358 = vector.load %arg2[%c0_165, %c0_166, %c0_167] : memref<1x8x32xf32, #tpu.memory_space<vmem>>, vector<1x8x32xf32>
      %359 = vector.shape_cast %358 : vector<1x8x32xf32> to vector<8x32xf32>
      %c0_168 = arith.constant 0 : index
      %c0_169 = arith.constant 0 : index
      %360 = vector.load %arg37[%c0_168, %c0_169] : memref<8x32xf32, #tpu.memory_space<vmem>>, vector<8x32xf32>
      tpu.vector_store %arg37[%c0_168, %c0_169], %359 {strides = array<i32>} : memref<8x32xf32, #tpu.memory_space<vmem>>, vector<8x32xf32>,
    } else {
    }
    %c0 = arith.constant 0 : index
    %c0_1 = arith.constant 0 : index
    %3 = vector.load %arg37[%c0, %c0_1] : memref<8x32xf32, #tpu.memory_space<vmem>>, vector<8x32xf32>
    %c0_2 = arith.constant 0 : index
    %c0_3 = arith.constant 0 : index
    %4 = vector.load %arg38[%c0_2, %c0_3] : memref<16x32xf32, #tpu.memory_space<vmem>>, vector<16x32xf32>
    %c0_4 = arith.constant 0 : index
    %c0_5 = arith.constant 0 : index
    %c0_6 = arith.constant 0 : index
    %5 = vector.load %arg16[%c0_4, %c0_5, %c0_6] : memref<1x32x96xf32, #tpu.memory_space<vmem>>, vector<1x32x96xf32>
    %6 = vector.shape_cast %5 : vector<1x32x96xf32> to vector<32x96xf32>
    %cst = arith.constant dense<0.000000e+00> : vector<8x96xf32>
    %7 = tpu.matmul %3, %6, %cst {dimension_numbers = #tpu.dot_dimension_numbers<[1], [0], [0], [1], [0, 0, 1, 1], [], []>} : vector<8x32xf32>, vector<32x96xf32>, vector<8x96xf32> -> vector<8x96xf32>
    %c0_7 = arith.constant 0 : index
    %c0_8 = arith.constant 0 : index
    %c0_9 = arith.constant 0 : index
    %8 = vector.load %arg17[%c0_7, %c0_8, %c0_9] : memref<1x1x96xf32, #tpu.memory_space<vmem>>, vector<1x1x96xf32>
    %9 = vector.shape_cast %8 : vector<1x1x96xf32> to vector<1x96xf32>
    %10 = vector.broadcast %9 : vector<1x96xf32> to vector<8x96xf32>
    %11 = arith.addf %7, %10 : vector<8x96xf32>
    %c0_10 = arith.constant 0 : index
    %c0_11 = arith.constant 0 : index
    %12 = vector.load %arg6[%c0_10, %c0_11] : memref<8x8xf32, #tpu.memory_space<vmem>>, vector<8x8xf32>
    %c0_12 = arith.constant 0 : index
    %c0_13 = arith.constant 0 : index
    %c0_14 = arith.constant 0 : index
    %13 = vector.load %arg4[%c0_12, %c0_13, %c0_14] : memref<1x1x8xf32, #tpu.memory_space<vmem>>, vector<1x1x8xf32>
    %14 = vector.shape_cast %13 : vector<1x1x8xf32> to vector<1x8xf32>
    %15 = vector.broadcast %14 : vector<1x8xf32> to vector<8x8xf32>
    %16 = arith.addf %12, %15 : vector<8x8xf32>
    %17 = vector.extract_strided_slice %11 {offsets = [0, 0], sizes = [8, 32], strides = [1, 1]} : vector<8x96xf32> to vector<8x32xf32>
    %18 = vector.extract_strided_slice %11 {offsets = [0, 32], sizes = [8, 32], strides = [1, 1]} : vector<8x96xf32> to vector<8x32xf32>
    %19 = vector.extract_strided_slice %11 {offsets = [0, 64], sizes = [8, 32], strides = [1, 1]} : vector<8x96xf32> to vector<8x32xf32>
    %c0_15 = arith.constant 0 : index
    %c0_16 = arith.constant 0 : index
    %c0_17 = arith.constant 0 : index
    %20 = vector.load %arg18[%c0_15, %c0_16, %c0_17] : memref<1x32x32xf32, #tpu.memory_space<vmem>>, vector<1x32x32xf32>
    %21 = vector.shape_cast %20 : vector<1x32x32xf32> to vector<32x32xf32>
    %22 = vector.extract_strided_slice %17 {offsets = [0, 0], sizes = [8, 8], strides = [1, 1]} : vector<8x32xf32> to vector<8x8xf32>
    %23 = vector.extract_strided_slice %18 {offsets = [0, 0], sizes = [8, 8], strides = [1, 1]} : vector<8x32xf32> to vector<8x8xf32>
    %24 = vector.extract_strided_slice %19 {offsets = [0, 0], sizes = [8, 8], strides = [1, 1]} : vector<8x32xf32> to vector<8x8xf32>
    %cst_18 = arith.constant dense<0.000000e+00> : vector<8x8xf32>
    %25 = tpu.matmul %22, %23, %cst_18 {dimension_numbers = #tpu.dot_dimension_numbers<[1], [1], [0], [0], [0, 0, 1, 0], [], []>} : vector<8x8xf32>, vector<8x8xf32>, vector<8x8xf32> -> vector<8x8xf32>
    %cst_19 = arith.constant 0.353553385 : f32
    %26 = vector.broadcast %cst_19 : f32 to vector<8x8xf32>
    %27 = arith.mulf %25, %26 : vector<8x8xf32>
    %28 = arith.addf %27, %16 : vector<8x8xf32>
    %cst_20 = arith.constant dense<0xFF800000> : vector<8xf32>
    %29 = vector.multi_reduction <maximumf>, %28, %cst_20 [1] : vector<8x8xf32> to vector<8xf32>
    %30 = vector.shape_cast %29 : vector<8xf32> to vector<8x1xf32>
    %31 = vector.broadcast %30 : vector<8x1xf32> to vector<8x8xf32>
    %32 = arith.subf %28, %31 : vector<8x8xf32>
    %33 = math.exp %32 : vector<8x8xf32>
    %cst_21 = arith.constant dense<0.000000e+00> : vector<8xf32>
    %34 = vector.multi_reduction <add>, %33, %cst_21 [1] : vector<8x8xf32> to vector<8xf32>
    %35 = vector.shape_cast %34 : vector<8xf32> to vector<8x1xf32>
    %36 = tpu.reciprocal %35 {approx = true} : vector<8x1xf32> -> vector<8x1xf32>
    %37 = vector.broadcast %36 : vector<8x1xf32> to vector<8x8xf32>
    %38 = arith.mulf %33, %37 : vector<8x8xf32>
    %cst_22 = arith.constant dense<0.000000e+00> : vector<8x8xf32>
    %39 = tpu.matmul %38, %24, %cst_22 {dimension_numbers = #tpu.dot_dimension_numbers<[1], [0], [0], [1], [0, 0, 1, 1], [], []>} : vector<8x8xf32>, vector<8x8xf32>, vector<8x8xf32> -> vector<8x8xf32>
    %40 = vector.extract_strided_slice %21 {offsets = [0, 0], sizes = [8, 32], strides = [1, 1]} : vector<32x32xf32> to vector<8x32xf32>
    %cst_23 = arith.constant dense<0.000000e+00> : vector<8x32xf32>
    %41 = tpu.matmul %39, %40, %cst_23 {dimension_numbers = #tpu.dot_dimension_numbers<[1], [0], [0], [1], [0, 0, 1, 1], [], []>} : vector<8x8xf32>, vector<8x32xf32>, vector<8x32xf32> -> vector<8x32xf32>
    %42 = vector.extract_strided_slice %17 {offsets = [0, 8], sizes = [8, 8], strides = [1, 1]} : vector<8x32xf32> to vector<8x8xf32>
    %43 = vector.extract_strided_slice %18 {offsets = [0, 8], sizes = [8, 8], strides = [1, 1]} : vector<8x32xf32> to vector<8x8xf32>
    %44 = vector.extract_strided_slice %19 {offsets = [0, 8], sizes = [8, 8], strides = [1, 1]} : vector<8x32xf32> to vector<8x8xf32>
    %cst_24 = arith.constant dense<0.000000e+00> : vector<8x8xf32>
    %45 = tpu.matmul %42, %43, %cst_24 {dimension_numbers = #tpu.dot_dimension_numbers<[1], [1], [0], [0], [0, 0, 1, 0], [], []>} : vector<8x8xf32>, vector<8x8xf32>, vector<8x8xf32> -> vector<8x8xf32>
    %cst_25 = arith.constant 0.353553385 : f32
    %46 = vector.broadcast %cst_25 : f32 to vector<8x8xf32>
    %47 = arith.mulf %45, %46 : vector<8x8xf32>
    %48 = arith.addf %47, %16 : vector<8x8xf32>
    %cst_26 = arith.constant dense<0xFF800000> : vector<8xf32>
    %49 = vector.multi_reduction <maximumf>, %48, %cst_26 [1] : vector<8x8xf32> to vector<8xf32>
    %50 = vector.shape_cast %49 : vector<8xf32> to vector<8x1xf32>
    %51 = vector.broadcast %50 : vector<8x1xf32> to vector<8x8xf32>
    %52 = arith.subf %48, %51 : vector<8x8xf32>
    %53 = math.exp %52 : vector<8x8xf32>
    %cst_27 = arith.constant dense<0.000000e+00> : vector<8xf32>
    %54 = vector.multi_reduction <add>, %53, %cst_27 [1] : vector<8x8xf32> to vector<8xf32>
    %55 = vector.shape_cast %54 : vector<8xf32> to vector<8x1xf32>
    %56 = tpu.reciprocal %55 {approx = true} : vector<8x1xf32> -> vector<8x1xf32>
    %57 = vector.broadcast %56 : vector<8x1xf32> to vector<8x8xf32>
    %58 = arith.mulf %53, %57 : vector<8x8xf32>
    %cst_28 = arith.constant dense<0.000000e+00> : vector<8x8xf32>
    %59 = tpu.matmul %58, %44, %cst_28 {dimension_numbers = #tpu.dot_dimension_numbers<[1], [0], [0], [1], [0, 0, 1, 1], [], []>} : vector<8x8xf32>, vector<8x8xf32>, vector<8x8xf32> -> vector<8x8xf32>
    %60 = vector.extract_strided_slice %21 {offsets = [8, 0], sizes = [8, 32], strides = [1, 1]} : vector<32x32xf32> to vector<8x32xf32>
    %cst_29 = arith.constant dense<0.000000e+00> : vector<8x32xf32>
    %61 = tpu.matmul %59, %60, %cst_29 {dimension_numbers = #tpu.dot_dimension_numbers<[1], [0], [0], [1], [0, 0, 1, 1], [], []>} : vector<8x8xf32>, vector<8x32xf32>, vector<8x32xf32> -> vector<8x32xf32>
    %62 = arith.addf %41, %61 : vector<8x32xf32>
    %63 = vector.extract_strided_slice %17 {offsets = [0, 16], sizes = [8, 8], strides = [1, 1]} : vector<8x32xf32> to vector<8x8xf32>
    %64 = vector.extract_strided_slice %18 {offsets = [0, 16], sizes = [8, 8], strides = [1, 1]} : vector<8x32xf32> to vector<8x8xf32>
    %65 = vector.extract_strided_slice %19 {offsets = [0, 16], sizes = [8, 8], strides = [1, 1]} : vector<8x32xf32> to vector<8x8xf32>
    %cst_30 = arith.constant dense<0.000000e+00> : vector<8x8xf32>
    %66 = tpu.matmul %63, %64, %cst_30 {dimension_numbers = #tpu.dot_dimension_numbers<[1], [1], [0], [0], [0, 0, 1, 0], [], []>} : vector<8x8xf32>, vector<8x8xf32>, vector<8x8xf32> -> vector<8x8xf32>
    %cst_31 = arith.constant 0.353553385 : f32
    %67 = vector.broadcast %cst_31 : f32 to vector<8x8xf32>
    %68 = arith.mulf %66, %67 : vector<8x8xf32>
    %69 = arith.addf %68, %16 : vector<8x8xf32>
    %cst_32 = arith.constant dense<0xFF800000> : vector<8xf32>
    %70 = vector.multi_reduction <maximumf>, %69, %cst_32 [1] : vector<8x8xf32> to vector<8xf32>
    %71 = vector.shape_cast %70 : vector<8xf32> to vector<8x1xf32>
    %72 = vector.broadcast %71 : vector<8x1xf32> to vector<8x8xf32>
    %73 = arith.subf %69, %72 : vector<8x8xf32>
    %74 = math.exp %73 : vector<8x8xf32>
    %cst_33 = arith.constant dense<0.000000e+00> : vector<8xf32>
    %75 = vector.multi_reduction <add>, %74, %cst_33 [1] : vector<8x8xf32> to vector<8xf32>
    %76 = vector.shape_cast %75 : vector<8xf32> to vector<8x1xf32>
    %77 = tpu.reciprocal %76 {approx = true} : vector<8x1xf32> -> vector<8x1xf32>
    %78 = vector.broadcast %77 : vector<8x1xf32> to vector<8x8xf32>
    %79 = arith.mulf %74, %78 : vector<8x8xf32>
    %cst_34 = arith.constant dense<0.000000e+00> : vector<8x8xf32>
    %80 = tpu.matmul %79, %65, %cst_34 {dimension_numbers = #tpu.dot_dimension_numbers<[1], [0], [0], [1], [0, 0, 1, 1], [], []>} : vector<8x8xf32>, vector<8x8xf32>, vector<8x8xf32> -> vector<8x8xf32>
    %81 = vector.extract_strided_slice %21 {offsets = [16, 0], sizes = [8, 32], strides = [1, 1]} : vector<32x32xf32> to vector<8x32xf32>
    %cst_35 = arith.constant dense<0.000000e+00> : vector<8x32xf32>
    %82 = tpu.matmul %80, %81, %cst_35 {dimension_numbers = #tpu.dot_dimension_numbers<[1], [0], [0], [1], [0, 0, 1, 1], [], []>} : vector<8x8xf32>, vector<8x32xf32>, vector<8x32xf32> -> vector<8x32xf32>
    %83 = arith.addf %62, %82 : vector<8x32xf32>
    %84 = vector.extract_strided_slice %17 {offsets = [0, 24], sizes = [8, 8], strides = [1, 1]} : vector<8x32xf32> to vector<8x8xf32>
    %85 = vector.extract_strided_slice %18 {offsets = [0, 24], sizes = [8, 8], strides = [1, 1]} : vector<8x32xf32> to vector<8x8xf32>
    %86 = vector.extract_strided_slice %19 {offsets = [0, 24], sizes = [8, 8], strides = [1, 1]} : vector<8x32xf32> to vector<8x8xf32>
    %cst_36 = arith.constant dense<0.000000e+00> : vector<8x8xf32>
    %87 = tpu.matmul %84, %85, %cst_36 {dimension_numbers = #tpu.dot_dimension_numbers<[1], [1], [0], [0], [0, 0, 1, 0], [], []>} : vector<8x8xf32>, vector<8x8xf32>, vector<8x8xf32> -> vector<8x8xf32>
    %cst_37 = arith.constant 0.353553385 : f32
    %88 = vector.broadcast %cst_37 : f32 to vector<8x8xf32>
    %89 = arith.mulf %87, %88 : vector<8x8xf32>
    %90 = arith.addf %89, %16 : vector<8x8xf32>
    %cst_38 = arith.constant dense<0xFF800000> : vector<8xf32>
    %91 = vector.multi_reduction <maximumf>, %90, %cst_38 [1] : vector<8x8xf32> to vector<8xf32>
    %92 = vector.shape_cast %91 : vector<8xf32> to vector<8x1xf32>
    %93 = vector.broadcast %92 : vector<8x1xf32> to vector<8x8xf32>
    %94 = arith.subf %90, %93 : vector<8x8xf32>
    %95 = math.exp %94 : vector<8x8xf32>
    %cst_39 = arith.constant dense<0.000000e+00> : vector<8xf32>
    %96 = vector.multi_reduction <add>, %95, %cst_39 [1] : vector<8x8xf32> to vector<8xf32>
    %97 = vector.shape_cast %96 : vector<8xf32> to vector<8x1xf32>
    %98 = tpu.reciprocal %97 {approx = true} : vector<8x1xf32> -> vector<8x1xf32>
    %99 = vector.broadcast %98 : vector<8x1xf32> to vector<8x8xf32>
    %100 = arith.mulf %95, %99 : vector<8x8xf32>
    %cst_40 = arith.constant dense<0.000000e+00> : vector<8x8xf32>
    %101 = tpu.matmul %100, %86, %cst_40 {dimension_numbers = #tpu.dot_dimension_numbers<[1], [0], [0], [1], [0, 0, 1, 1], [], []>} : vector<8x8xf32>, vector<8x8xf32>, vector<8x8xf32> -> vector<8x8xf32>
    %102 = vector.extract_strided_slice %21 {offsets = [24, 0], sizes = [8, 32], strides = [1, 1]} : vector<32x32xf32> to vector<8x32xf32>
    %cst_41 = arith.constant dense<0.000000e+00> : vector<8x32xf32>
    %103 = tpu.matmul %101, %102, %cst_41 {dimension_numbers = #tpu.dot_dimension_numbers<[1], [0], [0], [1], [0, 0, 1, 1], [], []>} : vector<8x8xf32>, vector<8x32xf32>, vector<8x32xf32> -> vector<8x32xf32>
    %104 = arith.addf %83, %103 : vector<8x32xf32>
    %c0_42 = arith.constant 0 : index
    %c0_43 = arith.constant 0 : index
    %c0_44 = arith.constant 0 : index
    %105 = vector.load %arg19[%c0_42, %c0_43, %c0_44] : memref<1x1x32xf32, #tpu.memory_space<vmem>>, vector<1x1x32xf32>
    %106 = vector.shape_cast %105 : vector<1x1x32xf32> to vector<1x32xf32>
    %107 = vector.broadcast %106 : vector<1x32xf32> to vector<8x32xf32>
    %108 = arith.addf %104, %107 : vector<8x32xf32>
    %109 = arith.addf %3, %108 : vector<8x32xf32>
    %c0_45 = arith.constant 0 : index
    %c0_46 = arith.constant 0 : index
    %c0_47 = arith.constant 0 : index
    %110 = vector.load %arg20[%c0_45, %c0_46, %c0_47] : memref<1x1x32xf32, #tpu.memory_space<vmem>>, vector<1x1x32xf32>
    %111 = vector.shape_cast %110 : vector<1x1x32xf32> to vector<1x32xf32>
    %c0_48 = arith.constant 0 : index
    %c0_49 = arith.constant 0 : index
    %c0_50 = arith.constant 0 : index
    %112 = vector.load %arg21[%c0_48, %c0_49, %c0_50] : memref<1x1x32xf32, #tpu.memory_space<vmem>>, vector<1x1x32xf32>
    %113 = vector.shape_cast %112 : vector<1x1x32xf32> to vector<1x32xf32>
    %cst_51 = arith.constant dense<0.000000e+00> : vector<8xf32>
    %114 = vector.multi_reduction <add>, %109, %cst_51 [1] : vector<8x32xf32> to vector<8xf32>
    %115 = vector.shape_cast %114 : vector<8xf32> to vector<8x1xf32>
    %cst_52 = arith.constant 3.200000e+01 : f32
    %116 = vector.broadcast %cst_52 : f32 to vector<8x1xf32>
    %117 = arith.divf %115, %116 : vector<8x1xf32>
    %118 = vector.broadcast %117 : vector<8x1xf32> to vector<8x32xf32>
    %119 = arith.subf %109, %118 : vector<8x32xf32>
    %120 = arith.mulf %119, %119 : vector<8x32xf32>
    %cst_53 = arith.constant dense<0.000000e+00> : vector<8xf32>
    %121 = vector.multi_reduction <add>, %120, %cst_53 [1] : vector<8x32xf32> to vector<8xf32>
    %122 = vector.shape_cast %121 : vector<8xf32> to vector<8x1xf32>
    %cst_54 = arith.constant 3.200000e+01 : f32
    %123 = vector.broadcast %cst_54 : f32 to vector<8x1xf32>
    %124 = arith.divf %122, %123 : vector<8x1xf32>
    %125 = vector.broadcast %117 : vector<8x1xf32> to vector<8x32xf32>
    %126 = arith.subf %109, %125 : vector<8x32xf32>
    %cst_55 = arith.constant 9.99999974E-6 : f32
    %127 = vector.broadcast %cst_55 : f32 to vector<8x1xf32>
    %128 = arith.addf %124, %127 : vector<8x1xf32>
    %129 = math.rsqrt %128 : vector<8x1xf32>
    %130 = vector.broadcast %129 : vector<8x1xf32> to vector<8x32xf32>
    %131 = arith.mulf %126, %130 : vector<8x32xf32>
    %132 = vector.broadcast %111 : vector<1x32xf32> to vector<8x32xf32>
    %133 = arith.mulf %131, %132 : vector<8x32xf32>
    %134 = vector.broadcast %113 : vector<1x32xf32> to vector<8x32xf32>
    %135 = arith.addf %133, %134 : vector<8x32xf32>
    %c0_56 = arith.constant 0 : index
    %c0_57 = arith.constant 0 : index
    %c0_58 = arith.constant 0 : index
    %136 = vector.load %arg22[%c0_56, %c0_57, %c0_58] : memref<1x32x32xf32, #tpu.memory_space<vmem>>, vector<1x32x32xf32>
    %137 = vector.shape_cast %136 : vector<1x32x32xf32> to vector<32x32xf32>
    %cst_59 = arith.constant dense<0.000000e+00> : vector<8x32xf32>
    %138 = tpu.matmul %135, %137, %cst_59 {dimension_numbers = #tpu.dot_dimension_numbers<[1], [0], [0], [1], [0, 0, 1, 1], [], []>} : vector<8x32xf32>, vector<32x32xf32>, vector<8x32xf32> -> vector<8x32xf32>
    %c0_60 = arith.constant 0 : index
    %c0_61 = arith.constant 0 : index
    %c0_62 = arith.constant 0 : index
    %139 = vector.load %arg23[%c0_60, %c0_61, %c0_62] : memref<1x1x32xf32, #tpu.memory_space<vmem>>, vector<1x1x32xf32>
    %140 = vector.shape_cast %139 : vector<1x1x32xf32> to vector<1x32xf32>
    %141 = vector.broadcast %140 : vector<1x32xf32> to vector<8x32xf32>
    %142 = arith.addf %138, %141 : vector<8x32xf32>
    %c0_63 = arith.constant 0 : index
    %c0_64 = arith.constant 0 : index
    %c0_65 = arith.constant 0 : index
    %143 = vector.load %arg24[%c0_63, %c0_64, %c0_65] : memref<1x32x64xf32, #tpu.memory_space<vmem>>, vector<1x32x64xf32>
    %144 = vector.shape_cast %143 : vector<1x32x64xf32> to vector<32x64xf32>
    %cst_66 = arith.constant dense<0.000000e+00> : vector<16x64xf32>
    %145 = tpu.matmul %4, %144, %cst_66 {dimension_numbers = #tpu.dot_dimension_numbers<[1], [0], [0], [1], [0, 0, 1, 1], [], []>} : vector<16x32xf32>, vector<32x64xf32>, vector<16x64xf32> -> vector<16x64xf32>
    %c0_67 = arith.constant 0 : index
    %c0_68 = arith.constant 0 : index
    %c0_69 = arith.constant 0 : index
    %146 = vector.load %arg25[%c0_67, %c0_68, %c0_69] : memref<1x1x64xf32, #tpu.memory_space<vmem>>, vector<1x1x64xf32>
    %147 = vector.shape_cast %146 : vector<1x1x64xf32> to vector<1x64xf32>
    %148 = vector.broadcast %147 : vector<1x64xf32> to vector<16x64xf32>
    %149 = arith.addf %145, %148 : vector<16x64xf32>
    %150 = vector.extract_strided_slice %149 {offsets = [0, 0], sizes = [16, 32], strides = [1, 1]} : vector<16x64xf32> to vector<16x32xf32>
    %151 = vector.extract_strided_slice %149 {offsets = [0, 32], sizes = [16, 32], strides = [1, 1]} : vector<16x64xf32> to vector<16x32xf32>
    %c0_70 = arith.constant 0 : index
    %c0_71 = arith.constant 0 : index
    %c0_72 = arith.constant 0 : index
    %152 = vector.load %arg26[%c0_70, %c0_71, %c0_72] : memref<1x32x32xf32, #tpu.memory_space<vmem>>, vector<1x32x32xf32>
    %153 = vector.shape_cast %152 : vector<1x32x32xf32> to vector<32x32xf32>
    %c0_73 = arith.constant 0 : index
    %c0_74 = arith.constant 0 : index
    %c0_75 = arith.constant 0 : index
    %154 = vector.load %arg5[%c0_73, %c0_74, %c0_75] : memref<1x1x16xf32, #tpu.memory_space<vmem>>, vector<1x1x16xf32>
    %155 = vector.shape_cast %154 : vector<1x1x16xf32> to vector<1x16xf32>
    %156 = vector.extract_strided_slice %142 {offsets = [0, 0], sizes = [8, 8], strides = [1, 1]} : vector<8x32xf32> to vector<8x8xf32>
    %157 = vector.extract_strided_slice %150 {offsets = [0, 0], sizes = [16, 8], strides = [1, 1]} : vector<16x32xf32> to vector<16x8xf32>
    %158 = vector.extract_strided_slice %151 {offsets = [0, 0], sizes = [16, 8], strides = [1, 1]} : vector<16x32xf32> to vector<16x8xf32>
    %cst_76 = arith.constant dense<0.000000e+00> : vector<8x16xf32>
    %159 = tpu.matmul %156, %157, %cst_76 {dimension_numbers = #tpu.dot_dimension_numbers<[1], [1], [0], [0], [0, 0, 1, 0], [], []>} : vector<8x8xf32>, vector<16x8xf32>, vector<8x16xf32> -> vector<8x16xf32>
    %cst_77 = arith.constant 0.353553385 : f32
    %160 = vector.broadcast %cst_77 : f32 to vector<8x16xf32>
    %161 = arith.mulf %159, %160 : vector<8x16xf32>
    %162 = vector.broadcast %155 : vector<1x16xf32> to vector<8x16xf32>
    %163 = arith.addf %161, %162 : vector<8x16xf32>
    %cst_78 = arith.constant dense<0xFF800000> : vector<8xf32>
    %164 = vector.multi_reduction <maximumf>, %163, %cst_78 [1] : vector<8x16xf32> to vector<8xf32>
    %165 = vector.shape_cast %164 : vector<8xf32> to vector<8x1xf32>
    %166 = vector.broadcast %165 : vector<8x1xf32> to vector<8x16xf32>
    %167 = arith.subf %163, %166 : vector<8x16xf32>
    %168 = math.exp %167 : vector<8x16xf32>
    %cst_79 = arith.constant dense<0.000000e+00> : vector<8xf32>
    %169 = vector.multi_reduction <add>, %168, %cst_79 [1] : vector<8x16xf32> to vector<8xf32>
    %170 = vector.shape_cast %169 : vector<8xf32> to vector<8x1xf32>
    %171 = tpu.reciprocal %170 {approx = true} : vector<8x1xf32> -> vector<8x1xf32>
    %172 = vector.broadcast %171 : vector<8x1xf32> to vector<8x16xf32>
    %173 = arith.mulf %168, %172 : vector<8x16xf32>
    %cst_80 = arith.constant dense<0.000000e+00> : vector<8x8xf32>
    %174 = tpu.matmul %173, %158, %cst_80 {dimension_numbers = #tpu.dot_dimension_numbers<[1], [0], [0], [1], [0, 0, 1, 1], [], []>} : vector<8x16xf32>, vector<16x8xf32>, vector<8x8xf32> -> vector<8x8xf32>
    %175 = vector.extract_strided_slice %153 {offsets = [0, 0], sizes = [8, 32], strides = [1, 1]} : vector<32x32xf32> to vector<8x32xf32>
    %cst_81 = arith.constant dense<0.000000e+00> : vector<8x32xf32>
    %176 = tpu.matmul %174, %175, %cst_81 {dimension_numbers = #tpu.dot_dimension_numbers<[1], [0], [0], [1], [0, 0, 1, 1], [], []>} : vector<8x8xf32>, vector<8x32xf32>, vector<8x32xf32> -> vector<8x32xf32>
    %177 = vector.extract_strided_slice %142 {offsets = [0, 8], sizes = [8, 8], strides = [1, 1]} : vector<8x32xf32> to vector<8x8xf32>
    %178 = vector.extract_strided_slice %150 {offsets = [0, 8], sizes = [16, 8], strides = [1, 1]} : vector<16x32xf32> to vector<16x8xf32>
    %179 = vector.extract_strided_slice %151 {offsets = [0, 8], sizes = [16, 8], strides = [1, 1]} : vector<16x32xf32> to vector<16x8xf32>
    %cst_82 = arith.constant dense<0.000000e+00> : vector<8x16xf32>
    %180 = tpu.matmul %177, %178, %cst_82 {dimension_numbers = #tpu.dot_dimension_numbers<[1], [1], [0], [0], [0, 0, 1, 0], [], []>} : vector<8x8xf32>, vector<16x8xf32>, vector<8x16xf32> -> vector<8x16xf32>
    %cst_83 = arith.constant 0.353553385 : f32
    %181 = vector.broadcast %cst_83 : f32 to vector<8x16xf32>
    %182 = arith.mulf %180, %181 : vector<8x16xf32>
    %183 = vector.broadcast %155 : vector<1x16xf32> to vector<8x16xf32>
    %184 = arith.addf %182, %183 : vector<8x16xf32>
    %cst_84 = arith.constant dense<0xFF800000> : vector<8xf32>
    %185 = vector.multi_reduction <maximumf>, %184, %cst_84 [1] : vector<8x16xf32> to vector<8xf32>
    %186 = vector.shape_cast %185 : vector<8xf32> to vector<8x1xf32>
    %187 = vector.broadcast %186 : vector<8x1xf32> to vector<8x16xf32>
    %188 = arith.subf %184, %187 : vector<8x16xf32>
    %189 = math.exp %188 : vector<8x16xf32>
    %cst_85 = arith.constant dense<0.000000e+00> : vector<8xf32>
    %190 = vector.multi_reduction <add>, %189, %cst_85 [1] : vector<8x16xf32> to vector<8xf32>
    %191 = vector.shape_cast %190 : vector<8xf32> to vector<8x1xf32>
    %192 = tpu.reciprocal %191 {approx = true} : vector<8x1xf32> -> vector<8x1xf32>
    %193 = vector.broadcast %192 : vector<8x1xf32> to vector<8x16xf32>
    %194 = arith.mulf %189, %193 : vector<8x16xf32>
    %cst_86 = arith.constant dense<0.000000e+00> : vector<8x8xf32>
    %195 = tpu.matmul %194, %179, %cst_86 {dimension_numbers = #tpu.dot_dimension_numbers<[1], [0], [0], [1], [0, 0, 1, 1], [], []>} : vector<8x16xf32>, vector<16x8xf32>, vector<8x8xf32> -> vector<8x8xf32>
    %196 = vector.extract_strided_slice %153 {offsets = [8, 0], sizes = [8, 32], strides = [1, 1]} : vector<32x32xf32> to vector<8x32xf32>
    %cst_87 = arith.constant dense<0.000000e+00> : vector<8x32xf32>
    %197 = tpu.matmul %195, %196, %cst_87 {dimension_numbers = #tpu.dot_dimension_numbers<[1], [0], [0], [1], [0, 0, 1, 1], [], []>} : vector<8x8xf32>, vector<8x32xf32>, vector<8x32xf32> -> vector<8x32xf32>
    %198 = arith.addf %176, %197 : vector<8x32xf32>
    %199 = vector.extract_strided_slice %142 {offsets = [0, 16], sizes = [8, 8], strides = [1, 1]} : vector<8x32xf32> to vector<8x8xf32>
    %200 = vector.extract_strided_slice %150 {offsets = [0, 16], sizes = [16, 8], strides = [1, 1]} : vector<16x32xf32> to vector<16x8xf32>
    %201 = vector.extract_strided_slice %151 {offsets = [0, 16], sizes = [16, 8], strides = [1, 1]} : vector<16x32xf32> to vector<16x8xf32>
    %cst_88 = arith.constant dense<0.000000e+00> : vector<8x16xf32>
    %202 = tpu.matmul %199, %200, %cst_88 {dimension_numbers = #tpu.dot_dimension_numbers<[1], [1], [0], [0], [0, 0, 1, 0], [], []>} : vector<8x8xf32>, vector<16x8xf32>, vector<8x16xf32> -> vector<8x16xf32>
    %cst_89 = arith.constant 0.353553385 : f32
    %203 = vector.broadcast %cst_89 : f32 to vector<8x16xf32>
    %204 = arith.mulf %202, %203 : vector<8x16xf32>
    %205 = vector.broadcast %155 : vector<1x16xf32> to vector<8x16xf32>
    %206 = arith.addf %204, %205 : vector<8x16xf32>
    %cst_90 = arith.constant dense<0xFF800000> : vector<8xf32>
    %207 = vector.multi_reduction <maximumf>, %206, %cst_90 [1] : vector<8x16xf32> to vector<8xf32>
    %208 = vector.shape_cast %207 : vector<8xf32> to vector<8x1xf32>
    %209 = vector.broadcast %208 : vector<8x1xf32> to vector<8x16xf32>
    %210 = arith.subf %206, %209 : vector<8x16xf32>
    %211 = math.exp %210 : vector<8x16xf32>
    %cst_91 = arith.constant dense<0.000000e+00> : vector<8xf32>
    %212 = vector.multi_reduction <add>, %211, %cst_91 [1] : vector<8x16xf32> to vector<8xf32>
    %213 = vector.shape_cast %212 : vector<8xf32> to vector<8x1xf32>
    %214 = tpu.reciprocal %213 {approx = true} : vector<8x1xf32> -> vector<8x1xf32>
    %215 = vector.broadcast %214 : vector<8x1xf32> to vector<8x16xf32>
    %216 = arith.mulf %211, %215 : vector<8x16xf32>
    %cst_92 = arith.constant dense<0.000000e+00> : vector<8x8xf32>
    %217 = tpu.matmul %216, %201, %cst_92 {dimension_numbers = #tpu.dot_dimension_numbers<[1], [0], [0], [1], [0, 0, 1, 1], [], []>} : vector<8x16xf32>, vector<16x8xf32>, vector<8x8xf32> -> vector<8x8xf32>
    %218 = vector.extract_strided_slice %153 {offsets = [16, 0], sizes = [8, 32], strides = [1, 1]} : vector<32x32xf32> to vector<8x32xf32>
    %cst_93 = arith.constant dense<0.000000e+00> : vector<8x32xf32>
    %219 = tpu.matmul %217, %218, %cst_93 {dimension_numbers = #tpu.dot_dimension_numbers<[1], [0], [0], [1], [0, 0, 1, 1], [], []>} : vector<8x8xf32>, vector<8x32xf32>, vector<8x32xf32> -> vector<8x32xf32>
    %220 = arith.addf %198, %219 : vector<8x32xf32>
    %221 = vector.extract_strided_slice %142 {offsets = [0, 24], sizes = [8, 8], strides = [1, 1]} : vector<8x32xf32> to vector<8x8xf32>
    %222 = vector.extract_strided_slice %150 {offsets = [0, 24], sizes = [16, 8], strides = [1, 1]} : vector<16x32xf32> to vector<16x8xf32>
    %223 = vector.extract_strided_slice %151 {offsets = [0, 24], sizes = [16, 8], strides = [1, 1]} : vector<16x32xf32> to vector<16x8xf32>
    %cst_94 = arith.constant dense<0.000000e+00> : vector<8x16xf32>
    %224 = tpu.matmul %221, %222, %cst_94 {dimension_numbers = #tpu.dot_dimension_numbers<[1], [1], [0], [0], [0, 0, 1, 0], [], []>} : vector<8x8xf32>, vector<16x8xf32>, vector<8x16xf32> -> vector<8x16xf32>
    %cst_95 = arith.constant 0.353553385 : f32
    %225 = vector.broadcast %cst_95 : f32 to vector<8x16xf32>
    %226 = arith.mulf %224, %225 : vector<8x16xf32>
    %227 = vector.broadcast %155 : vector<1x16xf32> to vector<8x16xf32>
    %228 = arith.addf %226, %227 : vector<8x16xf32>
    %cst_96 = arith.constant dense<0xFF800000> : vector<8xf32>
    %229 = vector.multi_reduction <maximumf>, %228, %cst_96 [1] : vector<8x16xf32> to vector<8xf32>
    %230 = vector.shape_cast %229 : vector<8xf32> to vector<8x1xf32>
    %231 = vector.broadcast %230 : vector<8x1xf32> to vector<8x16xf32>
    %232 = arith.subf %228, %231 : vector<8x16xf32>
    %233 = math.exp %232 : vector<8x16xf32>
    %cst_97 = arith.constant dense<0.000000e+00> : vector<8xf32>
    %234 = vector.multi_reduction <add>, %233, %cst_97 [1] : vector<8x16xf32> to vector<8xf32>
    %235 = vector.shape_cast %234 : vector<8xf32> to vector<8x1xf32>
    %236 = tpu.reciprocal %235 {approx = true} : vector<8x1xf32> -> vector<8x1xf32>
    %237 = vector.broadcast %236 : vector<8x1xf32> to vector<8x16xf32>
    %238 = arith.mulf %233, %237 : vector<8x16xf32>
    %cst_98 = arith.constant dense<0.000000e+00> : vector<8x8xf32>
    %239 = tpu.matmul %238, %223, %cst_98 {dimension_numbers = #tpu.dot_dimension_numbers<[1], [0], [0], [1], [0, 0, 1, 1], [], []>} : vector<8x16xf32>, vector<16x8xf32>, vector<8x8xf32> -> vector<8x8xf32>
    %240 = vector.extract_strided_slice %153 {offsets = [24, 0], sizes = [8, 32], strides = [1, 1]} : vector<32x32xf32> to vector<8x32xf32>
    %cst_99 = arith.constant dense<0.000000e+00> : vector<8x32xf32>
    %241 = tpu.matmul %239, %240, %cst_99 {dimension_numbers = #tpu.dot_dimension_numbers<[1], [0], [0], [1], [0, 0, 1, 1], [], []>} : vector<8x8xf32>, vector<8x32xf32>, vector<8x32xf32> -> vector<8x32xf32>
    %242 = arith.addf %220, %241 : vector<8x32xf32>
    %c0_100 = arith.constant 0 : index
    %c0_101 = arith.constant 0 : index
    %c0_102 = arith.constant 0 : index
    %243 = vector.load %arg27[%c0_100, %c0_101, %c0_102] : memref<1x1x32xf32, #tpu.memory_space<vmem>>, vector<1x1x32xf32>
    %244 = vector.shape_cast %243 : vector<1x1x32xf32> to vector<1x32xf32>
    %245 = vector.broadcast %244 : vector<1x32xf32> to vector<8x32xf32>
    %246 = arith.addf %242, %245 : vector<8x32xf32>
    %247 = arith.addf %135, %246 : vector<8x32xf32>
    %c0_103 = arith.constant 0 : index
    %c0_104 = arith.constant 0 : index
    %c0_105 = arith.constant 0 : index
    %248 = vector.load %arg28[%c0_103, %c0_104, %c0_105] : memref<1x1x32xf32, #tpu.memory_space<vmem>>, vector<1x1x32xf32>
    %249 = vector.shape_cast %248 : vector<1x1x32xf32> to vector<1x32xf32>
    %c0_106 = arith.constant 0 : index
    %c0_107 = arith.constant 0 : index
    %c0_108 = arith.constant 0 : index
    %250 = vector.load %arg29[%c0_106, %c0_107, %c0_108] : memref<1x1x32xf32, #tpu.memory_space<vmem>>, vector<1x1x32xf32>
    %251 = vector.shape_cast %250 : vector<1x1x32xf32> to vector<1x32xf32>
    %cst_109 = arith.constant dense<0.000000e+00> : vector<8xf32>
    %252 = vector.multi_reduction <add>, %247, %cst_109 [1] : vector<8x32xf32> to vector<8xf32>
    %253 = vector.shape_cast %252 : vector<8xf32> to vector<8x1xf32>
    %cst_110 = arith.constant 3.200000e+01 : f32
    %254 = vector.broadcast %cst_110 : f32 to vector<8x1xf32>
    %255 = arith.divf %253, %254 : vector<8x1xf32>
    %256 = vector.broadcast %255 : vector<8x1xf32> to vector<8x32xf32>
    %257 = arith.subf %247, %256 : vector<8x32xf32>
    %258 = arith.mulf %257, %257 : vector<8x32xf32>
    %cst_111 = arith.constant dense<0.000000e+00> : vector<8xf32>
    %259 = vector.multi_reduction <add>, %258, %cst_111 [1] : vector<8x32xf32> to vector<8xf32>
    %260 = vector.shape_cast %259 : vector<8xf32> to vector<8x1xf32>
    %cst_112 = arith.constant 3.200000e+01 : f32
    %261 = vector.broadcast %cst_112 : f32 to vector<8x1xf32>
    %262 = arith.divf %260, %261 : vector<8x1xf32>
    %263 = vector.broadcast %255 : vector<8x1xf32> to vector<8x32xf32>
    %264 = arith.subf %247, %263 : vector<8x32xf32>
    %cst_113 = arith.constant 9.99999974E-6 : f32
    %265 = vector.broadcast %cst_113 : f32 to vector<8x1xf32>
    %266 = arith.addf %262, %265 : vector<8x1xf32>
    %267 = math.rsqrt %266 : vector<8x1xf32>
    %268 = vector.broadcast %267 : vector<8x1xf32> to vector<8x32xf32>
    %269 = arith.mulf %264, %268 : vector<8x32xf32>
    %270 = vector.broadcast %249 : vector<1x32xf32> to vector<8x32xf32>
    %271 = arith.mulf %269, %270 : vector<8x32xf32>
    %272 = vector.broadcast %251 : vector<1x32xf32> to vector<8x32xf32>
    %273 = arith.addf %271, %272 : vector<8x32xf32>
    %c0_114 = arith.constant 0 : index
    %c0_115 = arith.constant 0 : index
    %c0_116 = arith.constant 0 : index
    %274 = vector.load %arg30[%c0_114, %c0_115, %c0_116] : memref<1x32x64xf32, #tpu.memory_space<vmem>>, vector<1x32x64xf32>
    %275 = vector.shape_cast %274 : vector<1x32x64xf32> to vector<32x64xf32>
    %cst_117 = arith.constant dense<0.000000e+00> : vector<8x64xf32>
    %276 = tpu.matmul %273, %275, %cst_117 {dimension_numbers = #tpu.dot_dimension_numbers<[1], [0], [0], [1], [0, 0, 1, 1], [], []>} : vector<8x32xf32>, vector<32x64xf32>, vector<8x64xf32> -> vector<8x64xf32>
    %c0_118 = arith.constant 0 : index
    %c0_119 = arith.constant 0 : index
    %c0_120 = arith.constant 0 : index
    %277 = vector.load %arg31[%c0_118, %c0_119, %c0_120] : memref<1x1x64xf32, #tpu.memory_space<vmem>>, vector<1x1x64xf32>
    %278 = vector.shape_cast %277 : vector<1x1x64xf32> to vector<1x64xf32>
    %279 = vector.broadcast %278 : vector<1x64xf32> to vector<8x64xf32>
    %280 = arith.addf %276, %279 : vector<8x64xf32>
    %cst_121 = arith.constant 5.000000e-01 : f32
    %281 = vector.broadcast %cst_121 : f32 to vector<8x64xf32>
    %282 = arith.mulf %281, %280 : vector<8x64xf32>
    %cst_122 = arith.constant 4.471500e-02 : f32
    %283 = vector.broadcast %cst_122 : f32 to vector<8x64xf32>
    %284 = arith.mulf %283, %280 : vector<8x64xf32>
    %285 = arith.mulf %284, %280 : vector<8x64xf32>
    %286 = arith.mulf %285, %280 : vector<8x64xf32>
    %287 = arith.addf %280, %286 : vector<8x64xf32>
    %cst_123 = arith.constant 0.797884583 : f32
    %288 = vector.broadcast %cst_123 : f32 to vector<8x64xf32>
    %289 = arith.mulf %288, %287 : vector<8x64xf32>
    %290 = math.tanh %289 : vector<8x64xf32>
    %cst_124 = arith.constant 1.000000e+00 : f32
    %291 = vector.broadcast %cst_124 : f32 to vector<8x64xf32>
    %292 = arith.addf %291, %290 : vector<8x64xf32>
    %293 = arith.mulf %282, %292 : vector<8x64xf32>
    %c0_125 = arith.constant 0 : index
    %c0_126 = arith.constant 0 : index
    %c0_127 = arith.constant 0 : index
    %294 = vector.load %arg32[%c0_125, %c0_126, %c0_127] : memref<1x64x32xf32, #tpu.memory_space<vmem>>, vector<1x64x32xf32>
    %295 = vector.shape_cast %294 : vector<1x64x32xf32> to vector<64x32xf32>
    %cst_128 = arith.constant dense<0.000000e+00> : vector<8x32xf32>
    %296 = tpu.matmul %293, %295, %cst_128 {dimension_numbers = #tpu.dot_dimension_numbers<[1], [0], [0], [1], [0, 0, 1, 1], [], []>} : vector<8x64xf32>, vector<64x32xf32>, vector<8x32xf32> -> vector<8x32xf32>
    %c0_129 = arith.constant 0 : index
    %c0_130 = arith.constant 0 : index
    %c0_131 = arith.constant 0 : index
    %297 = vector.load %arg33[%c0_129, %c0_130, %c0_131] : memref<1x1x32xf32, #tpu.memory_space<vmem>>, vector<1x1x32xf32>
    %298 = vector.shape_cast %297 : vector<1x1x32xf32> to vector<1x32xf32>
    %299 = vector.broadcast %298 : vector<1x32xf32> to vector<8x32xf32>
    %300 = arith.addf %296, %299 : vector<8x32xf32>
    %301 = arith.addf %273, %300 : vector<8x32xf32>
    %c0_132 = arith.constant 0 : index
    %c0_133 = arith.constant 0 : index
    %c0_134 = arith.constant 0 : index
    %302 = vector.load %arg34[%c0_132, %c0_133, %c0_134] : memref<1x1x32xf32, #tpu.memory_space<vmem>>, vector<1x1x32xf32>
    %303 = vector.shape_cast %302 : vector<1x1x32xf32> to vector<1x32xf32>
    %c0_135 = arith.constant 0 : index
    %c0_136 = arith.constant 0 : index
    %c0_137 = arith.constant 0 : index
    %304 = vector.load %arg35[%c0_135, %c0_136, %c0_137] : memref<1x1x32xf32, #tpu.memory_space<vmem>>, vector<1x1x32xf32>
    %305 = vector.shape_cast %304 : vector<1x1x32xf32> to vector<1x32xf32>
    %cst_138 = arith.constant dense<0.000000e+00> : vector<8xf32>
    %306 = vector.multi_reduction <add>, %301, %cst_138 [1] : vector<8x32xf32> to vector<8xf32>
    %307 = vector.shape_cast %306 : vector<8xf32> to vector<8x1xf32>
    %cst_139 = arith.constant 3.200000e+01 : f32
    %308 = vector.broadcast %cst_139 : f32 to vector<8x1xf32>
    %309 = arith.divf %307, %308 : vector<8x1xf32>
    %310 = vector.broadcast %309 : vector<8x1xf32> to vector<8x32xf32>
    %311 = arith.subf %301, %310 : vector<8x32xf32>
    %312 = arith.mulf %311, %311 : vector<8x32xf32>
    %cst_140 = arith.constant dense<0.000000e+00> : vector<8xf32>
    %313 = vector.multi_reduction <add>, %312, %cst_140 [1] : vector<8x32xf32> to vector<8xf32>
    %314 = vector.shape_cast %313 : vector<8xf32> to vector<8x1xf32>
    %cst_141 = arith.constant 3.200000e+01 : f32
    %315 = vector.broadcast %cst_141 : f32 to vector<8x1xf32>
    %316 = arith.divf %314, %315 : vector<8x1xf32>
    %317 = vector.broadcast %309 : vector<8x1xf32> to vector<8x32xf32>
    %318 = arith.subf %301, %317 : vector<8x32xf32>
    %cst_142 = arith.constant 9.99999974E-6 : f32
    %319 = vector.broadcast %cst_142 : f32 to vector<8x1xf32>
    %320 = arith.addf %316, %319 : vector<8x1xf32>
    %321 = math.rsqrt %320 : vector<8x1xf32>
    %322 = vector.broadcast %321 : vector<8x1xf32> to vector<8x32xf32>
    %323 = arith.mulf %318, %322 : vector<8x32xf32>
    %324 = vector.broadcast %303 : vector<1x32xf32> to vector<8x32xf32>
    %325 = arith.mulf %323, %324 : vector<8x32xf32>
    %326 = vector.broadcast %305 : vector<1x32xf32> to vector<8x32xf32>
    %327 = arith.addf %325, %326 : vector<8x32xf32>
    %c0_143 = arith.constant 0 : index
    %c0_144 = arith.constant 0 : index
    %328 = vector.load %arg37[%c0_143, %c0_144] : memref<8x32xf32, #tpu.memory_space<vmem>>, vector<8x32xf32>
    tpu.vector_store %arg37[%c0_143, %c0_144], %327 {strides = array<i32>} : memref<8x32xf32, #tpu.memory_space<vmem>>, vector<8x32xf32>,
    %c1_i32 = arith.constant 1 : i32
    %329 = arith.cmpi eq, %arg1, %c1_i32 : i32
    %330 = arith.extui %329 : i1 to i32
    %c0_i32_145 = arith.constant 0 : i32
    %331 = arith.cmpi ne, %330, %c0_i32_145 : i32
    scf.if %331 {
      %c0_146 = arith.constant 0 : index
      %c0_147 = arith.constant 0 : index
      %332 = vector.load %arg12[%c0_146, %c0_147] : memref<32x32xf32, #tpu.memory_space<vmem>>, vector<32x32xf32>
      %cst_148 = arith.constant dense<0.000000e+00> : vector<8x32xf32>
      %333 = tpu.matmul %327, %332, %cst_148 {dimension_numbers = #tpu.dot_dimension_numbers<[1], [0], [0], [1], [0, 0, 1, 1], [], []>} : vector<8x32xf32>, vector<32x32xf32>, vector<8x32xf32> -> vector<8x32xf32>
      %c0_149 = arith.constant 0 : index
      %c0_150 = arith.constant 0 : index
      %334 = vector.load %arg13[%c0_149, %c0_150] : memref<1x32xf32, #tpu.memory_space<vmem>>, vector<1x32xf32>
      %335 = vector.broadcast %334 : vector<1x32xf32> to vector<8x32xf32>
      %336 = arith.addf %333, %335 : vector<8x32xf32>
      %c0_151 = arith.constant 0 : index
      %c0_152 = arith.constant 0 : index
      %337 = vector.load %arg11[%c0_151, %c0_152] : memref<128x32xf32, #tpu.memory_space<vmem>>, vector<128x32xf32>
      %c0_153 = arith.constant 0 : index
      %c0_154 = arith.constant 0 : index
      %338 = vector.load %arg14[%c0_153, %c0_154] : memref<32x32xf32, #tpu.memory_space<vmem>>, vector<32x32xf32>
      %cst_155 = arith.constant dense<0.000000e+00> : vector<128x32xf32>
      %339 = tpu.matmul %337, %338, %cst_155 {dimension_numbers = #tpu.dot_dimension_numbers<[1], [0], [0], [1], [0, 0, 1, 1], [], []>} : vector<128x32xf32>, vector<32x32xf32>, vector<128x32xf32> -> vector<128x32xf32>
      %c0_156 = arith.constant 0 : index
      %c0_157 = arith.constant 0 : index
      %340 = vector.load %arg15[%c0_156, %c0_157] : memref<1x32xf32, #tpu.memory_space<vmem>>, vector<1x32xf32>
      %341 = vector.broadcast %340 : vector<1x32xf32> to vector<128x32xf32>
      %342 = arith.addf %339, %341 : vector<128x32xf32>
      %cst_158 = arith.constant dense<0.000000e+00> : vector<8x128xf32>
      %343 = tpu.matmul %336, %342, %cst_158 {dimension_numbers = #tpu.dot_dimension_numbers<[1], [1], [0], [0], [0, 0, 1, 0], [], []>} : vector<8x32xf32>, vector<128x32xf32>, vector<8x128xf32> -> vector<8x128xf32>
      %cst_159 = arith.constant 0.353553385 : f32
      %344 = vector.broadcast %cst_159 : f32 to vector<8x128xf32>
      %345 = arith.mulf %343, %344 : vector<8x128xf32>
      %c0_160 = arith.constant 0 : index
      %c0_161 = arith.constant 0 : index
      %c0_162 = arith.constant 0 : index
      %346 = vector.load %arg36[%c0_160, %c0_161, %c0_162] : memref<1x8x128xf32, #tpu.memory_space<vmem>>, vector<1x8x128xf32>
      %347 = vector.shape_cast %346 : vector<1x8x128xf32> to vector<8x128xf32>
      %348 = vector.shape_cast %345 : vector<8x128xf32> to vector<1x8x128xf32>
      tpu.vector_store %arg36[%c0_160, %c0_161, %c0_162], %348 {strides = array<i32>} : memref<1x8x128xf32, #tpu.memory_space<vmem>>, vector<1x8x128xf32>,
    } else {
    }
    return
  }
  func.func @transform_0(%arg0: i32, %arg1: i32) -> (i32, i32, i32) {
    %c0_i32 = arith.constant 0 : i32
    %c0_i32_0 = arith.constant 0 : i32
    %c0_i32_1 = arith.constant 0 : i32
    return %arg0, %c0_i32, %c0_i32_0 : i32, i32, i32
  }
  func.func @transform_1(%arg0: i32, %arg1: i32) -> (i32, i32, i32) {
    %c0_i32 = arith.constant 0 : i32
    %c0_i32_0 = arith.constant 0 : i32
    %c0_i32_1 = arith.constant 0 : i32
    return %arg0, %c0_i32, %c0_i32_0 : i32, i32, i32
  }
  func.func @transform_2(%arg0: i32, %arg1: i32) -> (i32, i32, i32) {
    %c0_i32 = arith.constant 0 : i32
    %c0_i32_0 = arith.constant 0 : i32
    %c0_i32_1 = arith.constant 0 : i32
    return %arg0, %c0_i32, %c0_i32_0 : i32, i32, i32
  }
  func.func @transform_3(%arg0: i32, %arg1: i32) -> (i32, i32, i32) {
    %c0_i32 = arith.constant 0 : i32
    %c0_i32_0 = arith.constant 0 : i32
    %c0_i32_1 = arith.constant 0 : i32
    return %arg0, %c0_i32, %c0_i32_0 : i32, i32, i32
  }
  func.func @transform_4(%arg0: i32, %arg1: i32) -> (i32, i32) {
    %c0_i32 = arith.constant 0 : i32
    %c0_i32_0 = arith.constant 0 : i32
    %c0_i32_1 = arith.constant 0 : i32
    return %c0_i32, %c0_i32_0 : i32, i32
  }
  func.func @transform_5(%arg0: i32, %arg1: i32) -> (i32, i32) {
    %c0_i32 = arith.constant 0 : i32
    %c0_i32_0 = arith.constant 0 : i32
    %c0_i32_1 = arith.constant 0 : i32
    return %c0_i32, %c0_i32_0 : i32, i32
  }
  func.func @transform_6(%arg0: i32, %arg1: i32) -> (i32, i32) {
    %c0_i32 = arith.constant 0 : i32
    %c0_i32_0 = arith.constant 0 : i32
    %c0_i32_1 = arith.constant 0 : i32
    return %c0_i32, %c0_i32_0 : i32, i32
  }
  func.func @transform_7(%arg0: i32, %arg1: i32) -> (i32, i32) {
    %c0_i32 = arith.constant 0 : i32
    %c0_i32_0 = arith.constant 0 : i32
    %c0_i32_1 = arith.constant 0 : i32
    return %c0_i32, %c0_i32_0 : i32, i32
  }
  func.func @transform_8(%arg0: i32, %arg1: i32) -> (i32, i32) {
    %c0_i32 = arith.constant 0 : i32
    %c0_i32_0 = arith.constant 0 : i32
    %c0_i32_1 = arith.constant 0 : i32
    return %c0_i32, %c0_i32_0 : i32, i32
  }
  func.func @transform_9(%arg0: i32, %arg1: i32) -> (i32, i32) {
    %c0_i32 = arith.constant 0 : i32
    %c0_i32_0 = arith.constant 0 : i32
    %c0_i32_1 = arith.constant 0 : i32
    return %c0_i32, %c0_i32_0 : i32, i32
  }
  func.func @transform_10(%arg0: i32, %arg1: i32) -> (i32, i32) {
    %c0_i32 = arith.constant 0 : i32
    %c0_i32_0 = arith.constant 0 : i32
    %c0_i32_1 = arith.constant 0 : i32
    return %c0_i32, %c0_i32_0 : i32, i32
  }
  func.func @transform_11(%arg0: i32, %arg1: i32) -> (i32, i32) {
    %c0_i32 = arith.constant 0 : i32
    %c0_i32_0 = arith.constant 0 : i32
    %c0_i32_1 = arith.constant 0 : i32
    return %c0_i32, %c0_i32_0 : i32, i32
  }
  func.func @transform_12(%arg0: i32, %arg1: i32) -> (i32, i32) {
    %c0_i32 = arith.constant 0 : i32
    %c0_i32_0 = arith.constant 0 : i32
    %c0_i32_1 = arith.constant 0 : i32
    return %c0_i32, %c0_i32_0 : i32, i32
  }
  func.func @transform_13(%arg0: i32, %arg1: i32) -> (i32, i32) {
    %c0_i32 = arith.constant 0 : i32
    %c0_i32_0 = arith.constant 0 : i32
    %c0_i32_1 = arith.constant 0 : i32
    return %c0_i32, %c0_i32_0 : i32, i32
  }
  func.func @transform_14(%arg0: i32, %arg1: i32) -> (i32, i32, i32) {
    %c0_i32 = arith.constant 0 : i32
    %c0_i32_0 = arith.constant 0 : i32
    %c0_i32_1 = arith.constant 0 : i32
    return %arg1, %c0_i32, %c0_i32_0 : i32, i32, i32
  }
  func.func @transform_15(%arg0: i32, %arg1: i32) -> (i32, i32, i32) {
    %c0_i32 = arith.constant 0 : i32
    %c0_i32_0 = arith.constant 0 : i32
    %c0_i32_1 = arith.constant 0 : i32
    return %arg1, %c0_i32, %c0_i32_0 : i32, i32, i32
  }
  func.func @transform_16(%arg0: i32, %arg1: i32) -> (i32, i32, i32) {
    %c0_i32 = arith.constant 0 : i32
    %c0_i32_0 = arith.constant 0 : i32
    %c0_i32_1 = arith.constant 0 : i32
    return %arg1, %c0_i32, %c0_i32_0 : i32, i32, i32
  }
  func.func @transform_17(%arg0: i32, %arg1: i32) -> (i32, i32, i32) {
    %c0_i32 = arith.constant 0 : i32
    %c0_i32_0 = arith.constant 0 : i32
    %c0_i32_1 = arith.constant 0 : i32
    return %arg1, %c0_i32, %c0_i32_0 : i32, i32, i32
  }
  func.func @transform_18(%arg0: i32, %arg1: i32) -> (i32, i32, i32) {
    %c0_i32 = arith.constant 0 : i32
    %c0_i32_0 = arith.constant 0 : i32
    %c0_i32_1 = arith.constant 0 : i32
    return %arg1, %c0_i32, %c0_i32_0 : i32, i32, i32
  }
  func.func @transform_19(%arg0: i32, %arg1: i32) -> (i32, i32, i32) {
    %c0_i32 = arith.constant 0 : i32
    %c0_i32_0 = arith.constant 0 : i32
    %c0_i32_1 = arith.constant 0 : i32
    return %arg1, %c0_i32, %c0_i32_0 : i32, i32, i32
  }
  func.func @transform_20(%arg0: i32, %arg1: i32) -> (i32, i32, i32) {
    %c0_i32 = arith.constant 0 : i32
    %c0_i32_0 = arith.constant 0 : i32
    %c0_i32_1 = arith.constant 0 : i32
    return %arg1, %c0_i32, %c0_i32_0 : i32, i32, i32
  }
  func.func @transform_21(%arg0: i32, %arg1: i32) -> (i32, i32, i32) {
    %c0_i32 = arith.constant 0 : i32
    %c0_i32_0 = arith.constant 0 : i32
    %c0_i32_1 = arith.constant 0 : i32
    return %arg1, %c0_i32, %c0_i32_0 : i32, i32, i32
  }
  func.func @transform_22(%arg0: i32, %arg1: i32) -> (i32, i32, i32) {
    %c0_i32 = arith.constant 0 : i32
    %c0_i32_0 = arith.constant 0 : i32
    %c0_i32_1 = arith.constant 0 : i32
    return %arg1, %c0_i32, %c0_i32_0 : i32, i32, i32
  }
  func.func @transform_23(%arg0: i32, %arg1: i32) -> (i32, i32, i32) {
    %c0_i32 = arith.constant 0 : i32
    %c0_i32_0 = arith.constant 0 : i32
    %c0_i32_1 = arith.constant 0 : i32
    return %arg1, %c0_i32, %c0_i32_0 : i32, i32, i32
  }
  func.func @transform_24(%arg0: i32, %arg1: i32) -> (i32, i32, i32) {
    %c0_i32 = arith.constant 0 : i32
    %c0_i32_0 = arith.constant 0 : i32
    %c0_i32_1 = arith.constant 0 : i32
    return %arg1, %c0_i32, %c0_i32_0 : i32, i32, i32
  }
  func.func @transform_25(%arg0: i32, %arg1: i32) -> (i32, i32, i32) {
    %c0_i32 = arith.constant 0 : i32
    %c0_i32_0 = arith.constant 0 : i32
    %c0_i32_1 = arith.constant 0 : i32
    return %arg1, %c0_i32, %c0_i32_0 : i32, i32, i32
  }
  func.func @transform_26(%arg0: i32, %arg1: i32) -> (i32, i32, i32) {
    %c0_i32 = arith.constant 0 : i32
    %c0_i32_0 = arith.constant 0 : i32
    %c0_i32_1 = arith.constant 0 : i32
    return %arg1, %c0_i32, %c0_i32_0 : i32, i32, i32
  }
  func.func @transform_27(%arg0: i32, %arg1: i32) -> (i32, i32, i32) {
    %c0_i32 = arith.constant 0 : i32
    %c0_i32_0 = arith.constant 0 : i32
    %c0_i32_1 = arith.constant 0 : i32
    return %arg1, %c0_i32, %c0_i32_0 : i32, i32, i32
  }
  func.func @transform_28(%arg0: i32, %arg1: i32) -> (i32, i32, i32) {
    %c0_i32 = arith.constant 0 : i32
    %c0_i32_0 = arith.constant 0 : i32
    %c0_i32_1 = arith.constant 0 : i32
    return %arg1, %c0_i32, %c0_i32_0 : i32, i32, i32
  }
  func.func @transform_29(%arg0: i32, %arg1: i32) -> (i32, i32, i32) {
    %c0_i32 = arith.constant 0 : i32
    %c0_i32_0 = arith.constant 0 : i32
    %c0_i32_1 = arith.constant 0 : i32
    return %arg1, %c0_i32, %c0_i32_0 : i32, i32, i32
  }
  func.func @transform_30(%arg0: i32, %arg1: i32) -> (i32, i32, i32) {
    %c0_i32 = arith.constant 0 : i32
    %c0_i32_0 = arith.constant 0 : i32
    %c0_i32_1 = arith.constant 0 : i32
    return %arg1, %c0_i32, %c0_i32_0 : i32, i32, i32
  }
  func.func @transform_31(%arg0: i32, %arg1: i32) -> (i32, i32, i32) {
    %c0_i32 = arith.constant 0 : i32
    %c0_i32_0 = arith.constant 0 : i32
    %c0_i32_1 = arith.constant 0 : i32
    return %arg1, %c0_i32, %c0_i32_0 : i32, i32, i32
  }
  func.func @transform_32(%arg0: i32, %arg1: i32) -> (i32, i32, i32) {
    %c0_i32 = arith.constant 0 : i32
    %c0_i32_0 = arith.constant 0 : i32
    %c0_i32_1 = arith.constant 0 : i32
    return %arg1, %c0_i32, %c0_i32_0 : i32, i32, i32
  }
  func.func @transform_33(%arg0: i32, %arg1: i32) -> (i32, i32, i32) {
    %c0_i32 = arith.constant 0 : i32
    %c0_i32_0 = arith.constant 0 : i32
    %c0_i32_1 = arith.constant 0 : i32
    return %arg1, %c0_i32, %c0_i32_0 : i32, i32, i32
  }
  func.func @transform_34(%arg0: i32, %arg1: i32) -> (i32, i32, i32) {
    %c0_i32 = arith.constant 0 : i32
    %c0_i32_0 = arith.constant 0 : i32
    %c0_i32_1 = arith.constant 0 : i32
    return %arg0, %c0_i32, %c0_i32_0 : i32, i32, i32
  }
}

</mosaic_0001>

<llo_original>
// kernel: tpu_custom_call.1
$region0: #{tpu_custom_call.1}
  #allocation0 [shape = 'u32[]', space=smem, size = 0x4, offset = 0x4, fixed_abs, tag = 'smem constant byte address 0x4 - core index']
  #allocation1 [shape = 'u32[144,128]{1,0:T(1,128)}', space=vmem, size = 0x12000, scoped, tag = 'internal scratch']
  #allocation2 [shape = 'f32[8,32]{1,0:T(8,128)}', space=vmem, size = 0x1000, scoped, tag = 'scratch operand']
  #allocation3 [shape = 'f32[16,32]{1,0:T(8,128)}', space=vmem, size = 0x2000, scoped, tag = 'scratch operand']
  %s0 = inlined_call_operand.smem [shape: u32[35], index: -1, kind: input, shape index: {}]
  %s1 = sld [smem:[%s0]]
  %s2 = scalar_lea.smem %s0, 1
  %s3 = sld [smem:[%s2]]
  %s4 = scalar_lea.smem %s0, 2
  %s5 = sld [smem:[%s4]]
  %s6 = scalar_lea.smem %s0, 3
  %s7 = sld [smem:[%s6]]
  %s8 = scalar_lea.smem %s0, 4
  %s9 = sld [smem:[%s8]]
  %s10 = scalar_lea.smem %s0, 5
  %s11 = sld [smem:[%s10]]
  %s12 = scalar_lea.smem %s0, 6
  %s13 = sld [smem:[%s12]]
  %s14 = scalar_lea.smem %s0, 7
  %s15 = sld [smem:[%s14]]
  %s16 = scalar_lea.smem %s0, 8
  %s17 = sld [smem:[%s16]]
  %s18 = scalar_lea.smem %s0, 9
  %s19 = sld [smem:[%s18]]
  %s20 = scalar_lea.smem %s0, 10
  %s21 = sld [smem:[%s20]]
  %s22 = scalar_lea.smem %s0, 11
  %s23 = sld [smem:[%s22]]
  %s24 = scalar_lea.smem %s0, 12
  %s25 = sld [smem:[%s24]]
  %s26 = scalar_lea.smem %s0, 13
  %s27 = sld [smem:[%s26]]
  %s28 = scalar_lea.smem %s0, 14
  %s29 = sld [smem:[%s28]]
  %s30 = scalar_lea.smem %s0, 15
  %s31 = sld [smem:[%s30]]
  %s32 = scalar_lea.smem %s0, 16
  %s33 = sld [smem:[%s32]]
  %s34 = scalar_lea.smem %s0, 17
  %s35 = sld [smem:[%s34]]
  %s36 = scalar_lea.smem %s0, 18
  %s37 = sld [smem:[%s36]]
  %s38 = scalar_lea.smem %s0, 19
  %s39 = sld [smem:[%s38]]
  %s40 = scalar_lea.smem %s0, 20
  %s41 = sld [smem:[%s40]]
  %s42 = scalar_lea.smem %s0, 21
  %s43 = sld [smem:[%s42]]
  %s44 = scalar_lea.smem %s0, 22
  %s45 = sld [smem:[%s44]]
  %s46 = scalar_lea.smem %s0, 23
  %s47 = sld [smem:[%s46]]
  %s48 = scalar_lea.smem %s0, 24
  %s49 = sld [smem:[%s48]]
  %s50 = scalar_lea.smem %s0, 25
  %s51 = sld [smem:[%s50]]
  %s52 = scalar_lea.smem %s0, 26
  %s53 = sld [smem:[%s52]]
  %s54 = scalar_lea.smem %s0, 27
  %s55 = sld [smem:[%s54]]
  %s56 = scalar_lea.smem %s0, 28
  %s57 = sld [smem:[%s56]]
  %s58 = scalar_lea.smem %s0, 29
  %s59 = sld [smem:[%s58]]
  %s60 = scalar_lea.smem %s0, 30
  %s61 = sld [smem:[%s60]]
  %s62 = scalar_lea.smem %s0, 31
  %s63 = sld [smem:[%s62]]
  %s64 = scalar_lea.smem %s0, 32
  %s65 = sld [smem:[%s64]]
  %s66 = scalar_lea.smem %s0, 33
  %s67 = sld [smem:[%s66]]
  %s68 = scalar_lea.smem %s0, 34
  %s69 = sld [smem:[%s68]]
  %s70 = sld [smem:[#allocation0]]
  $region261: #{tpu_custom_call.1} parent=0
    _
  %s72 = ssub.s32 1, %s70
  %s73 = scalar_select 0, %s72, %s70
  $region1: #{tpu_custom_call.1} parent=0
    #allocation4 [shape = 'u8[8192]{0}', space=vmem, size = 0x2000, scoped, tag = 'input window, operand 0']
    #allocation5 [shape = 's32[2]{0}', space=sflag, size = 0x8, scoped, tag = 'scoped memory for tpu_custom_call.1']
    #allocation6 [shape = 's32[2]{0}', space=sflag, size = 0x8, scoped, tag = 'scoped memory for tpu_custom_call.1']
    #allocation7 [shape = 'u8[16384]{0}', space=vmem, size = 0x4000, scoped, tag = 'input window, operand 1']
    #allocation8 [shape = 's32[2]{0}', space=sflag, size = 0x8, scoped, tag = 'scoped memory for tpu_custom_call.1']
    #allocation9 [shape = 'u8[1024]{0}', space=vmem, size = 0x400, scoped, tag = 'input window, operand 3']
    #allocation10 [shape = 'u8[4096]{0}', space=vmem, size = 0x1000, scoped, tag = 'input window, operand 4, single buffered']
    #allocation11 [shape = 's32[1]{0}', space=sflag, size = 0x4, scoped, tag = 'scoped memory for tpu_custom_call.1']
    #allocation12 [shape = 'u8[8192]{0}', space=vmem, size = 0x2000, scoped, tag = 'input window, operand 5, single buffered']
    #allocation13 [shape = 'u8[512]{0}', space=vmem, size = 0x400, scoped, tag = 'input window, operand 6, single buffered']
    #allocation14 [shape = 's32[1]{0}', space=sflag, size = 0x4, scoped, tag = 'scoped memory for tpu_custom_call.1']
    #allocation15 [shape = 'u8[16384]{0}', space=vmem, size = 0x4000, scoped, tag = 'input window, operand 7, single buffered']
    #allocation16 [shape = 'u8[512]{0}', space=vmem, size = 0x400, scoped, tag = 'input window, operand 8, single buffered']
    #allocation17 [shape = 's32[1]{0}', space=sflag, size = 0x4, scoped, tag = 'scoped memory for tpu_custom_call.1']
    #allocation18 [shape = 'u8[16384]{0}', space=vmem, size = 0x4000, scoped, tag = 'input window, operand 10, single buffered']
    #allocation19 [shape = 'u8[512]{0}', space=vmem, size = 0x400, scoped, tag = 'input window, operand 11, single buffered']
    #allocation20 [shape = 's32[1]{0}', space=sflag, size = 0x4, scoped, tag = 'scoped memory for tpu_custom_call.1']
    #allocation21 [shape = 'u8[16384]{0}', space=vmem, size = 0x4000, scoped, tag = 'input window, operand 12, single buffered']
    #allocation22 [shape = 'u8[512]{0}', space=vmem, size = 0x400, scoped, tag = 'input window, operand 13, single buffered']
    #allocation23 [shape = 's32[1]{0}', space=sflag, size = 0x4, scoped, tag = 'scoped memory for tpu_custom_call.1']
    #allocation24 [shape = 'u8[1024]{0}', space=vmem, size = 0x400, scoped, tag = 'input window, operand 15']
    #allocation25 [shape = 'u8[1024]{0}', space=vmem, size = 0x400, scoped, tag = 'input window, operand 17']
    #allocation26 [shape = 'u8[1024]{0}', space=vmem, size = 0x400, scoped, tag = 'input window, operand 18']
    #allocation27 [shape = 'u8[1024]{0}', space=vmem, size = 0x400, scoped, tag = 'input window, operand 19']
    #allocation28 [shape = 'u8[1024]{0}', space=vmem, size = 0x400, scoped, tag = 'input window, operand 21']
    #allocation29 [shape = 'u8[1024]{0}', space=vmem, size = 0x400, scoped, tag = 'input window, operand 23']
    #allocation30 [shape = 'u8[1024]{0}', space=vmem, size = 0x400, scoped, tag = 'input window, operand 25']
    #allocation31 [shape = 'u8[1024]{0}', space=vmem, size = 0x400, scoped, tag = 'input window, operand 26']
    #allocation32 [shape = 'u8[1024]{0}', space=vmem, size = 0x400, scoped, tag = 'input window, operand 27']
    #allocation33 [shape = 'u8[8192]{0}', space=vmem, size = 0x2000, scoped, tag = 'output window, operand 0']
    %74 = vsyncpa [#allocation5], 0
    %s75 = scalar_lea.sflag [#allocation5], 1
    %76 = vsyncpa %s75, 0
    %77 = vsyncpa [#allocation8], 0
    %s78 = scalar_lea.sflag [#allocation8], 1
    %79 = vsyncpa %s78, 0
    %80 = vsyncpa [#allocation11], 0
    %81 = vsyncpa [#allocation14], 0
    %82 = vsyncpa [#allocation17], 0
    %83 = vsyncpa [#allocation20], 0
    %84 = vsyncpa [#allocation23], 0
    %85 = vsyncpa [#allocation6], 0
    %s86 = scalar_lea.sflag [#allocation6], 1
    %87 = vsyncpa %s86, 0
    loop: start=0, step=1, limit=6
    $region2: #{tpu_custom_call.1} parent=1 // loop_pre_header
      _
    $region3: #{tpu_custom_call.1} parent=1 // loop_header
      %s89 = sphi 0, %s93
      %p90 = scmp.ge.s32.totalorder %s89, 6
      %s96 = sphi 0, %s108
      %s97 = sphi 0, %s104
      %s98 = sphi 0, %s96
      %s99 = sphi 0, %s97
      %s100 = sphi 0, %s98
      %s101 = sphi 0, %s99
      %s111 = sphi 0, %s113
      %s114 = sphi 0, %s111
      %s115 = sphi 0, %s114
      %s131 = sphi 0, %s115
      %s137 = sphi 0, %s139
      %s140 = sphi 0, %s137
      %s141 = sphi 0, %s140
      %s157 = sphi 0, %s141
      %s163 = sphi 0, %s165
      %s166 = sphi 0, %s163
      %s167 = sphi 0, %s166
      %s183 = sphi 0, %s167
      %s189 = sphi 0, %s191
      %s192 = sphi 0, %s189
      %s193 = sphi 0, %s192
      %s209 = sphi 0, %s193
      %s213 = sphi 0, %s213
      %s215 = sphi 0, %s213
      %s216 = sphi 0, %s215
      %s230 = sphi 0, %s216
      %s234 = sphi 0, %s234
      %s236 = sphi 0, %s234
      %s237 = sphi 0, %s236
      %s251 = sphi 0, %s237
      %s255 = sphi 0, %s255
      %s257 = sphi 0, %s255
      %s258 = sphi 0, %s257
      %s272 = sphi 0, %s258
      %s276 = sphi 0, %s276
      %s278 = sphi 0, %s276
      %s279 = sphi 0, %s278
      %s293 = sphi 0, %s279
      %s297 = sphi 0, %s297
      %s299 = sphi 0, %s297
      %s300 = sphi 0, %s299
      %s314 = sphi 0, %s300
      %s318 = sphi 0, %s318
      %s320 = sphi 0, %s318
      %s321 = sphi 0, %s320
      %s335 = sphi 0, %s321
      %s339 = sphi 0, %s339
      %s341 = sphi 0, %s339
      %s342 = sphi 0, %s341
      %s356 = sphi 0, %s342
      %s360 = sphi 0, %s360
      %s362 = sphi 0, %s360
      %s363 = sphi 0, %s362
      %s377 = sphi 0, %s363
      %s381 = sphi 0, %s381
      %s383 = sphi 0, %s381
      %s384 = sphi 0, %s383
      %s398 = sphi 0, %s384
      %s402 = sphi 0, %s402
      %s404 = sphi 0, %s402
      %s405 = sphi 0, %s404
      %s419 = sphi 0, %s405
      %s425 = sphi 0, %s427
      %s428 = sphi 0, %s425
      %s429 = sphi 0, %s428
      %s445 = sphi 0, %s429
      %s451 = sphi 0, %s453
      %s454 = sphi 0, %s451
      %s455 = sphi 0, %s454
      %s471 = sphi 0, %s455
      %s477 = sphi 0, %s479
      %s480 = sphi 0, %s477
      %s481 = sphi 0, %s480
      %s497 = sphi 0, %s481
      %s503 = sphi 0, %s505
      %s506 = sphi 0, %s503
      %s507 = sphi 0, %s506
      %s523 = sphi 0, %s507
      %s529 = sphi 0, %s531
      %s532 = sphi 0, %s529
      %s533 = sphi 0, %s532
      %s549 = sphi 0, %s533
      %s555 = sphi 0, %s557
      %s558 = sphi 0, %s555
      %s559 = sphi 0, %s558
      %s575 = sphi 0, %s559
      %s581 = sphi 0, %s583
      %s584 = sphi 0, %s581
      %s585 = sphi 0, %s584
      %s601 = sphi 0, %s585
      %s607 = sphi 0, %s609
      %s610 = sphi 0, %s607
      %s611 = sphi 0, %s610
      %s627 = sphi 0, %s611
      %s633 = sphi 0, %s635
      %s636 = sphi 0, %s633
      %s637 = sphi 0, %s636
      %s653 = sphi 0, %s637
      %s659 = sphi 0, %s661
      %s662 = sphi 0, %s659
      %s663 = sphi 0, %s662
      %s679 = sphi 0, %s663
      %s685 = sphi 0, %s687
      %s688 = sphi 0, %s685
      %s689 = sphi 0, %s688
      %s705 = sphi 0, %s689
      %s711 = sphi 0, %s713
      %s714 = sphi 0, %s711
      %s715 = sphi 0, %s714
      %s731 = sphi 0, %s715
      %s737 = sphi 0, %s739
      %s740 = sphi 0, %s737
      %s741 = sphi 0, %s740
      %s757 = sphi 0, %s741
      %s763 = sphi 0, %s765
      %s766 = sphi 0, %s763
      %s767 = sphi 0, %s766
      %s783 = sphi 0, %s767
      %s789 = sphi 0, %s791
      %s792 = sphi 0, %s789
      %s793 = sphi 0, %s792
      %s809 = sphi 0, %s793
      %s815 = sphi 0, %s817
      %s818 = sphi 0, %s815
      %s819 = sphi 0, %s818
      %s835 = sphi 0, %s819
      %s841 = sphi 0, %s843
      %s844 = sphi 0, %s841
      %s845 = sphi 0, %s844
      %s861 = sphi 0, %s845
      %s867 = sphi 0, %s869
      %s870 = sphi 0, %s867
      %s871 = sphi 0, %s870
      %s887 = sphi 0, %s871
      %s893 = sphi 0, %s895
      %s896 = sphi 0, %s893
      %s897 = sphi 0, %s896
      %s913 = sphi 0, %s897
      %s919 = sphi 0, %s921
      %s922 = sphi 0, %s919
      %s923 = sphi 0, %s922
      %s939 = sphi 0, %s923
      %s945 = sphi 0, %s947
      %s948 = sphi 0, %s945
      %s949 = sphi 0, %s948
      %s965 = sphi 0, %s949
    $region4: #{tpu_custom_call.1} parent=1 // loop_header_branch
      %92 = sbr.rel (%p90) target = $region8
    $region5: #{tpu_custom_call.1} parent=1 // loop_body
      %s94 = ssub.s32 %s89, 1
      %s95 = ssub.s32 %s89, 2
      %s102 = sadd.s32 1, %s97
      %p103 = scmp.ge.s32.totalorder %s102, 2
      %s104 = scalar_select %p103, 0, %s102
      %s105 = sadd.s32 1, %s96
      %s106 = scalar_select %p103, %s105, %s96
      %p107 = scmp.ge.s32.totalorder %s106, 2
      %s108 = scalar_select %p107, 0, %s106
      %s109 = ssub.s32 %s96, %s108
      %p110 = scmp.eq.s32.totalorder %s109, 0
      %s112 = sadd.s32 %s111, 1
      %s113 = scalar_select %p110, %s111, %s112
      %p116 = pneg %p110
      %p117 = scmp.eq.s32.totalorder %s89, 3
      %p118 = por %p116, %p117
      %p119 = scmp.ne.s32.totalorder %s111, %s114
      %p120 = scmp.eq.s32.totalorder %s89, 0
      %p121 = por %p119, %p120
      %p122 = scmp.ne.s32.totalorder %s111, %s114
      %p123 = scmp.eq.s32.totalorder %s94, 3
      %p124 = por %p122, %p123
      %p125 = scmp.ne.s32.totalorder %s114, %s115
      %p126 = scmp.eq.s32.totalorder %s94, 0
      %p127 = por %p125, %p126
      %p128 = scmp.ne.s32.totalorder %s114, %s115
      %p129 = scmp.eq.s32.totalorder %s95, 3
      %p130 = por %p128, %p129
      %p132 = scmp.ne.s32.totalorder %s115, %s131
      %p133 = scmp.eq.s32.totalorder %s95, 0
      %p134 = por %p132, %p133
      %s135 = ssub.s32 %s96, %s108
      %p136 = scmp.eq.s32.totalorder %s135, 0
      %s138 = sadd.s32 %s137, 1
      %s139 = scalar_select %p136, %s137, %s138
      %p142 = pneg %p136
      %p143 = scmp.eq.s32.totalorder %s89, 3
      %p144 = por %p142, %p143
      %p145 = scmp.ne.s32.totalorder %s137, %s140
      %p146 = scmp.eq.s32.totalorder %s89, 0
      %p147 = por %p145, %p146
      %p148 = scmp.ne.s32.totalorder %s137, %s140
      %p149 = scmp.eq.s32.totalorder %s94, 3
      %p150 = por %p148, %p149
      %p151 = scmp.ne.s32.totalorder %s140, %s141
      %p152 = scmp.eq.s32.totalorder %s94, 0
      %p153 = por %p151, %p152
      %p154 = scmp.ne.s32.totalorder %s140, %s141
      %p155 = scmp.eq.s32.totalorder %s95, 3
      %p156 = por %p154, %p155
      %p158 = scmp.ne.s32.totalorder %s141, %s157
      %p159 = scmp.eq.s32.totalorder %s95, 0
      %p160 = por %p158, %p159
      %s161 = ssub.s32 %s96, %s108
      %p162 = scmp.eq.s32.totalorder %s161, 0
      %s164 = sadd.s32 %s163, 1
      %s165 = scalar_select %p162, %s163, %s164
      %p168 = pneg %p162
      %p169 = scmp.eq.s32.totalorder %s89, 3
      %p170 = por %p168, %p169
      %p171 = scmp.ne.s32.totalorder %s163, %s166
      %p172 = scmp.eq.s32.totalorder %s89, 0
      %p173 = por %p171, %p172
      %p174 = scmp.ne.s32.totalorder %s163, %s166
      %p175 = scmp.eq.s32.totalorder %s94, 3
      %p176 = por %p174, %p175
      %p177 = scmp.ne.s32.totalorder %s166, %s167
      %p178 = scmp.eq.s32.totalorder %s94, 0
      %p179 = por %p177, %p178
      %p180 = scmp.ne.s32.totalorder %s166, %s167
      %p181 = scmp.eq.s32.totalorder %s95, 3
      %p182 = por %p180, %p181
      %p184 = scmp.ne.s32.totalorder %s167, %s183
      %p185 = scmp.eq.s32.totalorder %s95, 0
      %p186 = por %p184, %p185
      %s187 = ssub.s32 %s96, %s108
      %p188 = scmp.eq.s32.totalorder %s187, 0
      %s190 = sadd.s32 %s189, 1
      %s191 = scalar_select %p188, %s189, %s190
      %p194 = pneg %p188
      %p195 = scmp.eq.s32.totalorder %s89, 3
      %p196 = por %p194, %p195
      %p197 = scmp.ne.s32.totalorder %s189, %s192
      %p198 = scmp.eq.s32.totalorder %s89, 0
      %p199 = por %p197, %p198
      %p200 = scmp.ne.s32.totalorder %s189, %s192
      %p201 = scmp.eq.s32.totalorder %s94, 3
      %p202 = por %p200, %p201
      %p203 = scmp.ne.s32.totalorder %s192, %s193
      %p204 = scmp.eq.s32.totalorder %s94, 0
      %p205 = por %p203, %p204
      %p206 = scmp.ne.s32.totalorder %s192, %s193
      %p207 = scmp.eq.s32.totalorder %s95, 3
      %p208 = por %p206, %p207
      %p210 = scmp.ne.s32.totalorder %s193, %s209
      %p211 = scmp.eq.s32.totalorder %s95, 0
      %p212 = por %p210, %p211
      %s214 = sadd.s32 %s213, 1
      %p217 = scmp.eq.s32.totalorder %s89, 3
      %p218 = scmp.ne.s32.totalorder %s213, %s215
      %p219 = scmp.eq.s32.totalorder %s89, 0
      %p220 = por %p218, %p219
      %p221 = scmp.ne.s32.totalorder %s213, %s215
      %p222 = scmp.eq.s32.totalorder %s94, 3
      %p223 = por %p221, %p222
      %p224 = scmp.ne.s32.totalorder %s215, %s216
      %p225 = scmp.eq.s32.totalorder %s94, 0
      %p226 = por %p224, %p225
      %p227 = scmp.ne.s32.totalorder %s215, %s216
      %p228 = scmp.eq.s32.totalorder %s95, 3
      %p229 = por %p227, %p228
      %p231 = scmp.ne.s32.totalorder %s216, %s230
      %p232 = scmp.eq.s32.totalorder %s95, 0
      %p233 = por %p231, %p232
      %s235 = sadd.s32 %s234, 1
      %p238 = scmp.eq.s32.totalorder %s89, 3
      %p239 = scmp.ne.s32.totalorder %s234, %s236
      %p240 = scmp.eq.s32.totalorder %s89, 0
      %p241 = por %p239, %p240
      %p242 = scmp.ne.s32.totalorder %s234, %s236
      %p243 = scmp.eq.s32.totalorder %s94, 3
      %p244 = por %p242, %p243
      %p245 = scmp.ne.s32.totalorder %s236, %s237
      %p246 = scmp.eq.s32.totalorder %s94, 0
      %p247 = por %p245, %p246
      %p248 = scmp.ne.s32.totalorder %s236, %s237
      %p249 = scmp.eq.s32.totalorder %s95, 3
      %p250 = por %p248, %p249
      %p252 = scmp.ne.s32.totalorder %s237, %s251
      %p253 = scmp.eq.s32.totalorder %s95, 0
      %p254 = por %p252, %p253
      %s256 = sadd.s32 %s255, 1
      %p259 = scmp.eq.s32.totalorder %s89, 3
      %p260 = scmp.ne.s32.totalorder %s255, %s257
      %p261 = scmp.eq.s32.totalorder %s89, 0
      %p262 = por %p260, %p261
      %p263 = scmp.ne.s32.totalorder %s255, %s257
      %p264 = scmp.eq.s32.totalorder %s94, 3
      %p265 = por %p263, %p264
      %p266 = scmp.ne.s32.totalorder %s257, %s258
      %p267 = scmp.eq.s32.totalorder %s94, 0
      %p268 = por %p266, %p267
      %p269 = scmp.ne.s32.totalorder %s257, %s258
      %p270 = scmp.eq.s32.totalorder %s95, 3
      %p271 = por %p269, %p270
      %p273 = scmp.ne.s32.totalorder %s258, %s272
      %p274 = scmp.eq.s32.totalorder %s95, 0
      %p275 = por %p273, %p274
      %s277 = sadd.s32 %s276, 1
      %p280 = scmp.eq.s32.totalorder %s89, 3
      %p281 = scmp.ne.s32.totalorder %s276, %s278
      %p282 = scmp.eq.s32.totalorder %s89, 0
      %p283 = por %p281, %p282
      %p284 = scmp.ne.s32.totalorder %s276, %s278
      %p285 = scmp.eq.s32.totalorder %s94, 3
      %p286 = por %p284, %p285
      %p287 = scmp.ne.s32.totalorder %s278, %s279
      %p288 = scmp.eq.s32.totalorder %s94, 0
      %p289 = por %p287, %p288
      %p290 = scmp.ne.s32.totalorder %s278, %s279
      %p291 = scmp.eq.s32.totalorder %s95, 3
      %p292 = por %p290, %p291
      %p294 = scmp.ne.s32.totalorder %s279, %s293
      %p295 = scmp.eq.s32.totalorder %s95, 0
      %p296 = por %p294, %p295
      %s298 = sadd.s32 %s297, 1
      %p301 = scmp.eq.s32.totalorder %s89, 3
      %p302 = scmp.ne.s32.totalorder %s297, %s299
      %p303 = scmp.eq.s32.totalorder %s89, 0
      %p304 = por %p302, %p303
      %p305 = scmp.ne.s32.totalorder %s297, %s299
      %p306 = scmp.eq.s32.totalorder %s94, 3
      %p307 = por %p305, %p306
      %p308 = scmp.ne.s32.totalorder %s299, %s300
      %p309 = scmp.eq.s32.totalorder %s94, 0
      %p310 = por %p308, %p309
      %p311 = scmp.ne.s32.totalorder %s299, %s300
      %p312 = scmp.eq.s32.totalorder %s95, 3
      %p313 = por %p311, %p312
      %p315 = scmp.ne.s32.totalorder %s300, %s314
      %p316 = scmp.eq.s32.totalorder %s95, 0
      %p317 = por %p315, %p316
      %s319 = sadd.s32 %s318, 1
      %p322 = scmp.eq.s32.totalorder %s89, 3
      %p323 = scmp.ne.s32.totalorder %s318, %s320
      %p324 = scmp.eq.s32.totalorder %s89, 0
      %p325 = por %p323, %p324
      %p326 = scmp.ne.s32.totalorder %s318, %s320
      %p327 = scmp.eq.s32.totalorder %s94, 3
      %p328 = por %p326, %p327
      %p329 = scmp.ne.s32.totalorder %s320, %s321
      %p330 = scmp.eq.s32.totalorder %s94, 0
      %p331 = por %p329, %p330
      %p332 = scmp.ne.s32.totalorder %s320, %s321
      %p333 = scmp.eq.s32.totalorder %s95, 3
      %p334 = por %p332, %p333
      %p336 = scmp.ne.s32.totalorder %s321, %s335
      %p337 = scmp.eq.s32.totalorder %s95, 0
      %p338 = por %p336, %p337
      %s340 = sadd.s32 %s339, 1
      %p343 = scmp.eq.s32.totalorder %s89, 3
      %p344 = scmp.ne.s32.totalorder %s339, %s341
      %p345 = scmp.eq.s32.totalorder %s89, 0
      %p346 = por %p344, %p345
      %p347 = scmp.ne.s32.totalorder %s339, %s341
      %p348 = scmp.eq.s32.totalorder %s94, 3
      %p349 = por %p347, %p348
      %p350 = scmp.ne.s32.totalorder %s341, %s342
      %p351 = scmp.eq.s32.totalorder %s94, 0
      %p352 = por %p350, %p351
      %p353 = scmp.ne.s32.totalorder %s341, %s342
      %p354 = scmp.eq.s32.totalorder %s95, 3
      %p355 = por %p353, %p354
      %p357 = scmp.ne.s32.totalorder %s342, %s356
      %p358 = scmp.eq.s32.totalorder %s95, 0
      %p359 = por %p357, %p358
      %s361 = sadd.s32 %s360, 1
      %p364 = scmp.eq.s32.totalorder %s89, 3
      %p365 = scmp.ne.s32.totalorder %s360, %s362
      %p366 = scmp.eq.s32.totalorder %s89, 0
      %p367 = por %p365, %p366
      %p368 = scmp.ne.s32.totalorder %s360, %s362
      %p369 = scmp.eq.s32.totalorder %s94, 3
      %p370 = por %p368, %p369
      %p371 = scmp.ne.s32.totalorder %s362, %s363
      %p372 = scmp.eq.s32.totalorder %s94, 0
      %p373 = por %p371, %p372
      %p374 = scmp.ne.s32.totalorder %s362, %s363
      %p375 = scmp.eq.s32.totalorder %s95, 3
      %p376 = por %p374, %p375
      %p378 = scmp.ne.s32.totalorder %s363, %s377
      %p379 = scmp.eq.s32.totalorder %s95, 0
      %p380 = por %p378, %p379
      %s382 = sadd.s32 %s381, 1
      %p385 = scmp.eq.s32.totalorder %s89, 3
      %p386 = scmp.ne.s32.totalorder %s381, %s383
      %p387 = scmp.eq.s32.totalorder %s89, 0
      %p388 = por %p386, %p387
      %p389 = scmp.ne.s32.totalorder %s381, %s383
      %p390 = scmp.eq.s32.totalorder %s94, 3
      %p391 = por %p389, %p390
      %p392 = scmp.ne.s32.totalorder %s383, %s384
      %p393 = scmp.eq.s32.totalorder %s94, 0
      %p394 = por %p392, %p393
      %p395 = scmp.ne.s32.totalorder %s383, %s384
      %p396 = scmp.eq.s32.totalorder %s95, 3
      %p397 = por %p395, %p396
      %p399 = scmp.ne.s32.totalorder %s384, %s398
      %p400 = scmp.eq.s32.totalorder %s95, 0
      %p401 = por %p399, %p400
      %s403 = sadd.s32 %s402, 1
      %p406 = scmp.eq.s32.totalorder %s89, 3
      %p407 = scmp.ne.s32.totalorder %s402, %s404
      %p408 = scmp.eq.s32.totalorder %s89, 0
      %p409 = por %p407, %p408
      %p410 = scmp.ne.s32.totalorder %s402, %s404
      %p411 = scmp.eq.s32.totalorder %s94, 3
      %p412 = por %p410, %p411
      %p413 = scmp.ne.s32.totalorder %s404, %s405
      %p414 = scmp.eq.s32.totalorder %s94, 0
      %p415 = por %p413, %p414
      %p416 = scmp.ne.s32.totalorder %s404, %s405
      %p417 = scmp.eq.s32.totalorder %s95, 3
      %p418 = por %p416, %p417
      %p420 = scmp.ne.s32.totalorder %s405, %s419
      %p421 = scmp.eq.s32.totalorder %s95, 0
      %p422 = por %p420, %p421
      %s423 = ssub.s32 %s97, %s104
      %p424 = scmp.eq.s32.totalorder %s423, 0
      %s426 = sadd.s32 %s425, 1
      %s427 = scalar_select %p424, %s425, %s426
      %p430 = pneg %p424
      %p431 = scmp.eq.s32.totalorder %s89, 3
      %p432 = por %p430, %p431
      %p433 = scmp.ne.s32.totalorder %s425, %s428
      %p434 = scmp.eq.s32.totalorder %s89, 0
      %p435 = por %p433, %p434
      %p436 = scmp.ne.s32.totalorder %s425, %s428
      %p437 = scmp.eq.s32.totalorder %s94, 3
      %p438 = por %p436, %p437
      %p439 = scmp.ne.s32.totalorder %s428, %s429
      %p440 = scmp.eq.s32.totalorder %s94, 0
      %p441 = por %p439, %p440
      %p442 = scmp.ne.s32.totalorder %s428, %s429
      %p443 = scmp.eq.s32.totalorder %s95, 3
      %p444 = por %p442, %p443
      %p446 = scmp.ne.s32.totalorder %s429, %s445
      %p447 = scmp.eq.s32.totalorder %s95, 0
      %p448 = por %p446, %p447
      %s449 = ssub.s32 %s97, %s104
      %p450 = scmp.eq.s32.totalorder %s449, 0
      %s452 = sadd.s32 %s451, 1
      %s453 = scalar_select %p450, %s451, %s452
      %p456 = pneg %p450
      %p457 = scmp.eq.s32.totalorder %s89, 3
      %p458 = por %p456, %p457
      %p459 = scmp.ne.s32.totalorder %s451, %s454
      %p460 = scmp.eq.s32.totalorder %s89, 0
      %p461 = por %p459, %p460
      %p462 = scmp.ne.s32.totalorder %s451, %s454
      %p463 = scmp.eq.s32.totalorder %s94, 3
      %p464 = por %p462, %p463
      %p465 = scmp.ne.s32.totalorder %s454, %s455
      %p466 = scmp.eq.s32.totalorder %s94, 0
      %p467 = por %p465, %p466
      %p468 = scmp.ne.s32.totalorder %s454, %s455
      %p469 = scmp.eq.s32.totalorder %s95, 3
      %p470 = por %p468, %p469
      %p472 = scmp.ne.s32.totalorder %s455, %s471
      %p473 = scmp.eq.s32.totalorder %s95, 0
      %p474 = por %p472, %p473
      %s475 = ssub.s32 %s97, %s104
      %p476 = scmp.eq.s32.totalorder %s475, 0
      %s478 = sadd.s32 %s477, 1
      %s479 = scalar_select %p476, %s477, %s478
      %p482 = pneg %p476
      %p483 = scmp.eq.s32.totalorder %s89, 3
      %p484 = por %p482, %p483
      %p485 = scmp.ne.s32.totalorder %s477, %s480
      %p486 = scmp.eq.s32.totalorder %s89, 0
      %p487 = por %p485, %p486
      %p488 = scmp.ne.s32.totalorder %s477, %s480
      %p489 = scmp.eq.s32.totalorder %s94, 3
      %p490 = por %p488, %p489
      %p491 = scmp.ne.s32.totalorder %s480, %s481
      %p492 = scmp.eq.s32.totalorder %s94, 0
      %p493 = por %p491, %p492
      %p494 = scmp.ne.s32.totalorder %s480, %s481
      %p495 = scmp.eq.s32.totalorder %s95, 3
      %p496 = por %p494, %p495
      %p498 = scmp.ne.s32.totalorder %s481, %s497
      %p499 = scmp.eq.s32.totalorder %s95, 0
      %p500 = por %p498, %p499
      %s501 = ssub.s32 %s97, %s104
      %p502 = scmp.eq.s32.totalorder %s501, 0
      %s504 = sadd.s32 %s503, 1
      %s505 = scalar_select %p502, %s503, %s504
      %p508 = pneg %p502
      %p509 = scmp.eq.s32.totalorder %s89, 3
      %p510 = por %p508, %p509
      %p511 = scmp.ne.s32.totalorder %s503, %s506
      %p512 = scmp.eq.s32.totalorder %s89, 0
      %p513 = por %p511, %p512
      %p514 = scmp.ne.s32.totalorder %s503, %s506
      %p515 = scmp.eq.s32.totalorder %s94, 3
      %p516 = por %p514, %p515
      %p517 = scmp.ne.s32.totalorder %s506, %s507
      %p518 = scmp.eq.s32.totalorder %s94, 0
      %p519 = por %p517, %p518
      %p520 = scmp.ne.s32.totalorder %s506, %s507
      %p521 = scmp.eq.s32.totalorder %s95, 3
      %p522 = por %p520, %p521
      %p524 = scmp.ne.s32.totalorder %s507, %s523
      %p525 = scmp.eq.s32.totalorder %s95, 0
      %p526 = por %p524, %p525
      %s527 = ssub.s32 %s97, %s104
      %p528 = scmp.eq.s32.totalorder %s527, 0
      %s530 = sadd.s32 %s529, 1
      %s531 = scalar_select %p528, %s529, %s530
      %p534 = pneg %p528
      %p535 = scmp.eq.s32.totalorder %s89, 3
      %p536 = por %p534, %p535
      %p537 = scmp.ne.s32.totalorder %s529, %s532
      %p538 = scmp.eq.s32.totalorder %s89, 0
      %p539 = por %p537, %p538
      %p540 = scmp.ne.s32.totalorder %s529, %s532
      %p541 = scmp.eq.s32.totalorder %s94, 3
      %p542 = por %p540, %p541
      %p543 = scmp.ne.s32.totalorder %s532, %s533
      %p544 = scmp.eq.s32.totalorder %s94, 0
      %p545 = por %p543, %p544
      %p546 = scmp.ne.s32.totalorder %s532, %s533
      %p547 = scmp.eq.s32.totalorder %s95, 3
      %p548 = por %p546, %p547
      %p550 = scmp.ne.s32.totalorder %s533, %s549
      %p551 = scmp.eq.s32.totalorder %s95, 0
      %p552 = por %p550, %p551
      %s553 = ssub.s32 %s97, %s104
      %p554 = scmp.eq.s32.totalorder %s553, 0
      %s556 = sadd.s32 %s555, 1
      %s557 = scalar_select %p554, %s555, %s556
      %p560 = pneg %p554
      %p561 = scmp.eq.s32.totalorder %s89, 3
      %p562 = por %p560, %p561
      %p563 = scmp.ne.s32.totalorder %s555, %s558
      %p564 = scmp.eq.s32.totalorder %s89, 0
      %p565 = por %p563, %p564
      %p566 = scmp.ne.s32.totalorder %s555, %s558
      %p567 = scmp.eq.s32.totalorder %s94, 3
      %p568 = por %p566, %p567
      %p569 = scmp.ne.s32.totalorder %s558, %s559
      %p570 = scmp.eq.s32.totalorder %s94, 0
      %p571 = por %p569, %p570
      %p572 = scmp.ne.s32.totalorder %s558, %s559
      %p573 = scmp.eq.s32.totalorder %s95, 3
      %p574 = por %p572, %p573
      %p576 = scmp.ne.s32.totalorder %s559, %s575
      %p577 = scmp.eq.s32.totalorder %s95, 0
      %p578 = por %p576, %p577
      %s579 = ssub.s32 %s97, %s104
      %p580 = scmp.eq.s32.totalorder %s579, 0
      %s582 = sadd.s32 %s581, 1
      %s583 = scalar_select %p580, %s581, %s582
      %p586 = pneg %p580
      %p587 = scmp.eq.s32.totalorder %s89, 3
      %p588 = por %p586, %p587
      %p589 = scmp.ne.s32.totalorder %s581, %s584
      %p590 = scmp.eq.s32.totalorder %s89, 0
      %p591 = por %p589, %p590
      %p592 = scmp.ne.s32.totalorder %s581, %s584
      %p593 = scmp.eq.s32.totalorder %s94, 3
      %p594 = por %p592, %p593
      %p595 = scmp.ne.s32.totalorder %s584, %s585
      %p596 = scmp.eq.s32.totalorder %s94, 0
      %p597 = por %p595, %p596
      %p598 = scmp.ne.s32.totalorder %s584, %s585
      %p599 = scmp.eq.s32.totalorder %s95, 3
      %p600 = por %p598, %p599
      %p602 = scmp.ne.s32.totalorder %s585, %s601
      %p603 = scmp.eq.s32.totalorder %s95, 0
      %p604 = por %p602, %p603
      %s605 = ssub.s32 %s97, %s104
      %p606 = scmp.eq.s32.totalorder %s605, 0
      %s608 = sadd.s32 %s607, 1
      %s609 = scalar_select %p606, %s607, %s608
      %p612 = pneg %p606
      %p613 = scmp.eq.s32.totalorder %s89, 3
      %p614 = por %p612, %p613
      %p615 = scmp.ne.s32.totalorder %s607, %s610
      %p616 = scmp.eq.s32.totalorder %s89, 0
      %p617 = por %p615, %p616
      %p618 = scmp.ne.s32.totalorder %s607, %s610
      %p619 = scmp.eq.s32.totalorder %s94, 3
      %p620 = por %p618, %p619
      %p621 = scmp.ne.s32.totalorder %s610, %s611
      %p622 = scmp.eq.s32.totalorder %s94, 0
      %p623 = por %p621, %p622
      %p624 = scmp.ne.s32.totalorder %s610, %s611
      %p625 = scmp.eq.s32.totalorder %s95, 3
      %p626 = por %p624, %p625
      %p628 = scmp.ne.s32.totalorder %s611, %s627
      %p629 = scmp.eq.s32.totalorder %s95, 0
      %p630 = por %p628, %p629
      %s631 = ssub.s32 %s97, %s104
      %p632 = scmp.eq.s32.totalorder %s631, 0
      %s634 = sadd.s32 %s633, 1
      %s635 = scalar_select %p632, %s633, %s634
      %p638 = pneg %p632
      %p639 = scmp.eq.s32.totalorder %s89, 3
      %p640 = por %p638, %p639
      %p641 = scmp.ne.s32.totalorder %s633, %s636
      %p642 = scmp.eq.s32.totalorder %s89, 0
      %p643 = por %p641, %p642
      %p644 = scmp.ne.s32.totalorder %s633, %s636
      %p645 = scmp.eq.s32.totalorder %s94, 3
      %p646 = por %p644, %p645
      %p647 = scmp.ne.s32.totalorder %s636, %s637
      %p648 = scmp.eq.s32.totalorder %s94, 0
      %p649 = por %p647, %p648
      %p650 = scmp.ne.s32.totalorder %s636, %s637
      %p651 = scmp.eq.s32.totalorder %s95, 3
      %p652 = por %p650, %p651
      %p654 = scmp.ne.s32.totalorder %s637, %s653
      %p655 = scmp.eq.s32.totalorder %s95, 0
      %p656 = por %p654, %p655
      %s657 = ssub.s32 %s97, %s104
      %p658 = scmp.eq.s32.totalorder %s657, 0
      %s660 = sadd.s32 %s659, 1
      %s661 = scalar_select %p658, %s659, %s660
      %p664 = pneg %p658
      %p665 = scmp.eq.s32.totalorder %s89, 3
      %p666 = por %p664, %p665
      %p667 = scmp.ne.s32.totalorder %s659, %s662
      %p668 = scmp.eq.s32.totalorder %s89, 0
      %p669 = por %p667, %p668
      %p670 = scmp.ne.s32.totalorder %s659, %s662
      %p671 = scmp.eq.s32.totalorder %s94, 3
      %p672 = por %p670, %p671
      %p673 = scmp.ne.s32.totalorder %s662, %s663
      %p674 = scmp.eq.s32.totalorder %s94, 0
      %p675 = por %p673, %p674
      %p676 = scmp.ne.s32.totalorder %s662, %s663
      %p677 = scmp.eq.s32.totalorder %s95, 3
      %p678 = por %p676, %p677
      %p680 = scmp.ne.s32.totalorder %s663, %s679
      %p681 = scmp.eq.s32.totalorder %s95, 0
      %p682 = por %p680, %p681
      %s683 = ssub.s32 %s97, %s104
      %p684 = scmp.eq.s32.totalorder %s683, 0
      %s686 = sadd.s32 %s685, 1
      %s687 = scalar_select %p684, %s685, %s686
      %p690 = pneg %p684
      %p691 = scmp.eq.s32.totalorder %s89, 3
      %p692 = por %p690, %p691
      %p693 = scmp.ne.s32.totalorder %s685, %s688
      %p694 = scmp.eq.s32.totalorder %s89, 0
      %p695 = por %p693, %p694
      %p696 = scmp.ne.s32.totalorder %s685, %s688
      %p697 = scmp.eq.s32.totalorder %s94, 3
      %p698 = por %p696, %p697
      %p699 = scmp.ne.s32.totalorder %s688, %s689
      %p700 = scmp.eq.s32.totalorder %s94, 0
      %p701 = por %p699, %p700
      %p702 = scmp.ne.s32.totalorder %s688, %s689
      %p703 = scmp.eq.s32.totalorder %s95, 3
      %p704 = por %p702, %p703
      %p706 = scmp.ne.s32.totalorder %s689, %s705
      %p707 = scmp.eq.s32.totalorder %s95, 0
      %p708 = por %p706, %p707
      %s709 = ssub.s32 %s97, %s104
      %p710 = scmp.eq.s32.totalorder %s709, 0
      %s712 = sadd.s32 %s711, 1
      %s713 = scalar_select %p710, %s711, %s712
      %p716 = pneg %p710
      %p717 = scmp.eq.s32.totalorder %s89, 3
      %p718 = por %p716, %p717
      %p719 = scmp.ne.s32.totalorder %s711, %s714
      %p720 = scmp.eq.s32.totalorder %s89, 0
      %p721 = por %p719, %p720
      %p722 = scmp.ne.s32.totalorder %s711, %s714
      %p723 = scmp.eq.s32.totalorder %s94, 3
      %p724 = por %p722, %p723
      %p725 = scmp.ne.s32.totalorder %s714, %s715
      %p726 = scmp.eq.s32.totalorder %s94, 0
      %p727 = por %p725, %p726
      %p728 = scmp.ne.s32.totalorder %s714, %s715
      %p729 = scmp.eq.s32.totalorder %s95, 3
      %p730 = por %p728, %p729
      %p732 = scmp.ne.s32.totalorder %s715, %s731
      %p733 = scmp.eq.s32.totalorder %s95, 0
      %p734 = por %p732, %p733
      %s735 = ssub.s32 %s97, %s104
      %p736 = scmp.eq.s32.totalorder %s735, 0
      %s738 = sadd.s32 %s737, 1
      %s739 = scalar_select %p736, %s737, %s738
      %p742 = pneg %p736
      %p743 = scmp.eq.s32.totalorder %s89, 3
      %p744 = por %p742, %p743
      %p745 = scmp.ne.s32.totalorder %s737, %s740
      %p746 = scmp.eq.s32.totalorder %s89, 0
      %p747 = por %p745, %p746
      %p748 = scmp.ne.s32.totalorder %s737, %s740
      %p749 = scmp.eq.s32.totalorder %s94, 3
      %p750 = por %p748, %p749
      %p751 = scmp.ne.s32.totalorder %s740, %s741
      %p752 = scmp.eq.s32.totalorder %s94, 0
      %p753 = por %p751, %p752
      %p754 = scmp.ne.s32.totalorder %s740, %s741
      %p755 = scmp.eq.s32.totalorder %s95, 3
      %p756 = por %p754, %p755
      %p758 = scmp.ne.s32.totalorder %s741, %s757
      %p759 = scmp.eq.s32.totalorder %s95, 0
      %p760 = por %p758, %p759
      %s761 = ssub.s32 %s97, %s104
      %p762 = scmp.eq.s32.totalorder %s761, 0
      %s764 = sadd.s32 %s763, 1
      %s765 = scalar_select %p762, %s763, %s764
      %p768 = pneg %p762
      %p769 = scmp.eq.s32.totalorder %s89, 3
      %p770 = por %p768, %p769
      %p771 = scmp.ne.s32.totalorder %s763, %s766
      %p772 = scmp.eq.s32.totalorder %s89, 0
      %p773 = por %p771, %p772
      %p774 = scmp.ne.s32.totalorder %s763, %s766
      %p775 = scmp.eq.s32.totalorder %s94, 3
      %p776 = por %p774, %p775
      %p777 = scmp.ne.s32.totalorder %s766, %s767
      %p778 = scmp.eq.s32.totalorder %s94, 0
      %p779 = por %p777, %p778
      %p780 = scmp.ne.s32.totalorder %s766, %s767
      %p781 = scmp.eq.s32.totalorder %s95, 3
      %p782 = por %p780, %p781
      %p784 = scmp.ne.s32.totalorder %s767, %s783
      %p785 = scmp.eq.s32.totalorder %s95, 0
      %p786 = por %p784, %p785
      %s787 = ssub.s32 %s97, %s104
      %p788 = scmp.eq.s32.totalorder %s787, 0
      %s790 = sadd.s32 %s789, 1
      %s791 = scalar_select %p788, %s789, %s790
      %p794 = pneg %p788
      %p795 = scmp.eq.s32.totalorder %s89, 3
      %p796 = por %p794, %p795
      %p797 = scmp.ne.s32.totalorder %s789, %s792
      %p798 = scmp.eq.s32.totalorder %s89, 0
      %p799 = por %p797, %p798
      %p800 = scmp.ne.s32.totalorder %s789, %s792
      %p801 = scmp.eq.s32.totalorder %s94, 3
      %p802 = por %p800, %p801
      %p803 = scmp.ne.s32.totalorder %s792, %s793
      %p804 = scmp.eq.s32.totalorder %s94, 0
      %p805 = por %p803, %p804
      %p806 = scmp.ne.s32.totalorder %s792, %s793
      %p807 = scmp.eq.s32.totalorder %s95, 3
      %p808 = por %p806, %p807
      %p810 = scmp.ne.s32.totalorder %s793, %s809
      %p811 = scmp.eq.s32.totalorder %s95, 0
      %p812 = por %p810, %p811
      %s813 = ssub.s32 %s97, %s104
      %p814 = scmp.eq.s32.totalorder %s813, 0
      %s816 = sadd.s32 %s815, 1
      %s817 = scalar_select %p814, %s815, %s816
      %p820 = pneg %p814
      %p821 = scmp.eq.s32.totalorder %s89, 3
      %p822 = por %p820, %p821
      %p823 = scmp.ne.s32.totalorder %s815, %s818
      %p824 = scmp.eq.s32.totalorder %s89, 0
      %p825 = por %p823, %p824
      %p826 = scmp.ne.s32.totalorder %s815, %s818
      %p827 = scmp.eq.s32.totalorder %s94, 3
      %p828 = por %p826, %p827
      %p829 = scmp.ne.s32.totalorder %s818, %s819
      %p830 = scmp.eq.s32.totalorder %s94, 0
      %p831 = por %p829, %p830
      %p832 = scmp.ne.s32.totalorder %s818, %s819
      %p833 = scmp.eq.s32.totalorder %s95, 3
      %p834 = por %p832, %p833
      %p836 = scmp.ne.s32.totalorder %s819, %s835
      %p837 = scmp.eq.s32.totalorder %s95, 0
      %p838 = por %p836, %p837
      %s839 = ssub.s32 %s97, %s104
      %p840 = scmp.eq.s32.totalorder %s839, 0
      %s842 = sadd.s32 %s841, 1
      %s843 = scalar_select %p840, %s841, %s842
      %p846 = pneg %p840
      %p847 = scmp.eq.s32.totalorder %s89, 3
      %p848 = por %p846, %p847
      %p849 = scmp.ne.s32.totalorder %s841, %s844
      %p850 = scmp.eq.s32.totalorder %s89, 0
      %p851 = por %p849, %p850
      %p852 = scmp.ne.s32.totalorder %s841, %s844
      %p853 = scmp.eq.s32.totalorder %s94, 3
      %p854 = por %p852, %p853
      %p855 = scmp.ne.s32.totalorder %s844, %s845
      %p856 = scmp.eq.s32.totalorder %s94, 0
      %p857 = por %p855, %p856
      %p858 = scmp.ne.s32.totalorder %s844, %s845
      %p859 = scmp.eq.s32.totalorder %s95, 3
      %p860 = por %p858, %p859
      %p862 = scmp.ne.s32.totalorder %s845, %s861
      %p863 = scmp.eq.s32.totalorder %s95, 0
      %p864 = por %p862, %p863
      %s865 = ssub.s32 %s97, %s104
      %p866 = scmp.eq.s32.totalorder %s865, 0
      %s868 = sadd.s32 %s867, 1
      %s869 = scalar_select %p866, %s867, %s868
      %p872 = pneg %p866
      %p873 = scmp.eq.s32.totalorder %s89, 3
      %p874 = por %p872, %p873
      %p875 = scmp.ne.s32.totalorder %s867, %s870
      %p876 = scmp.eq.s32.totalorder %s89, 0
      %p877 = por %p875, %p876
      %p878 = scmp.ne.s32.totalorder %s867, %s870
      %p879 = scmp.eq.s32.totalorder %s94, 3
      %p880 = por %p878, %p879
      %p881 = scmp.ne.s32.totalorder %s870, %s871
      %p882 = scmp.eq.s32.totalorder %s94, 0
      %p883 = por %p881, %p882
      %p884 = scmp.ne.s32.totalorder %s870, %s871
      %p885 = scmp.eq.s32.totalorder %s95, 3
      %p886 = por %p884, %p885
      %p888 = scmp.ne.s32.totalorder %s871, %s887
      %p889 = scmp.eq.s32.totalorder %s95, 0
      %p890 = por %p888, %p889
      %s891 = ssub.s32 %s97, %s104
      %p892 = scmp.eq.s32.totalorder %s891, 0
      %s894 = sadd.s32 %s893, 1
      %s895 = scalar_select %p892, %s893, %s894
      %p898 = pneg %p892
      %p899 = scmp.eq.s32.totalorder %s89, 3
      %p900 = por %p898, %p899
      %p901 = scmp.ne.s32.totalorder %s893, %s896
      %p902 = scmp.eq.s32.totalorder %s89, 0
      %p903 = por %p901, %p902
      %p904 = scmp.ne.s32.totalorder %s893, %s896
      %p905 = scmp.eq.s32.totalorder %s94, 3
      %p906 = por %p904, %p905
      %p907 = scmp.ne.s32.totalorder %s896, %s897
      %p908 = scmp.eq.s32.totalorder %s94, 0
      %p909 = por %p907, %p908
      %p910 = scmp.ne.s32.totalorder %s896, %s897
      %p911 = scmp.eq.s32.totalorder %s95, 3
      %p912 = por %p910, %p911
      %p914 = scmp.ne.s32.totalorder %s897, %s913
      %p915 = scmp.eq.s32.totalorder %s95, 0
      %p916 = por %p914, %p915
      %s917 = ssub.s32 %s97, %s104
      %p918 = scmp.eq.s32.totalorder %s917, 0
      %s920 = sadd.s32 %s919, 1
      %s921 = scalar_select %p918, %s919, %s920
      %p924 = pneg %p918
      %p925 = scmp.eq.s32.totalorder %s89, 3
      %p926 = por %p924, %p925
      %p927 = scmp.ne.s32.totalorder %s919, %s922
      %p928 = scmp.eq.s32.totalorder %s89, 0
      %p929 = por %p927, %p928
      %p930 = scmp.ne.s32.totalorder %s919, %s922
      %p931 = scmp.eq.s32.totalorder %s94, 3
      %p932 = por %p930, %p931
      %p933 = scmp.ne.s32.totalorder %s922, %s923
      %p934 = scmp.eq.s32.totalorder %s94, 0
      %p935 = por %p933, %p934
      %p936 = scmp.ne.s32.totalorder %s922, %s923
      %p937 = scmp.eq.s32.totalorder %s95, 3
      %p938 = por %p936, %p937
      %p940 = scmp.ne.s32.totalorder %s923, %s939
      %p941 = scmp.eq.s32.totalorder %s95, 0
      %p942 = por %p940, %p941
      %s943 = ssub.s32 %s96, %s108
      %p944 = scmp.eq.s32.totalorder %s943, 0
      %s946 = sadd.s32 %s945, 1
      %s947 = scalar_select %p944, %s945, %s946
      %p950 = pneg %p944
      %p951 = scmp.eq.s32.totalorder %s89, 3
      %p952 = por %p950, %p951
      %p953 = scmp.ne.s32.totalorder %s945, %s948
      %p954 = scmp.eq.s32.totalorder %s89, 0
      %p955 = por %p953, %p954
      %p956 = scmp.ne.s32.totalorder %s945, %s948
      %p957 = scmp.eq.s32.totalorder %s94, 3
      %p958 = por %p956, %p957
      %p959 = scmp.ne.s32.totalorder %s948, %s949
      %p960 = scmp.eq.s32.totalorder %s94, 0
      %p961 = por %p959, %p960
      %p962 = scmp.ne.s32.totalorder %s948, %s949
      %p963 = scmp.eq.s32.totalorder %s95, 3
      %p964 = por %p962, %p963
      %p966 = scmp.ne.s32.totalorder %s949, %s965
      %p967 = scmp.eq.s32.totalorder %s95, 0
      %p968 = por %p966, %p967
      %p969 = scmp.le.s32.totalorder 1, %s89
      %p970 = scmp.lt.s32.totalorder %s89, 5
      %p971 = pnand %p969, %p970
      %p972 = pneg %p971
      // Predicated region
      $region9: #{tpu_custom_call.1} parent=5 // pred_check
        _
      $region10: #{tpu_custom_call.1} parent=5 // pred_check_branch
        %974 = sbr.rel (%p971) target = $region12
      $region11: #{tpu_custom_call.1} parent=5 // pred_region
        %s975 = ssub.s32 %s89, 1
        // Predicated region
        $region13: #{tpu_custom_call.1} parent=11 // pred_check
          %p976 = pneg %p226
        $region14: #{tpu_custom_call.1} parent=11 // pred_check_branch
          %978 = sbr.rel (%p976) target = $region16
        $region15: #{tpu_custom_call.1} parent=11 // pred_region
          %s980 = ssub.s32 128, 128
          %981 = vsyncadd [#allocation11], %s980
          %s983 = sshll.u32 [#allocation10], 4
          %s984 = int_to_ptr.vmem [resolvable:$true] %s983
          %986 = dma.hbm_to_vmem [thread:$0]  %s9, 128, %s984, [#allocation11]
        $region16: #{tpu_custom_call.1} parent=11 // pred_fallthru
          _
        // Predicated region
        $region17: #{tpu_custom_call.1} parent=11 // pred_check
          %p987 = pneg %p247
        $region18: #{tpu_custom_call.1} parent=11 // pred_check_branch
          %989 = sbr.rel (%p987) target = $region20
        $region19: #{tpu_custom_call.1} parent=11 // pred_region
          %s991 = ssub.s32 256, 256
          %992 = vsyncadd [#allocation11], %s991
          %s993 = sshll.u32 [#allocation12], 4
          %s994 = int_to_ptr.vmem [resolvable:$true] %s993
          %999 = dma.hbm_to_vmem [thread:$0]  %s11, 256, %s994, [#allocation11], 128, 128, 8
        $region20: #{tpu_custom_call.1} parent=11 // pred_fallthru
          _
        // Predicated region
        $region21: #{tpu_custom_call.1} parent=11 // pred_check
          %p1000 = pneg %p268
        $region22: #{tpu_custom_call.1} parent=11 // pred_check_branch
          %1002 = sbr.rel (%p1000) target = $region24
        $region23: #{tpu_custom_call.1} parent=11 // pred_region
          %s1004 = ssub.s32 16, 16
          %1005 = vsyncadd [#allocation14], %s1004
          %s1007 = sshll.u32 [#allocation13], 4
          %s1008 = int_to_ptr.vmem [resolvable:$true] %s1007
          %1010 = dma.hbm_to_vmem [thread:$0]  %s13, 16, %s1008, [#allocation14]
        $region24: #{tpu_custom_call.1} parent=11 // pred_fallthru
          _
        // Predicated region
        $region25: #{tpu_custom_call.1} parent=11 // pred_check
          %p1011 = pneg %p289
        $region26: #{tpu_custom_call.1} parent=11 // pred_check_branch
          %1013 = sbr.rel (%p1011) target = $region28
        $region27: #{tpu_custom_call.1} parent=11 // pred_region
          %s1015 = ssub.s32 512, 512
          %1016 = vsyncadd [#allocation14], %s1015
          %s1017 = sshll.u32 [#allocation15], 4
          %s1018 = int_to_ptr.vmem [resolvable:$true] %s1017
          %1023 = dma.hbm_to_vmem [thread:$0]  %s15, 512, %s1018, [#allocation14], 128, 128, 8
        $region28: #{tpu_custom_call.1} parent=11 // pred_fallthru
          _
        // Predicated region
        $region29: #{tpu_custom_call.1} parent=11 // pred_check
          %p1024 = pneg %p310
        $region30: #{tpu_custom_call.1} parent=11 // pred_check_branch
          %1026 = sbr.rel (%p1024) target = $region32
        $region31: #{tpu_custom_call.1} parent=11 // pred_region
          %s1028 = ssub.s32 16, 16
          %1029 = vsyncadd [#allocation17], %s1028
          %s1031 = sshll.u32 [#allocation16], 4
          %s1032 = int_to_ptr.vmem [resolvable:$true] %s1031
          %1034 = dma.hbm_to_vmem [thread:$0]  %s17, 16, %s1032, [#allocation17]
        $region32: #{tpu_custom_call.1} parent=11 // pred_fallthru
          _
        // Predicated region
        $region33: #{tpu_custom_call.1} parent=11 // pred_check
          %p1035 = pneg %p331
        $region34: #{tpu_custom_call.1} parent=11 // pred_check_branch
          %1037 = sbr.rel (%p1035) target = $region36
        $region35: #{tpu_custom_call.1} parent=11 // pred_region
          _
        $region36: #{tpu_custom_call.1} parent=11 // pred_fallthru
          _
        // Predicated region
        $region37: #{tpu_custom_call.1} parent=11 // pred_check
          %p1038 = pneg %p352
        $region38: #{tpu_custom_call.1} parent=11 // pred_check_branch
          %1040 = sbr.rel (%p1038) target = $region40
        $region39: #{tpu_custom_call.1} parent=11 // pred_region
          %s1042 = ssub.s32 512, 512
          %1043 = vsyncadd [#allocation17], %s1042
          %s1044 = sshll.u32 [#allocation18], 4
          %s1045 = int_to_ptr.vmem [resolvable:$true] %s1044
          %1050 = dma.hbm_to_vmem [thread:$0]  %s21, 512, %s1045, [#allocation17], 128, 128, 8
        $region40: #{tpu_custom_call.1} parent=11 // pred_fallthru
          _
        // Predicated region
        $region41: #{tpu_custom_call.1} parent=11 // pred_check
          %p1051 = pneg %p373
        $region42: #{tpu_custom_call.1} parent=11 // pred_check_branch
          %1053 = sbr.rel (%p1051) target = $region44
        $region43: #{tpu_custom_call.1} parent=11 // pred_region
          %s1055 = ssub.s32 16, 16
          %1056 = vsyncadd [#allocation20], %s1055
          %s1058 = sshll.u32 [#allocation19], 4
          %s1059 = int_to_ptr.vmem [resolvable:$true] %s1058
          %1061 = dma.hbm_to_vmem [thread:$0]  %s23, 16, %s1059, [#allocation20]
        $region44: #{tpu_custom_call.1} parent=11 // pred_fallthru
          _
        // Predicated region
        $region45: #{tpu_custom_call.1} parent=11 // pred_check
          %p1062 = pneg %p394
        $region46: #{tpu_custom_call.1} parent=11 // pred_check_branch
          %1064 = sbr.rel (%p1062) target = $region48
        $region47: #{tpu_custom_call.1} parent=11 // pred_region
          %s1066 = ssub.s32 512, 512
          %1067 = vsyncadd [#allocation20], %s1066
          %s1068 = sshll.u32 [#allocation21], 4
          %s1069 = int_to_ptr.vmem [resolvable:$true] %s1068
          %1074 = dma.hbm_to_vmem [thread:$0]  %s25, 512, %s1069, [#allocation20], 128, 128, 8
        $region48: #{tpu_custom_call.1} parent=11 // pred_fallthru
          _
        // Predicated region
        $region49: #{tpu_custom_call.1} parent=11 // pred_check
          %p1075 = pneg %p415
        $region50: #{tpu_custom_call.1} parent=11 // pred_check_branch
          %1077 = sbr.rel (%p1075) target = $region52
        $region51: #{tpu_custom_call.1} parent=11 // pred_region
          %s1079 = ssub.s32 16, 16
          %1080 = vsyncadd [#allocation23], %s1079
          %s1082 = sshll.u32 [#allocation22], 4
          %s1083 = int_to_ptr.vmem [resolvable:$true] %s1082
          %1085 = dma.hbm_to_vmem [thread:$0]  %s27, 16, %s1083, [#allocation23]
        $region52: #{tpu_custom_call.1} parent=11 // pred_fallthru
          _
      $region12: #{tpu_custom_call.1} parent=5 // pred_fallthru
        _
      %p1086 = scmp.lt.s32.totalorder %s89, 4
      // Predicated region
      $region53: #{tpu_custom_call.1} parent=5 // pred_check
        %p1087 = pneg %p1086
      $region54: #{tpu_custom_call.1} parent=5 // pred_check_branch
        %1089 = sbr.rel (%p1087) target = $region56
      $region55: #{tpu_custom_call.1} parent=5 // pred_region
        // Predicated region
        $region57: #{tpu_custom_call.1} parent=55 // pred_check
          %p1090 = pneg %p121
        $region58: #{tpu_custom_call.1} parent=55 // pred_check_branch
          %1092 = sbr.rel (%p1090) target = $region60
        $region59: #{tpu_custom_call.1} parent=55 // pred_region
          %s1093 = sand.u32 %s89, 1
          %s1094 = scalar_lea.sflag [#allocation5], %s1093
          %s1095 = sand.u32 %s111, 1
          %s1096 = smul.addr %s1095, 8
          %s1097 = scalar_lea.vmem [#allocation4], %s1096
          %s1099 = ssub.s32 128, 128
          %1100 = vsyncadd %s1094, %s1099
          %s1101 = smul.addr %s96, 128
          %s1102 = scalar_lea.hbm %s1, %s1101
          %s1104 = sshll.u32 %s1097, 4
          %s1105 = int_to_ptr.vmem [resolvable:$true] %s1104
          %1107 = dma.hbm_to_vmem [thread:$0]  %s1102, 128, %s1105, %s1094
        $region60: #{tpu_custom_call.1} parent=55 // pred_fallthru
          _
        // Predicated region
        $region61: #{tpu_custom_call.1} parent=55 // pred_check
          %p1108 = pneg %p147
        $region62: #{tpu_custom_call.1} parent=55 // pred_check_branch
          %1110 = sbr.rel (%p1108) target = $region64
        $region63: #{tpu_custom_call.1} parent=55 // pred_region
          %s1111 = sand.u32 %s89, 1
          %s1112 = scalar_lea.sflag [#allocation8], %s1111
          %s1113 = sand.u32 %s137, 1
          %s1114 = smul.addr %s1113, 16
          %s1115 = scalar_lea.vmem [#allocation7], %s1114
          %s1117 = ssub.s32 256, 256
          %1118 = vsyncadd %s1112, %s1117
          %s1119 = smul.addr %s96, 2
          %s1120 = smul.addr %s1119, 128
          %s1121 = scalar_lea.hbm %s3, %s1120
          %s1122 = sshll.u32 %s1115, 4
          %s1123 = int_to_ptr.vmem [resolvable:$true] %s1122
          %1128 = dma.hbm_to_vmem [thread:$0]  %s1121, 256, %s1123, %s1112, 128, 128, 8
        $region64: #{tpu_custom_call.1} parent=55 // pred_fallthru
          _
        // Predicated region
        $region65: #{tpu_custom_call.1} parent=55 // pred_check
          %p1129 = pneg %p173
        $region66: #{tpu_custom_call.1} parent=55 // pred_check_branch
          %1131 = sbr.rel (%p1129) target = $region68
        $region67: #{tpu_custom_call.1} parent=55 // pred_region
          %p1132 = scmp.lt.s32.totalorder %s96, 1
          %s1133 = scalar_select %p1132, %s96, 1
          %s1134 = scalar_lea.vmem %s5, %s1133
        $region68: #{tpu_custom_call.1} parent=55 // pred_fallthru
          _
        // Predicated region
        $region69: #{tpu_custom_call.1} parent=55 // pred_check
          %p1135 = pneg %p199
        $region70: #{tpu_custom_call.1} parent=55 // pred_check_branch
          %1137 = sbr.rel (%p1135) target = $region72
        $region71: #{tpu_custom_call.1} parent=55 // pred_region
          %s1138 = sand.u32 %s89, 1
          %s1139 = scalar_lea.sflag [#allocation8], %s1138
          %s1140 = sand.u32 %s189, 1
          %s1141 = scalar_lea.vmem [#allocation9], %s1140
          %s1143 = ssub.s32 16, 16
          %1144 = vsyncadd %s1139, %s1143
          %s1145 = smul.addr %s96, 16
          %s1146 = scalar_lea.hbm %s7, %s1145
          %s1148 = sshll.u32 %s1141, 4
          %s1149 = int_to_ptr.vmem [resolvable:$true] %s1148
          %1151 = dma.hbm_to_vmem [thread:$0]  %s1146, 16, %s1149, %s1139
        $region72: #{tpu_custom_call.1} parent=55 // pred_fallthru
          _
        // Predicated region
        $region73: #{tpu_custom_call.1} parent=55 // pred_check
          %p1152 = pneg %p435
        $region74: #{tpu_custom_call.1} parent=55 // pred_check_branch
          %1154 = sbr.rel (%p1152) target = $region76
        $region75: #{tpu_custom_call.1} parent=55 // pred_region
          %p1155 = scmp.lt.s32.totalorder %s97, 1
          %s1156 = scalar_select %p1155, %s97, 1
          %s1157 = smul.addr %s1156, 4
          %s1158 = smul.addr %s1157, 8
          %s1159 = scalar_lea.vmem %s29, %s1158
        $region76: #{tpu_custom_call.1} parent=55 // pred_fallthru
          _
        // Predicated region
        $region77: #{tpu_custom_call.1} parent=55 // pred_check
          %p1160 = pneg %p461
        $region78: #{tpu_custom_call.1} parent=55 // pred_check_branch
          %1162 = sbr.rel (%p1160) target = $region80
        $region79: #{tpu_custom_call.1} parent=55 // pred_region
          %s1163 = sand.u32 %s89, 1
          %s1164 = scalar_lea.sflag [#allocation5], %s1163
          %s1165 = sand.u32 %s451, 1
          %s1166 = scalar_lea.vmem [#allocation24], %s1165
          %s1168 = ssub.s32 16, 16
          %1169 = vsyncadd %s1164, %s1168
          %s1170 = smul.addr %s97, 16
          %s1171 = scalar_lea.hbm %s31, %s1170
          %s1173 = sshll.u32 %s1166, 4
          %s1174 = int_to_ptr.vmem [resolvable:$true] %s1173
          %1176 = dma.hbm_to_vmem [thread:$0]  %s1171, 16, %s1174, %s1164
        $region80: #{tpu_custom_call.1} parent=55 // pred_fallthru
          _
        // Predicated region
        $region81: #{tpu_custom_call.1} parent=55 // pred_check
          %p1177 = pneg %p487
        $region82: #{tpu_custom_call.1} parent=55 // pred_check_branch
          %1179 = sbr.rel (%p1177) target = $region84
        $region83: #{tpu_custom_call.1} parent=55 // pred_region
          %p1180 = scmp.lt.s32.totalorder %s97, 1
          %s1181 = scalar_select %p1180, %s97, 1
          %s1182 = smul.addr %s1181, 4
          %s1183 = smul.addr %s1182, 8
          %s1184 = scalar_lea.vmem %s33, %s1183
        $region84: #{tpu_custom_call.1} parent=55 // pred_fallthru
          _
        // Predicated region
        $region85: #{tpu_custom_call.1} parent=55 // pred_check
          %p1185 = pneg %p513
        $region86: #{tpu_custom_call.1} parent=55 // pred_check_branch
          %1187 = sbr.rel (%p1185) target = $region88
        $region87: #{tpu_custom_call.1} parent=55 // pred_region
          %s1188 = sand.u32 %s89, 1
          %s1189 = scalar_lea.sflag [#allocation8], %s1188
          %s1190 = sand.u32 %s503, 1
          %s1191 = scalar_lea.vmem [#allocation25], %s1190
          %s1193 = ssub.s32 16, 16
          %1194 = vsyncadd %s1189, %s1193
          %s1195 = smul.addr %s97, 16
          %s1196 = scalar_lea.hbm %s35, %s1195
          %s1198 = sshll.u32 %s1191, 4
          %s1199 = int_to_ptr.vmem [resolvable:$true] %s1198
          %1201 = dma.hbm_to_vmem [thread:$0]  %s1196, 16, %s1199, %s1189
        $region88: #{tpu_custom_call.1} parent=55 // pred_fallthru
          _
        // Predicated region
        $region89: #{tpu_custom_call.1} parent=55 // pred_check
          %p1202 = pneg %p539
        $region90: #{tpu_custom_call.1} parent=55 // pred_check_branch
          %1204 = sbr.rel (%p1202) target = $region92
        $region91: #{tpu_custom_call.1} parent=55 // pred_region
          %s1205 = sand.u32 %s89, 1
          %s1206 = scalar_lea.sflag [#allocation5], %s1205
          %s1207 = sand.u32 %s529, 1
          %s1208 = scalar_lea.vmem [#allocation26], %s1207
          %s1210 = ssub.s32 16, 16
          %1211 = vsyncadd %s1206, %s1210
          %s1212 = smul.addr %s97, 16
          %s1213 = scalar_lea.hbm %s37, %s1212
          %s1215 = sshll.u32 %s1208, 4
          %s1216 = int_to_ptr.vmem [resolvable:$true] %s1215
          %1218 = dma.hbm_to_vmem [thread:$0]  %s1213, 16, %s1216, %s1206
        $region92: #{tpu_custom_call.1} parent=55 // pred_fallthru
          _
        // Predicated region
        $region93: #{tpu_custom_call.1} parent=55 // pred_check
          %p1219 = pneg %p565
        $region94: #{tpu_custom_call.1} parent=55 // pred_check_branch
          %1221 = sbr.rel (%p1219) target = $region96
        $region95: #{tpu_custom_call.1} parent=55 // pred_region
          %s1222 = sand.u32 %s89, 1
          %s1223 = scalar_lea.sflag [#allocation8], %s1222
          %s1224 = sand.u32 %s555, 1
          %s1225 = scalar_lea.vmem [#allocation27], %s1224
          %s1227 = ssub.s32 16, 16
          %1228 = vsyncadd %s1223, %s1227
          %s1229 = smul.addr %s97, 16
          %s1230 = scalar_lea.hbm %s39, %s1229
          %s1232 = sshll.u32 %s1225, 4
          %s1233 = int_to_ptr.vmem [resolvable:$true] %s1232
          %1235 = dma.hbm_to_vmem [thread:$0]  %s1230, 16, %s1233, %s1223
        $region96: #{tpu_custom_call.1} parent=55 // pred_fallthru
          _
        // Predicated region
        $region97: #{tpu_custom_call.1} parent=55 // pred_check
          %p1236 = pneg %p591
        $region98: #{tpu_custom_call.1} parent=55 // pred_check_branch
          %1238 = sbr.rel (%p1236) target = $region100
        $region99: #{tpu_custom_call.1} parent=55 // pred_region
          %p1239 = scmp.lt.s32.totalorder %s97, 1
          %s1240 = scalar_select %p1239, %s97, 1
          %s1241 = smul.addr %s1240, 4
          %s1242 = smul.addr %s1241, 8
          %s1243 = scalar_lea.vmem %s41, %s1242
        $region100: #{tpu_custom_call.1} parent=55 // pred_fallthru
          _
        // Predicated region
        $region101: #{tpu_custom_call.1} parent=55 // pred_check
          %p1244 = pneg %p617
        $region102: #{tpu_custom_call.1} parent=55 // pred_check_branch
          %1246 = sbr.rel (%p1244) target = $region104
        $region103: #{tpu_custom_call.1} parent=55 // pred_region
          %s1247 = sand.u32 %s89, 1
          %s1248 = scalar_lea.sflag [#allocation5], %s1247
          %s1249 = sand.u32 %s607, 1
          %s1250 = scalar_lea.vmem [#allocation28], %s1249
          %s1252 = ssub.s32 16, 16
          %1253 = vsyncadd %s1248, %s1252
          %s1254 = smul.addr %s97, 16
          %s1255 = scalar_lea.hbm %s43, %s1254
          %s1257 = sshll.u32 %s1250, 4
          %s1258 = int_to_ptr.vmem [resolvable:$true] %s1257
          %1260 = dma.hbm_to_vmem [thread:$0]  %s1255, 16, %s1258, %s1248
        $region104: #{tpu_custom_call.1} parent=55 // pred_fallthru
          _
        // Predicated region
        $region105: #{tpu_custom_call.1} parent=55 // pred_check
          %p1261 = pneg %p643
        $region106: #{tpu_custom_call.1} parent=55 // pred_check_branch
          %1263 = sbr.rel (%p1261) target = $region108
        $region107: #{tpu_custom_call.1} parent=55 // pred_region
          %p1264 = scmp.lt.s32.totalorder %s97, 1
          %s1265 = scalar_select %p1264, %s97, 1
          %s1266 = smul.addr %s1265, 4
          %s1267 = smul.addr %s1266, 8
          %s1268 = scalar_lea.vmem %s45, %s1267
        $region108: #{tpu_custom_call.1} parent=55 // pred_fallthru
          _
        // Predicated region
        $region109: #{tpu_custom_call.1} parent=55 // pred_check
          %p1269 = pneg %p669
        $region110: #{tpu_custom_call.1} parent=55 // pred_check_branch
          %1271 = sbr.rel (%p1269) target = $region112
        $region111: #{tpu_custom_call.1} parent=55 // pred_region
          %s1272 = sand.u32 %s89, 1
          %s1273 = scalar_lea.sflag [#allocation8], %s1272
          %s1274 = sand.u32 %s659, 1
          %s1275 = scalar_lea.vmem [#allocation29], %s1274
          %s1277 = ssub.s32 16, 16
          %1278 = vsyncadd %s1273, %s1277
          %s1279 = smul.addr %s97, 16
          %s1280 = scalar_lea.hbm %s47, %s1279
          %s1282 = sshll.u32 %s1275, 4
          %s1283 = int_to_ptr.vmem [resolvable:$true] %s1282
          %1285 = dma.hbm_to_vmem [thread:$0]  %s1280, 16, %s1283, %s1273
        $region112: #{tpu_custom_call.1} parent=55 // pred_fallthru
          _
        // Predicated region
        $region113: #{tpu_custom_call.1} parent=55 // pred_check
          %p1286 = pneg %p695
        $region114: #{tpu_custom_call.1} parent=55 // pred_check_branch
          %1288 = sbr.rel (%p1286) target = $region116
        $region115: #{tpu_custom_call.1} parent=55 // pred_region
          %p1289 = scmp.lt.s32.totalorder %s97, 1
          %s1290 = scalar_select %p1289, %s97, 1
          %s1291 = smul.addr %s1290, 4
          %s1292 = smul.addr %s1291, 8
          %s1293 = scalar_lea.vmem %s49, %s1292
        $region116: #{tpu_custom_call.1} parent=55 // pred_fallthru
          _
        // Predicated region
        $region117: #{tpu_custom_call.1} parent=55 // pred_check
          %p1294 = pneg %p721
        $region118: #{tpu_custom_call.1} parent=55 // pred_check_branch
          %1296 = sbr.rel (%p1294) target = $region120
        $region119: #{tpu_custom_call.1} parent=55 // pred_region
          %s1297 = sand.u32 %s89, 1
          %s1298 = scalar_lea.sflag [#allocation5], %s1297
          %s1299 = sand.u32 %s711, 1
          %s1300 = scalar_lea.vmem [#allocation30], %s1299
          %s1302 = ssub.s32 16, 16
          %1303 = vsyncadd %s1298, %s1302
          %s1304 = smul.addr %s97, 16
          %s1305 = scalar_lea.hbm %s51, %s1304
          %s1307 = sshll.u32 %s1300, 4
          %s1308 = int_to_ptr.vmem [resolvable:$true] %s1307
          %1310 = dma.hbm_to_vmem [thread:$0]  %s1305, 16, %s1308, %s1298
        $region120: #{tpu_custom_call.1} parent=55 // pred_fallthru
          _
        // Predicated region
        $region121: #{tpu_custom_call.1} parent=55 // pred_check
          %p1311 = pneg %p747
        $region122: #{tpu_custom_call.1} parent=55 // pred_check_branch
          %1313 = sbr.rel (%p1311) target = $region124
        $region123: #{tpu_custom_call.1} parent=55 // pred_region
          %s1314 = sand.u32 %s89, 1
          %s1315 = scalar_lea.sflag [#allocation8], %s1314
          %s1316 = sand.u32 %s737, 1
          %s1317 = scalar_lea.vmem [#allocation31], %s1316
          %s1319 = ssub.s32 16, 16
          %1320 = vsyncadd %s1315, %s1319
          %s1321 = smul.addr %s97, 16
          %s1322 = scalar_lea.hbm %s53, %s1321
          %s1324 = sshll.u32 %s1317, 4
          %s1325 = int_to_ptr.vmem [resolvable:$true] %s1324
          %1327 = dma.hbm_to_vmem [thread:$0]  %s1322, 16, %s1325, %s1315
        $region124: #{tpu_custom_call.1} parent=55 // pred_fallthru
          _
        // Predicated region
        $region125: #{tpu_custom_call.1} parent=55 // pred_check
          %p1328 = pneg %p773
        $region126: #{tpu_custom_call.1} parent=55 // pred_check_branch
          %1330 = sbr.rel (%p1328) target = $region128
        $region127: #{tpu_custom_call.1} parent=55 // pred_region
          %s1331 = sand.u32 %s89, 1
          %s1332 = scalar_lea.sflag [#allocation5], %s1331
          %s1333 = sand.u32 %s763, 1
          %s1334 = scalar_lea.vmem [#allocation32], %s1333
          %s1336 = ssub.s32 16, 16
          %1337 = vsyncadd %s1332, %s1336
          %s1338 = smul.addr %s97, 16
          %s1339 = scalar_lea.hbm %s55, %s1338
          %s1341 = sshll.u32 %s1334, 4
          %s1342 = int_to_ptr.vmem [resolvable:$true] %s1341
          %1344 = dma.hbm_to_vmem [thread:$0]  %s1339, 16, %s1342, %s1332
        $region128: #{tpu_custom_call.1} parent=55 // pred_fallthru
          _
        // Predicated region
        $region129: #{tpu_custom_call.1} parent=55 // pred_check
          %p1345 = pneg %p799
        $region130: #{tpu_custom_call.1} parent=55 // pred_check_branch
          %1347 = sbr.rel (%p1345) target = $region132
        $region131: #{tpu_custom_call.1} parent=55 // pred_region
          %p1348 = scmp.lt.s32.totalorder %s97, 1
          %s1349 = scalar_select %p1348, %s97, 1
          %s1350 = smul.addr %s1349, 4
          %s1351 = smul.addr %s1350, 8
          %s1352 = scalar_lea.vmem %s57, %s1351
        $region132: #{tpu_custom_call.1} parent=55 // pred_fallthru
          _
        // Predicated region
        $region133: #{tpu_custom_call.1} parent=55 // pred_check
          %p1353 = pneg %p825
        $region134: #{tpu_custom_call.1} parent=55 // pred_check_branch
          %1355 = sbr.rel (%p1353) target = $region136
        $region135: #{tpu_custom_call.1} parent=55 // pred_region
          %p1356 = scmp.lt.s32.totalorder %s97, 1
          %s1357 = scalar_select %p1356, %s97, 1
          %s1358 = scalar_lea.vmem %s59, %s1357
        $region136: #{tpu_custom_call.1} parent=55 // pred_fallthru
          _
        // Predicated region
        $region137: #{tpu_custom_call.1} parent=55 // pred_check
          %p1359 = pneg %p851
        $region138: #{tpu_custom_call.1} parent=55 // pred_check_branch
          %1361 = sbr.rel (%p1359) target = $region140
        $region139: #{tpu_custom_call.1} parent=55 // pred_region
          %p1362 = scmp.lt.s32.totalorder %s97, 1
          %s1363 = scalar_select %p1362, %s97, 1
          %s1364 = smul.addr %s1363, 8
          %s1365 = smul.addr %s1364, 8
          %s1366 = scalar_lea.vmem %s61, %s1365
        $region140: #{tpu_custom_call.1} parent=55 // pred_fallthru
          _
        // Predicated region
        $region141: #{tpu_custom_call.1} parent=55 // pred_check
          %p1367 = pneg %p877
        $region142: #{tpu_custom_call.1} parent=55 // pred_check_branch
          %1369 = sbr.rel (%p1367) target = $region144
        $region143: #{tpu_custom_call.1} parent=55 // pred_region
          %p1370 = scmp.lt.s32.totalorder %s97, 1
          %s1371 = scalar_select %p1370, %s97, 1
          %s1372 = scalar_lea.vmem %s63, %s1371
        $region144: #{tpu_custom_call.1} parent=55 // pred_fallthru
          _
        // Predicated region
        $region145: #{tpu_custom_call.1} parent=55 // pred_check
          %p1373 = pneg %p903
        $region146: #{tpu_custom_call.1} parent=55 // pred_check_branch
          %1375 = sbr.rel (%p1373) target = $region148
        $region147: #{tpu_custom_call.1} parent=55 // pred_region
          %p1376 = scmp.lt.s32.totalorder %s97, 1
          %s1377 = scalar_select %p1376, %s97, 1
          %s1378 = scalar_lea.vmem %s65, %s1377
        $region148: #{tpu_custom_call.1} parent=55 // pred_fallthru
          _
        // Predicated region
        $region149: #{tpu_custom_call.1} parent=55 // pred_check
          %p1379 = pneg %p929
        $region150: #{tpu_custom_call.1} parent=55 // pred_check_branch
          %1381 = sbr.rel (%p1379) target = $region152
        $region151: #{tpu_custom_call.1} parent=55 // pred_region
          %p1382 = scmp.lt.s32.totalorder %s97, 1
          %s1383 = scalar_select %p1382, %s97, 1
          %s1384 = scalar_lea.vmem %s67, %s1383
        $region152: #{tpu_custom_call.1} parent=55 // pred_fallthru
          _
      $region56: #{tpu_custom_call.1} parent=5 // pred_fallthru
        _
      %p1385 = scmp.le.s32.totalorder 1, %s89
      %p1386 = scmp.lt.s32.totalorder %s89, 5
      %p1387 = pnand %p1385, %p1386
      %p1388 = pneg %p1387
      // Predicated region
      $region153: #{tpu_custom_call.1} parent=5 // pred_check
        _
      $region154: #{tpu_custom_call.1} parent=5 // pred_check_branch
        %1390 = sbr.rel (%p1387) target = $region156
      $region155: #{tpu_custom_call.1} parent=5 // pred_region
        %s1391 = ssub.s32 %s89, 1
        %s1392 = sand.u32 %s94, 1
        %s1393 = scalar_lea.sflag [#allocation5], %s1392
        %s1394 = sand.u32 %s114, 1
        %s1395 = smul.addr %s1394, 8
        %s1396 = scalar_lea.vmem [#allocation4], %s1395
        // Predicated region
        $region157: #{tpu_custom_call.1} parent=155 // pred_check
          %p1397 = pneg %p127
        $region158: #{tpu_custom_call.1} parent=155 // pred_check_branch
          %1399 = sbr.rel (%p1397) target = $region160
        $region159: #{tpu_custom_call.1} parent=155 // pred_region
          %1400 = dma.done %s1393, 128
        $region160: #{tpu_custom_call.1} parent=155 // pred_fallthru
          _
        %s1401 = sand.u32 %s94, 1
        %s1402 = scalar_lea.sflag [#allocation8], %s1401
        %s1403 = sand.u32 %s140, 1
        %s1404 = smul.addr %s1403, 16
        %s1405 = scalar_lea.vmem [#allocation7], %s1404
        // Predicated region
        $region161: #{tpu_custom_call.1} parent=155 // pred_check
          %p1406 = pneg %p153
        $region162: #{tpu_custom_call.1} parent=155 // pred_check_branch
          %1408 = sbr.rel (%p1406) target = $region164
        $region163: #{tpu_custom_call.1} parent=155 // pred_region
          %1409 = dma.done %s1402, 256
        $region164: #{tpu_custom_call.1} parent=155 // pred_fallthru
          _
        %s1410 = sand.u32 %s94, 1
        %s1411 = scalar_lea.sflag [#allocation8], %s1410
        %s1412 = sand.u32 %s192, 1
        %s1413 = scalar_lea.vmem [#allocation9], %s1412
        // Predicated region
        $region165: #{tpu_custom_call.1} parent=155 // pred_check
          %p1414 = pneg %p205
        $region166: #{tpu_custom_call.1} parent=155 // pred_check_branch
          %1416 = sbr.rel (%p1414) target = $region168
        $region167: #{tpu_custom_call.1} parent=155 // pred_region
          %1417 = dma.done %s1411, 16
        $region168: #{tpu_custom_call.1} parent=155 // pred_fallthru
          _
        // Predicated region
        $region169: #{tpu_custom_call.1} parent=155 // pred_check
          %p1418 = pneg %p226
        $region170: #{tpu_custom_call.1} parent=155 // pred_check_branch
          %1420 = sbr.rel (%p1418) target = $region172
        $region171: #{tpu_custom_call.1} parent=155 // pred_region
          %1421 = dma.done [#allocation11], 128
        $region172: #{tpu_custom_call.1} parent=155 // pred_fallthru
          _
        // Predicated region
        $region173: #{tpu_custom_call.1} parent=155 // pred_check
          %p1422 = pneg %p247
        $region174: #{tpu_custom_call.1} parent=155 // pred_check_branch
          %1424 = sbr.rel (%p1422) target = $region176
        $region175: #{tpu_custom_call.1} parent=155 // pred_region
          %1425 = dma.done [#allocation11], 256
        $region176: #{tpu_custom_call.1} parent=155 // pred_fallthru
          _
        // Predicated region
        $region177: #{tpu_custom_call.1} parent=155 // pred_check
          %p1426 = pneg %p268
        $region178: #{tpu_custom_call.1} parent=155 // pred_check_branch
          %1428 = sbr.rel (%p1426) target = $region180
        $region179: #{tpu_custom_call.1} parent=155 // pred_region
          %1429 = dma.done [#allocation14], 16
        $region180: #{tpu_custom_call.1} parent=155 // pred_fallthru
          _
        // Predicated region
        $region181: #{tpu_custom_call.1} parent=155 // pred_check
          %p1430 = pneg %p289
        $region182: #{tpu_custom_call.1} parent=155 // pred_check_branch
          %1432 = sbr.rel (%p1430) target = $region184
        $region183: #{tpu_custom_call.1} parent=155 // pred_region
          %1433 = dma.done [#allocation14], 512
        $region184: #{tpu_custom_call.1} parent=155 // pred_fallthru
          _
        // Predicated region
        $region185: #{tpu_custom_call.1} parent=155 // pred_check
          %p1434 = pneg %p310
        $region186: #{tpu_custom_call.1} parent=155 // pred_check_branch
          %1436 = sbr.rel (%p1434) target = $region188
        $region187: #{tpu_custom_call.1} parent=155 // pred_region
          %1437 = dma.done [#allocation17], 16
        $region188: #{tpu_custom_call.1} parent=155 // pred_fallthru
          _
        // Predicated region
        $region189: #{tpu_custom_call.1} parent=155 // pred_check
          %p1438 = pneg %p352
        $region190: #{tpu_custom_call.1} parent=155 // pred_check_branch
          %1440 = sbr.rel (%p1438) target = $region192
        $region191: #{tpu_custom_call.1} parent=155 // pred_region
          %1441 = dma.done [#allocation17], 512
        $region192: #{tpu_custom_call.1} parent=155 // pred_fallthru
          _
        // Predicated region
        $region193: #{tpu_custom_call.1} parent=155 // pred_check
          %p1442 = pneg %p373
        $region194: #{tpu_custom_call.1} parent=155 // pred_check_branch
          %1444 = sbr.rel (%p1442) target = $region196
        $region195: #{tpu_custom_call.1} parent=155 // pred_region
          %1445 = dma.done [#allocation20], 16
        $region196: #{tpu_custom_call.1} parent=155 // pred_fallthru
          _
        // Predicated region
        $region197: #{tpu_custom_call.1} parent=155 // pred_check
          %p1446 = pneg %p394
        $region198: #{tpu_custom_call.1} parent=155 // pred_check_branch
          %1448 = sbr.rel (%p1446) target = $region200
        $region199: #{tpu_custom_call.1} parent=155 // pred_region
          %1449 = dma.done [#allocation20], 512
        $region200: #{tpu_custom_call.1} parent=155 // pred_fallthru
          _
        // Predicated region
        $region201: #{tpu_custom_call.1} parent=155 // pred_check
          %p1450 = pneg %p415
        $region202: #{tpu_custom_call.1} parent=155 // pred_check_branch
          %1452 = sbr.rel (%p1450) target = $region204
        $region203: #{tpu_custom_call.1} parent=155 // pred_region
          %1453 = dma.done [#allocation23], 16
        $region204: #{tpu_custom_call.1} parent=155 // pred_fallthru
          _
        %s1454 = sand.u32 %s94, 1
        %s1455 = scalar_lea.sflag [#allocation5], %s1454
        %s1456 = sand.u32 %s454, 1
        %s1457 = scalar_lea.vmem [#allocation24], %s1456
        // Predicated region
        $region205: #{tpu_custom_call.1} parent=155 // pred_check
          %p1458 = pneg %p467
        $region206: #{tpu_custom_call.1} parent=155 // pred_check_branch
          %1460 = sbr.rel (%p1458) target = $region208
        $region207: #{tpu_custom_call.1} parent=155 // pred_region
          %1461 = dma.done %s1455, 16
        $region208: #{tpu_custom_call.1} parent=155 // pred_fallthru
          _
        %s1462 = sand.u32 %s94, 1
        %s1463 = scalar_lea.sflag [#allocation8], %s1462
        %s1464 = sand.u32 %s506, 1
        %s1465 = scalar_lea.vmem [#allocation25], %s1464
        // Predicated region
        $region209: #{tpu_custom_call.1} parent=155 // pred_check
          %p1466 = pneg %p519
        $region210: #{tpu_custom_call.1} parent=155 // pred_check_branch
          %1468 = sbr.rel (%p1466) target = $region212
        $region211: #{tpu_custom_call.1} parent=155 // pred_region
          %1469 = dma.done %s1463, 16
        $region212: #{tpu_custom_call.1} parent=155 // pred_fallthru
          _
        %s1470 = sand.u32 %s94, 1
        %s1471 = scalar_lea.sflag [#allocation5], %s1470
        %s1472 = sand.u32 %s532, 1
        %s1473 = scalar_lea.vmem [#allocation26], %s1472
        // Predicated region
        $region213: #{tpu_custom_call.1} parent=155 // pred_check
          %p1474 = pneg %p545
        $region214: #{tpu_custom_call.1} parent=155 // pred_check_branch
          %1476 = sbr.rel (%p1474) target = $region216
        $region215: #{tpu_custom_call.1} parent=155 // pred_region
          %1477 = dma.done %s1471, 16
        $region216: #{tpu_custom_call.1} parent=155 // pred_fallthru
          _
        %s1478 = sand.u32 %s94, 1
        %s1479 = scalar_lea.sflag [#allocation8], %s1478
        %s1480 = sand.u32 %s558, 1
        %s1481 = scalar_lea.vmem [#allocation27], %s1480
        // Predicated region
        $region217: #{tpu_custom_call.1} parent=155 // pred_check
          %p1482 = pneg %p571
        $region218: #{tpu_custom_call.1} parent=155 // pred_check_branch
          %1484 = sbr.rel (%p1482) target = $region220
        $region219: #{tpu_custom_call.1} parent=155 // pred_region
          %1485 = dma.done %s1479, 16
        $region220: #{tpu_custom_call.1} parent=155 // pred_fallthru
          _
        %s1486 = sand.u32 %s94, 1
        %s1487 = scalar_lea.sflag [#allocation5], %s1486
        %s1488 = sand.u32 %s610, 1
        %s1489 = scalar_lea.vmem [#allocation28], %s1488
        // Predicated region
        $region221: #{tpu_custom_call.1} parent=155 // pred_check
          %p1490 = pneg %p623
        $region222: #{tpu_custom_call.1} parent=155 // pred_check_branch
          %1492 = sbr.rel (%p1490) target = $region224
        $region223: #{tpu_custom_call.1} parent=155 // pred_region
          %1493 = dma.done %s1487, 16
        $region224: #{tpu_custom_call.1} parent=155 // pred_fallthru
          _
        %s1494 = sand.u32 %s94, 1
        %s1495 = scalar_lea.sflag [#allocation8], %s1494
        %s1496 = sand.u32 %s662, 1
        %s1497 = scalar_lea.vmem [#allocation29], %s1496
        // Predicated region
        $region225: #{tpu_custom_call.1} parent=155 // pred_check
          %p1498 = pneg %p675
        $region226: #{tpu_custom_call.1} parent=155 // pred_check_branch
          %1500 = sbr.rel (%p1498) target = $region228
        $region227: #{tpu_custom_call.1} parent=155 // pred_region
          %1501 = dma.done %s1495, 16
        $region228: #{tpu_custom_call.1} parent=155 // pred_fallthru
          _
        %s1502 = sand.u32 %s94, 1
        %s1503 = scalar_lea.sflag [#allocation5], %s1502
        %s1504 = sand.u32 %s714, 1
        %s1505 = scalar_lea.vmem [#allocation30], %s1504
        // Predicated region
        $region229: #{tpu_custom_call.1} parent=155 // pred_check
          %p1506 = pneg %p727
        $region230: #{tpu_custom_call.1} parent=155 // pred_check_branch
          %1508 = sbr.rel (%p1506) target = $region232
        $region231: #{tpu_custom_call.1} parent=155 // pred_region
          %1509 = dma.done %s1503, 16
        $region232: #{tpu_custom_call.1} parent=155 // pred_fallthru
          _
        %s1510 = sand.u32 %s94, 1
        %s1511 = scalar_lea.sflag [#allocation8], %s1510
        %s1512 = sand.u32 %s740, 1
        %s1513 = scalar_lea.vmem [#allocation31], %s1512
        // Predicated region
        $region233: #{tpu_custom_call.1} parent=155 // pred_check
          %p1514 = pneg %p753
        $region234: #{tpu_custom_call.1} parent=155 // pred_check_branch
          %1516 = sbr.rel (%p1514) target = $region236
        $region235: #{tpu_custom_call.1} parent=155 // pred_region
          %1517 = dma.done %s1511, 16
        $region236: #{tpu_custom_call.1} parent=155 // pred_fallthru
          _
        %s1518 = sand.u32 %s94, 1
        %s1519 = scalar_lea.sflag [#allocation5], %s1518
        %s1520 = sand.u32 %s766, 1
        %s1521 = scalar_lea.vmem [#allocation32], %s1520
        // Predicated region
        $region237: #{tpu_custom_call.1} parent=155 // pred_check
          %p1522 = pneg %p779
        $region238: #{tpu_custom_call.1} parent=155 // pred_check_branch
          %1524 = sbr.rel (%p1522) target = $region240
        $region239: #{tpu_custom_call.1} parent=155 // pred_region
          %1525 = dma.done %s1519, 16
        $region240: #{tpu_custom_call.1} parent=155 // pred_fallthru
          _
        %s1526 = sand.u32 %s94, 1
        %s1527 = scalar_lea.sflag [#allocation5], %s1526
        %s1528 = sand.u32 %s114, 1
        %s1529 = smul.addr %s1528, 8
        %s1530 = scalar_lea.vmem [#allocation4], %s1529
        %p1531 = pneg %p127
        %p1532 = pneg %p124
        %s1533 = sand.u32 %s94, 1
        %s1534 = scalar_lea.sflag [#allocation8], %s1533
        %s1535 = sand.u32 %s140, 1
        %s1536 = smul.addr %s1535, 16
        %s1537 = scalar_lea.vmem [#allocation7], %s1536
        %p1538 = pneg %p153
        %p1539 = pneg %p150
        %p1540 = scmp.lt.s32.totalorder %s98, 1
        %s1541 = scalar_select %p1540, %s98, 1
        %s1542 = scalar_lea.vmem %s5, %s1541
        %p1543 = pneg %p179
        %p1544 = pneg %p176
        %s1545 = sand.u32 %s94, 1
        %s1546 = scalar_lea.sflag [#allocation8], %s1545
        %s1547 = sand.u32 %s192, 1
        %s1548 = scalar_lea.vmem [#allocation9], %s1547
        %p1549 = pneg %p205
        %p1550 = pneg %p202
        %p1551 = pneg %p226
        %p1552 = pneg %p223
        %p1553 = pneg %p247
        %p1554 = pneg %p244
        %p1555 = pneg %p268
        %p1556 = pneg %p265
        %p1557 = pneg %p289
        %p1558 = pneg %p286
        %p1559 = pneg %p310
        %p1560 = pneg %p307
        %p1561 = pneg %p331
        %p1562 = pneg %p328
        %p1563 = pneg %p352
        %p1564 = pneg %p349
        %p1565 = pneg %p373
        %p1566 = pneg %p370
        %p1567 = pneg %p394
        %p1568 = pneg %p391
        %p1569 = pneg %p415
        %p1570 = pneg %p412
        %p1571 = scmp.lt.s32.totalorder %s99, 1
        %s1572 = scalar_select %p1571, %s99, 1
        %s1573 = smul.addr %s1572, 4
        %s1574 = smul.addr %s1573, 8
        %s1575 = scalar_lea.vmem %s29, %s1574
        %p1576 = pneg %p441
        %p1577 = pneg %p438
        %s1578 = sand.u32 %s94, 1
        %s1579 = scalar_lea.sflag [#allocation5], %s1578
        %s1580 = sand.u32 %s454, 1
        %s1581 = scalar_lea.vmem [#allocation24], %s1580
        %p1582 = pneg %p467
        %p1583 = pneg %p464
        %p1584 = scmp.lt.s32.totalorder %s99, 1
        %s1585 = scalar_select %p1584, %s99, 1
        %s1586 = smul.addr %s1585, 4
        %s1587 = smul.addr %s1586, 8
        %s1588 = scalar_lea.vmem %s33, %s1587
        %p1589 = pneg %p493
        %p1590 = pneg %p490
        %s1591 = sand.u32 %s94, 1
        %s1592 = scalar_lea.sflag [#allocation8], %s1591
        %s1593 = sand.u32 %s506, 1
        %s1594 = scalar_lea.vmem [#allocation25], %s1593
        %p1595 = pneg %p519
        %p1596 = pneg %p516
        %s1597 = sand.u32 %s94, 1
        %s1598 = scalar_lea.sflag [#allocation5], %s1597
        %s1599 = sand.u32 %s532, 1
        %s1600 = scalar_lea.vmem [#allocation26], %s1599
        %p1601 = pneg %p545
        %p1602 = pneg %p542
        %s1603 = sand.u32 %s94, 1
        %s1604 = scalar_lea.sflag [#allocation8], %s1603
        %s1605 = sand.u32 %s558, 1
        %s1606 = scalar_lea.vmem [#allocation27], %s1605
        %p1607 = pneg %p571
        %p1608 = pneg %p568
        %p1609 = scmp.lt.s32.totalorder %s99, 1
        %s1610 = scalar_select %p1609, %s99, 1
        %s1611 = smul.addr %s1610, 4
        %s1612 = smul.addr %s1611, 8
        %s1613 = scalar_lea.vmem %s41, %s1612
        %p1614 = pneg %p597
        %p1615 = pneg %p594
        %s1616 = sand.u32 %s94, 1
        %s1617 = scalar_lea.sflag [#allocation5], %s1616
        %s1618 = sand.u32 %s610, 1
        %s1619 = scalar_lea.vmem [#allocation28], %s1618
        %p1620 = pneg %p623
        %p1621 = pneg %p620
        %p1622 = scmp.lt.s32.totalorder %s99, 1
        %s1623 = scalar_select %p1622, %s99, 1
        %s1624 = smul.addr %s1623, 4
        %s1625 = smul.addr %s1624, 8
        %s1626 = scalar_lea.vmem %s45, %s1625
        %p1627 = pneg %p649
        %p1628 = pneg %p646
        %s1629 = sand.u32 %s94, 1
        %s1630 = scalar_lea.sflag [#allocation8], %s1629
        %s1631 = sand.u32 %s662, 1
        %s1632 = scalar_lea.vmem [#allocation29], %s1631
        %p1633 = pneg %p675
        %p1634 = pneg %p672
        %p1635 = scmp.lt.s32.totalorder %s99, 1
        %s1636 = scalar_select %p1635, %s99, 1
        %s1637 = smul.addr %s1636, 4
        %s1638 = smul.addr %s1637, 8
        %s1639 = scalar_lea.vmem %s49, %s1638
        %p1640 = pneg %p701
        %p1641 = pneg %p698
        %s1642 = sand.u32 %s94, 1
        %s1643 = scalar_lea.sflag [#allocation5], %s1642
        %s1644 = sand.u32 %s714, 1
        %s1645 = scalar_lea.vmem [#allocation30], %s1644
        %p1646 = pneg %p727
        %p1647 = pneg %p724
        %s1648 = sand.u32 %s94, 1
        %s1649 = scalar_lea.sflag [#allocation8], %s1648
        %s1650 = sand.u32 %s740, 1
        %s1651 = scalar_lea.vmem [#allocation31], %s1650
        %p1652 = pneg %p753
        %p1653 = pneg %p750
        %s1654 = sand.u32 %s94, 1
        %s1655 = scalar_lea.sflag [#allocation5], %s1654
        %s1656 = sand.u32 %s766, 1
        %s1657 = scalar_lea.vmem [#allocation32], %s1656
        %p1658 = pneg %p779
        %p1659 = pneg %p776
        %p1660 = scmp.lt.s32.totalorder %s99, 1
        %s1661 = scalar_select %p1660, %s99, 1
        %s1662 = smul.addr %s1661, 4
        %s1663 = smul.addr %s1662, 8
        %s1664 = scalar_lea.vmem %s57, %s1663
        %p1665 = pneg %p805
        %p1666 = pneg %p802
        %p1667 = scmp.lt.s32.totalorder %s99, 1
        %s1668 = scalar_select %p1667, %s99, 1
        %s1669 = scalar_lea.vmem %s59, %s1668
        %p1670 = pneg %p831
        %p1671 = pneg %p828
        %p1672 = scmp.lt.s32.totalorder %s99, 1
        %s1673 = scalar_select %p1672, %s99, 1
        %s1674 = smul.addr %s1673, 8
        %s1675 = smul.addr %s1674, 8
        %s1676 = scalar_lea.vmem %s61, %s1675
        %p1677 = pneg %p857
        %p1678 = pneg %p854
        %p1679 = scmp.lt.s32.totalorder %s99, 1
        %s1680 = scalar_select %p1679, %s99, 1
        %s1681 = scalar_lea.vmem %s63, %s1680
        %p1682 = pneg %p883
        %p1683 = pneg %p880
        %p1684 = scmp.lt.s32.totalorder %s99, 1
        %s1685 = scalar_select %p1684, %s99, 1
        %s1686 = scalar_lea.vmem %s65, %s1685
        %p1687 = pneg %p909
        %p1688 = pneg %p906
        %p1689 = scmp.lt.s32.totalorder %s99, 1
        %s1690 = scalar_select %p1689, %s99, 1
        %s1691 = scalar_lea.vmem %s67, %s1690
        %p1692 = pneg %p935
        %p1693 = pneg %p932
        %p1694 = pneg %p961
        %p1695 = pneg %p958
        %s1696 = sand.u32 %s948, 1
        %s1697 = scalar_lea.sflag [#allocation6], %s1696
        %s1698 = sand.u32 %s948, 1
        %s1699 = smul.addr %s1698, 8
        %s1700 = scalar_lea.vmem [#allocation33], %s1699
        %p1701 = scmp.lt.s32.totalorder %s98, 1
        %s1702 = scalar_select %p1701, %s98, 1
        %s1703 = scalar_lea.vmem %s5, %s1702
        %p1704 = scmp.lt.s32.totalorder %s99, 1
        %s1705 = scalar_select %p1704, %s99, 1
        %s1706 = smul.addr %s1705, 4
        %s1707 = smul.addr %s1706, 8
        %s1708 = scalar_lea.vmem %s29, %s1707
        %p1709 = scmp.lt.s32.totalorder %s99, 1
        %s1710 = scalar_select %p1709, %s99, 1
        %s1711 = smul.addr %s1710, 4
        %s1712 = smul.addr %s1711, 8
        %s1713 = scalar_lea.vmem %s33, %s1712
        %p1714 = scmp.lt.s32.totalorder %s99, 1
        %s1715 = scalar_select %p1714, %s99, 1
        %s1716 = smul.addr %s1715, 4
        %s1717 = smul.addr %s1716, 8
        %s1718 = scalar_lea.vmem %s41, %s1717
        %p1719 = scmp.lt.s32.totalorder %s99, 1
        %s1720 = scalar_select %p1719, %s99, 1
        %s1721 = smul.addr %s1720, 4
        %s1722 = smul.addr %s1721, 8
        %s1723 = scalar_lea.vmem %s45, %s1722
        %p1724 = scmp.lt.s32.totalorder %s99, 1
        %s1725 = scalar_select %p1724, %s99, 1
        %s1726 = smul.addr %s1725, 4
        %s1727 = smul.addr %s1726, 8
        %s1728 = scalar_lea.vmem %s49, %s1727
        %p1729 = scmp.lt.s32.totalorder %s99, 1
        %s1730 = scalar_select %p1729, %s99, 1
        %s1731 = smul.addr %s1730, 4
        %s1732 = smul.addr %s1731, 8
        %s1733 = scalar_lea.vmem %s57, %s1732
        %p1734 = scmp.lt.s32.totalorder %s99, 1
        %s1735 = scalar_select %p1734, %s99, 1
        %s1736 = scalar_lea.vmem %s59, %s1735
        %p1737 = scmp.lt.s32.totalorder %s99, 1
        %s1738 = scalar_select %p1737, %s99, 1
        %s1739 = smul.addr %s1738, 8
        %s1740 = smul.addr %s1739, 8
        %s1741 = scalar_lea.vmem %s61, %s1740
        %p1742 = scmp.lt.s32.totalorder %s99, 1
        %s1743 = scalar_select %p1742, %s99, 1
        %s1744 = scalar_lea.vmem %s63, %s1743
        %p1745 = scmp.lt.s32.totalorder %s99, 1
        %s1746 = scalar_select %p1745, %s99, 1
        %s1747 = scalar_lea.vmem %s65, %s1746
        %p1748 = scmp.lt.s32.totalorder %s99, 1
        %s1749 = scalar_select %p1748, %s99, 1
        %s1750 = scalar_lea.vmem %s67, %s1749
        %p1751 = scmp.eq.s32.totalorder %s99, 0
        // Predicated region
        $region241: #{tpu_custom_call.1} parent=155 // pred_check
          %p1752 = pneg %p1751
        $region242: #{tpu_custom_call.1} parent=155 // pred_check_branch
          %1754 = sbr.rel (%p1752) target = $region244
        $region243: #{tpu_custom_call.1} parent=155 // pred_region
          %v1755 = vld [vmem:[%s1405] sm:$0xff]
          %v1756 = vld [vmem:[%s1405 + $0x8] sm:$0xff]
          %v1757 = vld [vmem:[#allocation12] sm:$0xff]
          %v1758 = vld [vmem:[#allocation12 + $0x8] sm:$0xff]
          %v1759 = vld [vmem:[#allocation13] sm:$0x1]
          %v1761 = vlaneseq
          %v1762 = vshrl.u32 %v1761, 7
          %v1763 = vsub.s32 0, %v1762
          %v1764 = vrot.slane %v1759, %v1763
          %vm1766 = vcmask 130048
          %v1768 = vsel %vm1766, %v1755, 0
          %v1771 = vsel %vm1766, %v1756, 0
          %1773 = vmatprep.subr.mxu0 0.0
          %1774 = vmatpush1.msra.mxu0 %v1757
          %1775 = vmatprep.subr.mxu0 0.0
          %1776 = vmatpush1.msra.mxu0 %v1758
          %1777 = vmatprep.subr.mxu0 0.0
          %1778 = vmatpush1.msra.mxu0 0.0
          %1779 = vmatprep.subr.mxu0 0.0
          %1780 = vmatpush1.msra.mxu0 0.0
          %1781 = vmatprep.subr.mxu0 0.0
          %1782 = vmatpush1.msra.mxu0 0.0
          %1783 = vmatprep.subr.mxu0 0.0
          %1784 = vmatpush1.msra.mxu0 0.0
          %1785 = vmatprep.subr.mxu0 0.0
          %1786 = vmatpush1.msra.mxu0 0.0
          %1787 = vmatprep.subr.mxu0 0.0
          %1788 = vmatpush1.msra.mxu0 0.0
          %1789 = vmatprep.subr.mxu0 0.0
          %1790 = vmatpush1.msra.mxu0 0.0
          %1791 = vmatprep.subr.mxu0 0.0
          %1792 = vmatpush1.msra.mxu0 0.0
          %1793 = vmatprep.subr.mxu0 0.0
          %1794 = vmatpush1.msra.mxu0 0.0
          %1795 = vmatprep.subr.mxu0 0.0
          %1796 = vmatpush1.msra.mxu0 0.0
          %1797 = vmatprep.subr.mxu0 0.0
          %1798 = vmatpush1.msra.mxu0 0.0
          %1799 = vmatprep.subr.mxu0 0.0
          %1800 = vmatpush1.msra.mxu0 0.0
          %1801 = vmatprep.subr.mxu0 0.0
          %1802 = vmatpush1.msra.mxu0 0.0
          %1803 = vmatprep.subr.mxu0 0.0
          %1804 = vmatpush1.msra.mxu0 0.0
          %1805 = vmatprep.subr.mxu0 0.0
          %1806 = vmatpush1.msra.mxu0 0.0
          %1807 = vmatprep.subr.mxu0 0.0
          %1808 = vmatpush1.msra.mxu0 0.0
          %1809 = vmatprep.subr.mxu0 0.0
          %1810 = vmatpush1.msra.mxu0 0.0
          %1811 = vmatprep.subr.mxu0 0.0
          %1812 = vmatpush1.msra.mxu0 0.0
          %1813 = vmatprep.subr.mxu0 0.0
          %1814 = vmatpush1.msra.mxu0 0.0
          %1815 = vmatprep.subr.mxu0 0.0
          %1816 = vmatpush1.msra.mxu0 0.0
          %1817 = vmatprep.subr.mxu0 0.0
          %1818 = vmatpush1.msra.mxu0 0.0
          %1819 = vmatprep.subr.mxu0 0.0
          %1820 = vmatpush1.msra.mxu0 0.0
          %1821 = vmatprep.subr.mxu0 0.0
          %1822 = vmatpush1.msra.mxu0 0.0
          %1823 = vmatprep.subr.mxu0 0.0
          %1824 = vmatpush1.msra.mxu0 0.0
          %1825 = vmatprep.subr.mxu0 0.0
          %1826 = vmatpush1.msra.mxu0 0.0
          %1827 = vmatprep.subr.mxu0 0.0
          %1828 = vmatpush1.msra.mxu0 0.0
          %1829 = vmatprep.subr.mxu0 0.0
          %1830 = vmatpush1.msra.mxu0 0.0
          %1831 = vmatprep.subr.mxu0 0.0
          %1832 = vmatpush1.msra.mxu0 0.0
          %1833 = vmatprep.subr.mxu0 0.0
          %1834 = vmatpush1.msra.mxu0 0.0
          %1835 = vmatprep.subr.mxu0 0.0
          %1836 = vmatpush1.msra.mxu0 0.0
          %1837 = vmatprep.mubr.f32.mxu0 0.0
          %1838 = vmatmul.mubr.f32.gmra.mrb[0].mxu0 %v1768
          %v1839 = vpop.f32.mrb[0].mxu0
          %v1840 = vadd.f32 %v1764, %v1839
          %v1841 = vpop.f32.mrb[0].mxu0
          %1842 = vmatprep.mubr.f32.mxu0 0.0
          %1843 = vmatmul.mubr.f32.gmra.mrb[0].mxu0 %v1771
          %v1844 = vpop.f32.mrb[0].mxu0
          %v1845 = vadd.f32 %v1764, %v1844
          %v1846 = vpop.f32.mrb[0].mxu0
          %1847 = vdwg.mxu0
          %v1848 = vmul.f32 %v1840, 0.5
          %v1849 = vmul.f32 %v1845, 0.5
          %v1850 = vmul.f32 %v1840, 0.044715
          %v1851 = vmul.f32 %v1845, 0.044715
          %v1852 = vmul.f32 %v1850, %v1840
          %v1853 = vmul.f32 %v1851, %v1845
          %v1854 = vmul.f32 %v1852, %v1840
          %v1855 = vmul.f32 %v1853, %v1845
          %v1856 = vadd.f32 %v1840, %v1854
          %v1857 = vadd.f32 %v1845, %v1855
          %v1858 = vmul.f32 %v1856, 0.7978846
          %v1859 = vmul.f32 %v1857, 0.7978846
          %v1860 = vtanh.pop %v1858
          %v1861 = vtanh.pop %v1859
          %v1862 = vadd.f32 %v1860, 1.0
          %v1863 = vadd.f32 %v1861, 1.0
          %v1864 = vmul.f32 %v1848, %v1862
          %v1865 = vmul.f32 %v1849, %v1863
          %v1866 = vld [vmem:[#allocation15] sm:$0xff]
          %v1867 = vld [vmem:[#allocation15 + $0x8] sm:$0xff]
          %v1868 = vld [vmem:[#allocation15 + $0x10] sm:$0xff]
          %v1869 = vld [vmem:[#allocation15 + $0x18] sm:$0xff]
          %v1870 = vld [vmem:[#allocation16] sm:$0x1]
          %v1872 = vlaneseq
          %v1873 = vshrl.u32 %v1872, 7
          %v1874 = vsub.s32 0, %v1873
          %v1875 = vrot.slane %v1870, %v1874
          %vm1877 = vcmask 261120
          %v1879 = vsel %vm1877, %v1864, 0
          %v1882 = vsel %vm1877, %v1865, 0
          %1884 = vmatprep.subr.mxu0 0.0
          %1885 = vmatpush1.msra.mxu0 %v1866
          %1886 = vmatprep.subr.mxu0 0.0
          %1887 = vmatpush1.msra.mxu0 %v1867
          %1888 = vmatprep.subr.mxu0 0.0
          %1889 = vmatpush1.msra.mxu0 %v1868
          %1890 = vmatprep.subr.mxu0 0.0
          %1891 = vmatpush1.msra.mxu0 %v1869
          %1892 = vmatprep.subr.mxu0 0.0
          %1893 = vmatpush1.msra.mxu0 0.0
          %1894 = vmatprep.subr.mxu0 0.0
          %1895 = vmatpush1.msra.mxu0 0.0
          %1896 = vmatprep.subr.mxu0 0.0
          %1897 = vmatpush1.msra.mxu0 0.0
          %1898 = vmatprep.subr.mxu0 0.0
          %1899 = vmatpush1.msra.mxu0 0.0
          %1900 = vmatprep.subr.mxu0 0.0
          %1901 = vmatpush1.msra.mxu0 0.0
          %1902 = vmatprep.subr.mxu0 0.0
          %1903 = vmatpush1.msra.mxu0 0.0
          %1904 = vmatprep.subr.mxu0 0.0
          %1905 = vmatpush1.msra.mxu0 0.0
          %1906 = vmatprep.subr.mxu0 0.0
          %1907 = vmatpush1.msra.mxu0 0.0
          %1908 = vmatprep.subr.mxu0 0.0
          %1909 = vmatpush1.msra.mxu0 0.0
          %1910 = vmatprep.subr.mxu0 0.0
          %1911 = vmatpush1.msra.mxu0 0.0
          %1912 = vmatprep.subr.mxu0 0.0
          %1913 = vmatpush1.msra.mxu0 0.0
          %1914 = vmatprep.subr.mxu0 0.0
          %1915 = vmatpush1.msra.mxu0 0.0
          %1916 = vmatprep.subr.mxu0 0.0
          %1917 = vmatpush1.msra.mxu0 0.0
          %1918 = vmatprep.subr.mxu0 0.0
          %1919 = vmatpush1.msra.mxu0 0.0
          %1920 = vmatprep.subr.mxu0 0.0
          %1921 = vmatpush1.msra.mxu0 0.0
          %1922 = vmatprep.subr.mxu0 0.0
          %1923 = vmatpush1.msra.mxu0 0.0
          %1924 = vmatprep.subr.mxu0 0.0
          %1925 = vmatpush1.msra.mxu0 0.0
          %1926 = vmatprep.subr.mxu0 0.0
          %1927 = vmatpush1.msra.mxu0 0.0
          %1928 = vmatprep.subr.mxu0 0.0
          %1929 = vmatpush1.msra.mxu0 0.0
          %1930 = vmatprep.subr.mxu0 0.0
          %1931 = vmatpush1.msra.mxu0 0.0
          %1932 = vmatprep.subr.mxu0 0.0
          %1933 = vmatpush1.msra.mxu0 0.0
          %1934 = vmatprep.subr.mxu0 0.0
          %1935 = vmatpush1.msra.mxu0 0.0
          %1936 = vmatprep.subr.mxu0 0.0
          %1937 = vmatpush1.msra.mxu0 0.0
          %1938 = vmatprep.subr.mxu0 0.0
          %1939 = vmatpush1.msra.mxu0 0.0
          %1940 = vmatprep.subr.mxu0 0.0
          %1941 = vmatpush1.msra.mxu0 0.0
          %1942 = vmatprep.subr.mxu0 0.0
          %1943 = vmatpush1.msra.mxu0 0.0
          %1944 = vmatprep.subr.mxu0 0.0
          %1945 = vmatpush1.msra.mxu0 0.0
          %1946 = vmatprep.subr.mxu0 0.0
          %1947 = vmatpush1.msra.mxu0 0.0
          %1948 = vmatprep.mubr.f32.mxu0 0.0
          %1949 = vmatmul.mubr.f32.gmra.mrb[0].mxu0 %v1879
          %v1950 = vpop.f32.mrb[0].mxu0
          %v1951 = vadd.f32 %v1875, %v1950
          %v1952 = vpop.f32.mrb[0].mxu0
          %1953 = vmatprep.mubr.f32.mxu0 0.0
          %1954 = vmatmul.mubr.f32.gmra.mrb[0].mxu0 %v1882
          %v1955 = vpop.f32.mrb[0].mxu0
          %v1956 = vadd.f32 %v1875, %v1955
          %v1957 = vpop.f32.mrb[0].mxu0
          %1958 = vdwg.mxu0
          %1959 = vst.msk [vmem:[#allocation3] sm:$0xff] %vm1877, %v1951
          %1960 = vst.msk [vmem:[#allocation3 + $0x8] sm:$0xff] %vm1877, %v1956
          %v1961 = vld [vmem:[%s1396] sm:$0xff]
          %1962 = vst.msk [vmem:[#allocation2] sm:$0xff] %vm1877, %v1961
        $region244: #{tpu_custom_call.1} parent=155 // pred_fallthru
          _
        %v1963 = vld [vmem:[#allocation2] sm:$0xff]
        %v1964 = vld [vmem:[#allocation3] sm:$0xff]
        %v1965 = vld [vmem:[#allocation3 + $0x8] sm:$0xff]
        %v1966 = vld [vmem:[%s1708] sm:$0xff]
        %v1967 = vld [vmem:[%s1708 + $0x8] sm:$0xff]
        %v1968 = vld [vmem:[%s1708 + $0x10] sm:$0xff]
        %v1969 = vld [vmem:[%s1708 + $0x18] sm:$0xff]
        %v1970 = vld [vmem:[%s1457] sm:$0x1]
        %v1972 = vlaneseq
        %v1973 = vshrl.u32 %v1972, 7
        %v1974 = vsub.s32 0, %v1973
        %v1975 = vrot.slane %v1970, %v1974
        %vm1977 = vcmask 261120
        %v1979 = vsel %vm1977, %v1963, 0
        %1981 = vmatprep.subr.mxu0 0.0
        %1982 = vmatpush1.msra.mxu0 %v1966
        %1983 = vmatprep.subr.mxu0 0.0
        %1984 = vmatpush1.msra.mxu0 %v1967
        %1985 = vmatprep.subr.mxu0 0.0
        %1986 = vmatpush1.msra.mxu0 %v1968
        %1987 = vmatprep.subr.mxu0 0.0
        %1988 = vmatpush1.msra.mxu0 %v1969
        %1989 = vmatprep.subr.mxu0 0.0
        %1990 = vmatpush1.msra.mxu0 0.0
        %1991 = vmatprep.subr.mxu0 0.0
        %1992 = vmatpush1.msra.mxu0 0.0
        %1993 = vmatprep.subr.mxu0 0.0
        %1994 = vmatpush1.msra.mxu0 0.0
        %1995 = vmatprep.subr.mxu0 0.0
        %1996 = vmatpush1.msra.mxu0 0.0
        %1997 = vmatprep.subr.mxu0 0.0
        %1998 = vmatpush1.msra.mxu0 0.0
        %1999 = vmatprep.subr.mxu0 0.0
        %2000 = vmatpush1.msra.mxu0 0.0
        %2001 = vmatprep.subr.mxu0 0.0
        %2002 = vmatpush1.msra.mxu0 0.0
        %2003 = vmatprep.subr.mxu0 0.0
        %2004 = vmatpush1.msra.mxu0 0.0
        %2005 = vmatprep.subr.mxu0 0.0
        %2006 = vmatpush1.msra.mxu0 0.0
        %2007 = vmatprep.subr.mxu0 0.0
        %2008 = vmatpush1.msra.mxu0 0.0
        %2009 = vmatprep.subr.mxu0 0.0
        %2010 = vmatpush1.msra.mxu0 0.0
        %2011 = vmatprep.subr.mxu0 0.0
        %2012 = vmatpush1.msra.mxu0 0.0
        %2013 = vmatprep.subr.mxu0 0.0
        %2014 = vmatpush1.msra.mxu0 0.0
        %2015 = vmatprep.subr.mxu0 0.0
        %2016 = vmatpush1.msra.mxu0 0.0
        %2017 = vmatprep.subr.mxu0 0.0
        %2018 = vmatpush1.msra.mxu0 0.0
        %2019 = vmatprep.subr.mxu0 0.0
        %2020 = vmatpush1.msra.mxu0 0.0
        %2021 = vmatprep.subr.mxu0 0.0
        %2022 = vmatpush1.msra.mxu0 0.0
        %2023 = vmatprep.subr.mxu0 0.0
        %2024 = vmatpush1.msra.mxu0 0.0
        %2025 = vmatprep.subr.mxu0 0.0
        %2026 = vmatpush1.msra.mxu0 0.0
        %2027 = vmatprep.subr.mxu0 0.0
        %2028 = vmatpush1.msra.mxu0 0.0
        %2029 = vmatprep.subr.mxu0 0.0
        %2030 = vmatpush1.msra.mxu0 0.0
        %2031 = vmatprep.subr.mxu0 0.0
        %2032 = vmatpush1.msra.mxu0 0.0
        %2033 = vmatprep.subr.mxu0 0.0
        %2034 = vmatpush1.msra.mxu0 0.0
        %2035 = vmatprep.subr.mxu0 0.0
        %2036 = vmatpush1.msra.mxu0 0.0
        %2037 = vmatprep.subr.mxu0 0.0
        %2038 = vmatpush1.msra.mxu0 0.0
        %2039 = vmatprep.subr.mxu0 0.0
        %2040 = vmatpush1.msra.mxu0 0.0
        %2041 = vmatprep.subr.mxu0 0.0
        %2042 = vmatpush1.msra.mxu0 0.0
        %2043 = vmatprep.subr.mxu0 0.0
        %2044 = vmatpush1.msra.mxu0 0.0
        %2045 = vmatprep.mubr.f32.mxu0 0.0
        %2046 = vmatmul.mubr.f32.gmra.mrb[0].mxu0 %v1979
        %v2047 = vpop.f32.mrb[0].mxu0
        %v2048 = vadd.f32 %v1975, %v2047
        %v2049 = vpop.f32.mrb[0].mxu0
        %2050 = vdwg.mxu0
        %v2051 = vld [vmem:[#allocation10] sm:$0xff]
        %v2052 = vld [vmem:[%s1703] sm:$0x1]
        %v2054 = vlaneseq
        %v2055 = vshrl.u32 %v2054, 7
        %v2056 = vsub.s32 0, %v2055
        %v2057 = vrot.slane %v2052, %v2056
        %v2059 = vadd.f32 %v2051, %v2057
        %v2060 = vld [vmem:[%s1713] sm:$0xff]
        %v2061 = vld [vmem:[%s1713 + $0x8] sm:$0xff]
        %v2062 = vld [vmem:[%s1713 + $0x10] sm:$0xff]
        %v2063 = vld [vmem:[%s1713 + $0x18] sm:$0xff]
        %2065 = vrot.lane.b32.xlu0 %v2048, 96
        %v2066 = vpop.permute.xlu0 %2065
        %vm2067 = vcmask 64512
        %v2068 = vsel %vm2067, %v2048, 0
        %v2070 = vsel %vm2067, %v2066, 0
        %2072 = vmatprep.subr.mxu0 0.0
        %2073 = vmatpush1.xpose.msra.mxu0 %v2070
        %2074 = vmatprep.subr.mxu0 0.0
        %2075 = vmatpush1.xpose.msra.mxu0 0.0
        %2076 = vmatprep.subr.mxu0 0.0
        %2077 = vmatpush1.xpose.msra.mxu0 0.0
        %2078 = vmatprep.subr.mxu0 0.0
        %2079 = vmatpush1.xpose.msra.mxu0 0.0
        %2080 = vmatprep.subr.mxu0 0.0
        %2081 = vmatpush1.xpose.msra.mxu0 0.0
        %2082 = vmatprep.subr.mxu0 0.0
        %2083 = vmatpush1.xpose.msra.mxu0 0.0
        %2084 = vmatprep.subr.mxu0 0.0
        %2085 = vmatpush1.xpose.msra.mxu0 0.0
        %2086 = vmatprep.subr.mxu0 0.0
        %2087 = vmatpush1.xpose.msra.mxu0 0.0
        %2088 = vmatprep.subr.mxu0 0.0
        %2089 = vmatpush1.xpose.msra.mxu0 0.0
        %2090 = vmatprep.subr.mxu0 0.0
        %2091 = vmatpush1.xpose.msra.mxu0 0.0
        %2092 = vmatprep.subr.mxu0 0.0
        %2093 = vmatpush1.xpose.msra.mxu0 0.0
        %2094 = vmatprep.subr.mxu0 0.0
        %2095 = vmatpush1.xpose.msra.mxu0 0.0
        %2096 = vmatprep.subr.mxu0 0.0
        %2097 = vmatpush1.xpose.msra.mxu0 0.0
        %2098 = vmatprep.subr.mxu0 0.0
        %2099 = vmatpush1.xpose.msra.mxu0 0.0
        %2100 = vmatprep.subr.mxu0 0.0
        %2101 = vmatpush1.xpose.msra.mxu0 0.0
        %2102 = vmatprep.subr.mxu0 0.0
        %2103 = vmatpush1.xpose.msra.mxu0 0.0
        %2104 = vmatprep.subr.mxu0 0.0
        %2105 = vmatpush1.xpose.msra.mxu0 0.0
        %2106 = vmatprep.subr.mxu0 0.0
        %2107 = vmatpush1.xpose.msra.mxu0 0.0
        %2108 = vmatprep.subr.mxu0 0.0
        %2109 = vmatpush1.xpose.msra.mxu0 0.0
        %2110 = vmatprep.subr.mxu0 0.0
        %2111 = vmatpush1.xpose.msra.mxu0 0.0
        %2112 = vmatprep.subr.mxu0 0.0
        %2113 = vmatpush1.xpose.msra.mxu0 0.0
        %2114 = vmatprep.subr.mxu0 0.0
        %2115 = vmatpush1.xpose.msra.mxu0 0.0
        %2116 = vmatprep.subr.mxu0 0.0
        %2117 = vmatpush1.xpose.msra.mxu0 0.0
        %2118 = vmatprep.subr.mxu0 0.0
        %2119 = vmatpush1.xpose.msra.mxu0 0.0
        %2120 = vmatprep.subr.mxu0 0.0
        %2121 = vmatpush1.xpose.msra.mxu0 0.0
        %2122 = vmatprep.subr.mxu0 0.0
        %2123 = vmatpush1.xpose.msra.mxu0 0.0
        %2124 = vmatprep.subr.mxu0 0.0
        %2125 = vmatpush1.xpose.msra.mxu0 0.0
        %2126 = vmatprep.subr.mxu0 0.0
        %2127 = vmatpush1.xpose.msra.mxu0 0.0
        %2128 = vmatprep.subr.mxu0 0.0
        %2129 = vmatpush1.xpose.msra.mxu0 0.0
        %2130 = vmatprep.subr.mxu0 0.0
        %2131 = vmatpush1.xpose.msra.mxu0 0.0
        %2132 = vmatprep.subr.mxu0 0.0
        %2133 = vmatpush1.xpose.msra.mxu0 0.0
        %2134 = vmatprep.subr.mxu0 0.0
        %2135 = vmatpush1.xpose.msra.mxu0 0.0
        %2136 = vmatprep.mubr.f32.mxu0 0.0
        %2137 = vmatmul.mubr.f32.gmra.mrb[0].mxu0 %v2068
        %v2138 = vpop.f32.mrb[0].mxu0
        %v2139 = vadd.f32 0.0, %v2138
        %v2140 = vpop.f32.mrb[0].mxu0
        %2141 = vdwg.mxu0
        %v2142 = vmul.f32 %v2139, 0.35355338
        %v2143 = vadd.f32 %v2142, %v2059
        %v2144 = vsel %vm2067, %v2143, -inf
        %2145 = vmax.xlane.f32.xlu0 %v2144
        %v2146 = vpop.xlane.xlu0 %2145
        %v2147 = vsub.f32 %v2143, %v2146
        %v2148 = vmul.f32 %v2147, 1.442695
        %v2149 = vpow.pop %v2148
        %v2150 = vsel %vm2067, %v2149, 0.0
        %2151 = vadd.xlane.f32.xlu0 %v2150
        %v2152 = vpop.xlane.xlu0 %2151
        %v2153 = vrcp.pop %v2152
        %v2154 = vmul.f32 %v2149, %v2153
        %2155 = vrot.lane.b32.xlu0 %v2048, 64
        %v2156 = vpop.permute.xlu0 %2155
        %v2159 = vsel %vm2067, %v2154, 0
        %2161 = vmatprep.subr.mxu0 0.0
        %2162 = vmatpush1.msra.mxu0 %v2156
        %2163 = vmatprep.subr.mxu0 0.0
        %2164 = vmatpush1.msra.mxu0 0.0
        %2165 = vmatprep.subr.mxu0 0.0
        %2166 = vmatpush1.msra.mxu0 0.0
        %2167 = vmatprep.subr.mxu0 0.0
        %2168 = vmatpush1.msra.mxu0 0.0
        %2169 = vmatprep.subr.mxu0 0.0
        %2170 = vmatpush1.msra.mxu0 0.0
        %2171 = vmatprep.subr.mxu0 0.0
        %2172 = vmatpush1.msra.mxu0 0.0
        %2173 = vmatprep.subr.mxu0 0.0
        %2174 = vmatpush1.msra.mxu0 0.0
        %2175 = vmatprep.subr.mxu0 0.0
        %2176 = vmatpush1.msra.mxu0 0.0
        %2177 = vmatprep.subr.mxu0 0.0
        %2178 = vmatpush1.msra.mxu0 0.0
        %2179 = vmatprep.subr.mxu0 0.0
        %2180 = vmatpush1.msra.mxu0 0.0
        %2181 = vmatprep.subr.mxu0 0.0
        %2182 = vmatpush1.msra.mxu0 0.0
        %2183 = vmatprep.subr.mxu0 0.0
        %2184 = vmatpush1.msra.mxu0 0.0
        %2185 = vmatprep.subr.mxu0 0.0
        %2186 = vmatpush1.msra.mxu0 0.0
        %2187 = vmatprep.subr.mxu0 0.0
        %2188 = vmatpush1.msra.mxu0 0.0
        %2189 = vmatprep.subr.mxu0 0.0
        %2190 = vmatpush1.msra.mxu0 0.0
        %2191 = vmatprep.subr.mxu0 0.0
        %2192 = vmatpush1.msra.mxu0 0.0
        %2193 = vmatprep.subr.mxu0 0.0
        %2194 = vmatpush1.msra.mxu0 0.0
        %2195 = vmatprep.subr.mxu0 0.0
        %2196 = vmatpush1.msra.mxu0 0.0
        %2197 = vmatprep.subr.mxu0 0.0
        %2198 = vmatpush1.msra.mxu0 0.0
        %2199 = vmatprep.subr.mxu0 0.0
        %2200 = vmatpush1.msra.mxu0 0.0
        %2201 = vmatprep.subr.mxu0 0.0
        %2202 = vmatpush1.msra.mxu0 0.0
        %2203 = vmatprep.subr.mxu0 0.0
        %2204 = vmatpush1.msra.mxu0 0.0
        %2205 = vmatprep.subr.mxu0 0.0
        %2206 = vmatpush1.msra.mxu0 0.0
        %2207 = vmatprep.subr.mxu0 0.0
        %2208 = vmatpush1.msra.mxu0 0.0
        %2209 = vmatprep.subr.mxu0 0.0
        %2210 = vmatpush1.msra.mxu0 0.0
        %2211 = vmatprep.subr.mxu0 0.0
        %2212 = vmatpush1.msra.mxu0 0.0
        %2213 = vmatprep.subr.mxu0 0.0
        %2214 = vmatpush1.msra.mxu0 0.0
        %2215 = vmatprep.subr.mxu0 0.0
        %2216 = vmatpush1.msra.mxu0 0.0
        %2217 = vmatprep.subr.mxu0 0.0
        %2218 = vmatpush1.msra.mxu0 0.0
        %2219 = vmatprep.subr.mxu0 0.0
        %2220 = vmatpush1.msra.mxu0 0.0
        %2221 = vmatprep.subr.mxu0 0.0
        %2222 = vmatpush1.msra.mxu0 0.0
        %2223 = vmatprep.subr.mxu0 0.0
        %2224 = vmatpush1.msra.mxu0 0.0
        %2225 = vmatprep.mubr.f32.mxu0 0.0
        %2226 = vmatmul.mubr.f32.gmra.mrb[0].mxu0 %v2159
        %v2227 = vpop.f32.mrb[0].mxu0
        %v2228 = vadd.f32 0.0, %v2227
        %v2229 = vpop.f32.mrb[0].mxu0
        %2230 = vdwg.mxu0
        %2231 = vrot.lane.b32.xlu0 %v2048, 120
        %v2232 = vpop.permute.xlu0 %2231
        %2233 = vrot.lane.b32.xlu0 %v2048, 88
        %v2234 = vpop.permute.xlu0 %2233
        %v2235 = vsel %vm2067, %v2232, 0
        %v2237 = vsel %vm2067, %v2234, 0
        %2239 = vmatprep.subr.mxu0 0.0
        %2240 = vmatpush1.xpose.msra.mxu0 %v2237
        %2241 = vmatprep.subr.mxu0 0.0
        %2242 = vmatpush1.xpose.msra.mxu0 0.0
        %2243 = vmatprep.subr.mxu0 0.0
        %2244 = vmatpush1.xpose.msra.mxu0 0.0
        %2245 = vmatprep.subr.mxu0 0.0
        %2246 = vmatpush1.xpose.msra.mxu0 0.0
        %2247 = vmatprep.subr.mxu0 0.0
        %2248 = vmatpush1.xpose.msra.mxu0 0.0
        %2249 = vmatprep.subr.mxu0 0.0
        %2250 = vmatpush1.xpose.msra.mxu0 0.0
        %2251 = vmatprep.subr.mxu0 0.0
        %2252 = vmatpush1.xpose.msra.mxu0 0.0
        %2253 = vmatprep.subr.mxu0 0.0
        %2254 = vmatpush1.xpose.msra.mxu0 0.0
        %2255 = vmatprep.subr.mxu0 0.0
        %2256 = vmatpush1.xpose.msra.mxu0 0.0
        %2257 = vmatprep.subr.mxu0 0.0
        %2258 = vmatpush1.xpose.msra.mxu0 0.0
        %2259 = vmatprep.subr.mxu0 0.0
        %2260 = vmatpush1.xpose.msra.mxu0 0.0
        %2261 = vmatprep.subr.mxu0 0.0
        %2262 = vmatpush1.xpose.msra.mxu0 0.0
        %2263 = vmatprep.subr.mxu0 0.0
        %2264 = vmatpush1.xpose.msra.mxu0 0.0
        %2265 = vmatprep.subr.mxu0 0.0
        %2266 = vmatpush1.xpose.msra.mxu0 0.0
        %2267 = vmatprep.subr.mxu0 0.0
        %2268 = vmatpush1.xpose.msra.mxu0 0.0
        %2269 = vmatprep.subr.mxu0 0.0
        %2270 = vmatpush1.xpose.msra.mxu0 0.0
        %2271 = vmatprep.subr.mxu0 0.0
        %2272 = vmatpush1.xpose.msra.mxu0 0.0
        %2273 = vmatprep.subr.mxu0 0.0
        %2274 = vmatpush1.xpose.msra.mxu0 0.0
        %2275 = vmatprep.subr.mxu0 0.0
        %2276 = vmatpush1.xpose.msra.mxu0 0.0
        %2277 = vmatprep.subr.mxu0 0.0
        %2278 = vmatpush1.xpose.msra.mxu0 0.0
        %2279 = vmatprep.subr.mxu0 0.0
        %2280 = vmatpush1.xpose.msra.mxu0 0.0
        %2281 = vmatprep.subr.mxu0 0.0
        %2282 = vmatpush1.xpose.msra.mxu0 0.0
        %2283 = vmatprep.subr.mxu0 0.0
        %2284 = vmatpush1.xpose.msra.mxu0 0.0
        %2285 = vmatprep.subr.mxu0 0.0
        %2286 = vmatpush1.xpose.msra.mxu0 0.0
        %2287 = vmatprep.subr.mxu0 0.0
        %2288 = vmatpush1.xpose.msra.mxu0 0.0
        %2289 = vmatprep.subr.mxu0 0.0
        %2290 = vmatpush1.xpose.msra.mxu0 0.0
        %2291 = vmatprep.subr.mxu0 0.0
        %2292 = vmatpush1.xpose.msra.mxu0 0.0
        %2293 = vmatprep.subr.mxu0 0.0
        %2294 = vmatpush1.xpose.msra.mxu0 0.0
        %2295 = vmatprep.subr.mxu0 0.0
        %2296 = vmatpush1.xpose.msra.mxu0 0.0
        %2297 = vmatprep.subr.mxu0 0.0
        %2298 = vmatpush1.xpose.msra.mxu0 0.0
        %2299 = vmatprep.subr.mxu0 0.0
        %2300 = vmatpush1.xpose.msra.mxu0 0.0
        %2301 = vmatprep.subr.mxu0 0.0
        %2302 = vmatpush1.xpose.msra.mxu0 0.0
        %2303 = vmatprep.mubr.f32.mxu0 0.0
        %2304 = vmatmul.mubr.f32.gmra.mrb[0].mxu0 %v2235
        %v2305 = vpop.f32.mrb[0].mxu0
        %v2306 = vadd.f32 0.0, %v2305
        %v2307 = vpop.f32.mrb[0].mxu0
        %2308 = vdwg.mxu0
        %v2309 = vmul.f32 %v2306, 0.35355338
        %v2310 = vadd.f32 %v2309, %v2059
        %v2311 = vsel %vm2067, %v2310, -inf
        %2312 = vmax.xlane.f32.xlu0 %v2311
        %v2313 = vpop.xlane.xlu0 %2312
        %v2314 = vsub.f32 %v2310, %v2313
        %v2315 = vmul.f32 %v2314, 1.442695
        %v2316 = vpow.pop %v2315
        %v2317 = vsel %vm2067, %v2316, 0.0
        %2318 = vadd.xlane.f32.xlu0 %v2317
        %v2319 = vpop.xlane.xlu0 %2318
        %v2320 = vrcp.pop %v2319
        %v2321 = vmul.f32 %v2316, %v2320
        %2322 = vrot.lane.b32.xlu0 %v2048, 56
        %v2323 = vpop.permute.xlu0 %2322
        %v2326 = vsel %vm2067, %v2321, 0
        %2328 = vmatprep.subr.mxu0 0.0
        %2329 = vmatpush1.msra.mxu0 %v2323
        %2330 = vmatprep.subr.mxu0 0.0
        %2331 = vmatpush1.msra.mxu0 0.0
        %2332 = vmatprep.subr.mxu0 0.0
        %2333 = vmatpush1.msra.mxu0 0.0
        %2334 = vmatprep.subr.mxu0 0.0
        %2335 = vmatpush1.msra.mxu0 0.0
        %2336 = vmatprep.subr.mxu0 0.0
        %2337 = vmatpush1.msra.mxu0 0.0
        %2338 = vmatprep.subr.mxu0 0.0
        %2339 = vmatpush1.msra.mxu0 0.0
        %2340 = vmatprep.subr.mxu0 0.0
        %2341 = vmatpush1.msra.mxu0 0.0
        %2342 = vmatprep.subr.mxu0 0.0
        %2343 = vmatpush1.msra.mxu0 0.0
        %2344 = vmatprep.subr.mxu0 0.0
        %2345 = vmatpush1.msra.mxu0 0.0
        %2346 = vmatprep.subr.mxu0 0.0
        %2347 = vmatpush1.msra.mxu0 0.0
        %2348 = vmatprep.subr.mxu0 0.0
        %2349 = vmatpush1.msra.mxu0 0.0
        %2350 = vmatprep.subr.mxu0 0.0
        %2351 = vmatpush1.msra.mxu0 0.0
        %2352 = vmatprep.subr.mxu0 0.0
        %2353 = vmatpush1.msra.mxu0 0.0
        %2354 = vmatprep.subr.mxu0 0.0
        %2355 = vmatpush1.msra.mxu0 0.0
        %2356 = vmatprep.subr.mxu0 0.0
        %2357 = vmatpush1.msra.mxu0 0.0
        %2358 = vmatprep.subr.mxu0 0.0
        %2359 = vmatpush1.msra.mxu0 0.0
        %2360 = vmatprep.subr.mxu0 0.0
        %2361 = vmatpush1.msra.mxu0 0.0
        %2362 = vmatprep.subr.mxu0 0.0
        %2363 = vmatpush1.msra.mxu0 0.0
        %2364 = vmatprep.subr.mxu0 0.0
        %2365 = vmatpush1.msra.mxu0 0.0
        %2366 = vmatprep.subr.mxu0 0.0
        %2367 = vmatpush1.msra.mxu0 0.0
        %2368 = vmatprep.subr.mxu0 0.0
        %2369 = vmatpush1.msra.mxu0 0.0
        %2370 = vmatprep.subr.mxu0 0.0
        %2371 = vmatpush1.msra.mxu0 0.0
        %2372 = vmatprep.subr.mxu0 0.0
        %2373 = vmatpush1.msra.mxu0 0.0
        %2374 = vmatprep.subr.mxu0 0.0
        %2375 = vmatpush1.msra.mxu0 0.0
        %2376 = vmatprep.subr.mxu0 0.0
        %2377 = vmatpush1.msra.mxu0 0.0
        %2378 = vmatprep.subr.mxu0 0.0
        %2379 = vmatpush1.msra.mxu0 0.0
        %2380 = vmatprep.subr.mxu0 0.0
        %2381 = vmatpush1.msra.mxu0 0.0
        %2382 = vmatprep.subr.mxu0 0.0
        %2383 = vmatpush1.msra.mxu0 0.0
        %2384 = vmatprep.subr.mxu0 0.0
        %2385 = vmatpush1.msra.mxu0 0.0
        %2386 = vmatprep.subr.mxu0 0.0
        %2387 = vmatpush1.msra.mxu0 0.0
        %2388 = vmatprep.subr.mxu0 0.0
        %2389 = vmatpush1.msra.mxu0 0.0
        %2390 = vmatprep.subr.mxu0 0.0
        %2391 = vmatpush1.msra.mxu0 0.0
        %2392 = vmatprep.mubr.f32.mxu0 0.0
        %2393 = vmatmul.mubr.f32.gmra.mrb[0].mxu0 %v2326
        %v2394 = vpop.f32.mrb[0].mxu0
        %v2395 = vadd.f32 0.0, %v2394
        %v2396 = vpop.f32.mrb[0].mxu0
        %2397 = vdwg.mxu0
        %v2399 = vsel %vm2067, %v2395, 0
        %2401 = vmatprep.subr.mxu0 0.0
        %2402 = vmatpush1.msra.mxu0 %v2061
        %2403 = vmatprep.subr.mxu0 0.0
        %2404 = vmatpush1.msra.mxu0 0.0
        %2405 = vmatprep.subr.mxu0 0.0
        %2406 = vmatpush1.msra.mxu0 0.0
        %2407 = vmatprep.subr.mxu0 0.0
        %2408 = vmatpush1.msra.mxu0 0.0
        %2409 = vmatprep.subr.mxu0 0.0
        %2410 = vmatpush1.msra.mxu0 0.0
        %2411 = vmatprep.subr.mxu0 0.0
        %2412 = vmatpush1.msra.mxu0 0.0
        %2413 = vmatprep.subr.mxu0 0.0
        %2414 = vmatpush1.msra.mxu0 0.0
        %2415 = vmatprep.subr.mxu0 0.0
        %2416 = vmatpush1.msra.mxu0 0.0
        %2417 = vmatprep.subr.mxu0 0.0
        %2418 = vmatpush1.msra.mxu0 0.0
        %2419 = vmatprep.subr.mxu0 0.0
        %2420 = vmatpush1.msra.mxu0 0.0
        %2421 = vmatprep.subr.mxu0 0.0
        %2422 = vmatpush1.msra.mxu0 0.0
        %2423 = vmatprep.subr.mxu0 0.0
        %2424 = vmatpush1.msra.mxu0 0.0
        %2425 = vmatprep.subr.mxu0 0.0
        %2426 = vmatpush1.msra.mxu0 0.0
        %2427 = vmatprep.subr.mxu0 0.0
        %2428 = vmatpush1.msra.mxu0 0.0
        %2429 = vmatprep.subr.mxu0 0.0
        %2430 = vmatpush1.msra.mxu0 0.0
        %2431 = vmatprep.subr.mxu0 0.0
        %2432 = vmatpush1.msra.mxu0 0.0
        %2433 = vmatprep.subr.mxu0 0.0
        %2434 = vmatpush1.msra.mxu0 0.0
        %2435 = vmatprep.subr.mxu0 0.0
        %2436 = vmatpush1.msra.mxu0 0.0
        %2437 = vmatprep.subr.mxu0 0.0
        %2438 = vmatpush1.msra.mxu0 0.0
        %2439 = vmatprep.subr.mxu0 0.0
        %2440 = vmatpush1.msra.mxu0 0.0
        %2441 = vmatprep.subr.mxu0 0.0
        %2442 = vmatpush1.msra.mxu0 0.0
        %2443 = vmatprep.subr.mxu0 0.0
        %2444 = vmatpush1.msra.mxu0 0.0
        %2445 = vmatprep.subr.mxu0 0.0
        %2446 = vmatpush1.msra.mxu0 0.0
        %2447 = vmatprep.subr.mxu0 0.0
        %2448 = vmatpush1.msra.mxu0 0.0
        %2449 = vmatprep.subr.mxu0 0.0
        %2450 = vmatpush1.msra.mxu0 0.0
        %2451 = vmatprep.subr.mxu0 0.0
        %2452 = vmatpush1.msra.mxu0 0.0
        %2453 = vmatprep.subr.mxu0 0.0
        %2454 = vmatpush1.msra.mxu0 0.0
        %2455 = vmatprep.subr.mxu0 0.0
        %2456 = vmatpush1.msra.mxu0 0.0
        %2457 = vmatprep.subr.mxu0 0.0
        %2458 = vmatpush1.msra.mxu0 0.0
        %2459 = vmatprep.subr.mxu0 0.0
        %2460 = vmatpush1.msra.mxu0 0.0
        %2461 = vmatprep.subr.mxu0 0.0
        %2462 = vmatpush1.msra.mxu0 0.0
        %2463 = vmatprep.subr.mxu0 0.0
        %2464 = vmatpush1.msra.mxu0 0.0
        %2465 = vmatprep.mubr.f32.mxu0 0.0
        %2466 = vmatmul.mubr.f32.gmra.mrb[0].mxu0 %v2399
        %v2467 = vpop.f32.mrb[0].mxu0
        %v2468 = vadd.f32 0.0, %v2467
        %v2469 = vpop.f32.mrb[0].mxu0
        %2470 = vdwg.mxu0
        %v2472 = vsel %vm2067, %v2228, 0
        %2474 = vmatprep.subr.mxu0 0.0
        %2475 = vmatpush1.msra.mxu0 %v2060
        %2476 = vmatprep.subr.mxu0 0.0
        %2477 = vmatpush1.msra.mxu0 0.0
        %2478 = vmatprep.subr.mxu0 0.0
        %2479 = vmatpush1.msra.mxu0 0.0
        %2480 = vmatprep.subr.mxu0 0.0
        %2481 = vmatpush1.msra.mxu0 0.0
        %2482 = vmatprep.subr.mxu0 0.0
        %2483 = vmatpush1.msra.mxu0 0.0
        %2484 = vmatprep.subr.mxu0 0.0
        %2485 = vmatpush1.msra.mxu0 0.0
        %2486 = vmatprep.subr.mxu0 0.0
        %2487 = vmatpush1.msra.mxu0 0.0
        %2488 = vmatprep.subr.mxu0 0.0
        %2489 = vmatpush1.msra.mxu0 0.0
        %2490 = vmatprep.subr.mxu0 0.0
        %2491 = vmatpush1.msra.mxu0 0.0
        %2492 = vmatprep.subr.mxu0 0.0
        %2493 = vmatpush1.msra.mxu0 0.0
        %2494 = vmatprep.subr.mxu0 0.0
        %2495 = vmatpush1.msra.mxu0 0.0
        %2496 = vmatprep.subr.mxu0 0.0
        %2497 = vmatpush1.msra.mxu0 0.0
        %2498 = vmatprep.subr.mxu0 0.0
        %2499 = vmatpush1.msra.mxu0 0.0
        %2500 = vmatprep.subr.mxu0 0.0
        %2501 = vmatpush1.msra.mxu0 0.0
        %2502 = vmatprep.subr.mxu0 0.0
        %2503 = vmatpush1.msra.mxu0 0.0
        %2504 = vmatprep.subr.mxu0 0.0
        %2505 = vmatpush1.msra.mxu0 0.0
        %2506 = vmatprep.subr.mxu0 0.0
        %2507 = vmatpush1.msra.mxu0 0.0
        %2508 = vmatprep.subr.mxu0 0.0
        %2509 = vmatpush1.msra.mxu0 0.0
        %2510 = vmatprep.subr.mxu0 0.0
        %2511 = vmatpush1.msra.mxu0 0.0
        %2512 = vmatprep.subr.mxu0 0.0
        %2513 = vmatpush1.msra.mxu0 0.0
        %2514 = vmatprep.subr.mxu0 0.0
        %2515 = vmatpush1.msra.mxu0 0.0
        %2516 = vmatprep.subr.mxu0 0.0
        %2517 = vmatpush1.msra.mxu0 0.0
        %2518 = vmatprep.subr.mxu0 0.0
        %2519 = vmatpush1.msra.mxu0 0.0
        %2520 = vmatprep.subr.mxu0 0.0
        %2521 = vmatpush1.msra.mxu0 0.0
        %2522 = vmatprep.subr.mxu0 0.0
        %2523 = vmatpush1.msra.mxu0 0.0
        %2524 = vmatprep.subr.mxu0 0.0
        %2525 = vmatpush1.msra.mxu0 0.0
        %2526 = vmatprep.subr.mxu0 0.0
        %2527 = vmatpush1.msra.mxu0 0.0
        %2528 = vmatprep.subr.mxu0 0.0
        %2529 = vmatpush1.msra.mxu0 0.0
        %2530 = vmatprep.subr.mxu0 0.0
        %2531 = vmatpush1.msra.mxu0 0.0
        %2532 = vmatprep.subr.mxu0 0.0
        %2533 = vmatpush1.msra.mxu0 0.0
        %2534 = vmatprep.subr.mxu0 0.0
        %2535 = vmatpush1.msra.mxu0 0.0
        %2536 = vmatprep.subr.mxu0 0.0
        %2537 = vmatpush1.msra.mxu0 0.0
        %2538 = vmatprep.mubr.f32.mxu0 0.0
        %2539 = vmatmul.mubr.f32.gmra.mrb[0].mxu0 %v2472
        %v2540 = vpop.f32.mrb[0].mxu0
        %v2541 = vadd.f32 %v2468, %v2540
        %v2542 = vpop.f32.mrb[0].mxu0
        %2543 = vdwg.mxu0
        %2544 = vrot.lane.b32.xlu0 %v2048, 112
        %v2545 = vpop.permute.xlu0 %2544
        %2546 = vrot.lane.b32.xlu0 %v2048, 80
        %v2547 = vpop.permute.xlu0 %2546
        %v2548 = vsel %vm2067, %v2545, 0
        %v2550 = vsel %vm2067, %v2547, 0
        %2552 = vmatprep.subr.mxu0 0.0
        %2553 = vmatpush1.xpose.msra.mxu0 %v2550
        %2554 = vmatprep.subr.mxu0 0.0
        %2555 = vmatpush1.xpose.msra.mxu0 0.0
        %2556 = vmatprep.subr.mxu0 0.0
        %2557 = vmatpush1.xpose.msra.mxu0 0.0
        %2558 = vmatprep.subr.mxu0 0.0
        %2559 = vmatpush1.xpose.msra.mxu0 0.0
        %2560 = vmatprep.subr.mxu0 0.0
        %2561 = vmatpush1.xpose.msra.mxu0 0.0
        %2562 = vmatprep.subr.mxu0 0.0
        %2563 = vmatpush1.xpose.msra.mxu0 0.0
        %2564 = vmatprep.subr.mxu0 0.0
        %2565 = vmatpush1.xpose.msra.mxu0 0.0
        %2566 = vmatprep.subr.mxu0 0.0
        %2567 = vmatpush1.xpose.msra.mxu0 0.0
        %2568 = vmatprep.subr.mxu0 0.0
        %2569 = vmatpush1.xpose.msra.mxu0 0.0
        %2570 = vmatprep.subr.mxu0 0.0
        %2571 = vmatpush1.xpose.msra.mxu0 0.0
        %2572 = vmatprep.subr.mxu0 0.0
        %2573 = vmatpush1.xpose.msra.mxu0 0.0
        %2574 = vmatprep.subr.mxu0 0.0
        %2575 = vmatpush1.xpose.msra.mxu0 0.0
        %2576 = vmatprep.subr.mxu0 0.0
        %2577 = vmatpush1.xpose.msra.mxu0 0.0
        %2578 = vmatprep.subr.mxu0 0.0
        %2579 = vmatpush1.xpose.msra.mxu0 0.0
        %2580 = vmatprep.subr.mxu0 0.0
        %2581 = vmatpush1.xpose.msra.mxu0 0.0
        %2582 = vmatprep.subr.mxu0 0.0
        %2583 = vmatpush1.xpose.msra.mxu0 0.0
        %2584 = vmatprep.subr.mxu0 0.0
        %2585 = vmatpush1.xpose.msra.mxu0 0.0
        %2586 = vmatprep.subr.mxu0 0.0
        %2587 = vmatpush1.xpose.msra.mxu0 0.0
        %2588 = vmatprep.subr.mxu0 0.0
        %2589 = vmatpush1.xpose.msra.mxu0 0.0
        %2590 = vmatprep.subr.mxu0 0.0
        %2591 = vmatpush1.xpose.msra.mxu0 0.0
        %2592 = vmatprep.subr.mxu0 0.0
        %2593 = vmatpush1.xpose.msra.mxu0 0.0
        %2594 = vmatprep.subr.mxu0 0.0
        %2595 = vmatpush1.xpose.msra.mxu0 0.0
        %2596 = vmatprep.subr.mxu0 0.0
        %2597 = vmatpush1.xpose.msra.mxu0 0.0
        %2598 = vmatprep.subr.mxu0 0.0
        %2599 = vmatpush1.xpose.msra.mxu0 0.0
        %2600 = vmatprep.subr.mxu0 0.0
        %2601 = vmatpush1.xpose.msra.mxu0 0.0
        %2602 = vmatprep.subr.mxu0 0.0
        %2603 = vmatpush1.xpose.msra.mxu0 0.0
        %2604 = vmatprep.subr.mxu0 0.0
        %2605 = vmatpush1.xpose.msra.mxu0 0.0
        %2606 = vmatprep.subr.mxu0 0.0
        %2607 = vmatpush1.xpose.msra.mxu0 0.0
        %2608 = vmatprep.subr.mxu0 0.0
        %2609 = vmatpush1.xpose.msra.mxu0 0.0
        %2610 = vmatprep.subr.mxu0 0.0
        %2611 = vmatpush1.xpose.msra.mxu0 0.0
        %2612 = vmatprep.subr.mxu0 0.0
        %2613 = vmatpush1.xpose.msra.mxu0 0.0
        %2614 = vmatprep.subr.mxu0 0.0
        %2615 = vmatpush1.xpose.msra.mxu0 0.0
        %2616 = vmatprep.mubr.f32.mxu0 0.0
        %2617 = vmatmul.mubr.f32.gmra.mrb[0].mxu0 %v2548
        %v2618 = vpop.f32.mrb[0].mxu0
        %v2619 = vadd.f32 0.0, %v2618
        %v2620 = vpop.f32.mrb[0].mxu0
        %2621 = vdwg.mxu0
        %v2622 = vmul.f32 %v2619, 0.35355338
        %v2623 = vadd.f32 %v2622, %v2059
        %v2624 = vsel %vm2067, %v2623, -inf
        %2625 = vmax.xlane.f32.xlu0 %v2624
        %v2626 = vpop.xlane.xlu0 %2625
        %v2627 = vsub.f32 %v2623, %v2626
        %v2628 = vmul.f32 %v2627, 1.442695
        %v2629 = vpow.pop %v2628
        %v2630 = vsel %vm2067, %v2629, 0.0
        %2631 = vadd.xlane.f32.xlu0 %v2630
        %v2632 = vpop.xlane.xlu0 %2631
        %v2633 = vrcp.pop %v2632
        %v2634 = vmul.f32 %v2629, %v2633
        %2635 = vrot.lane.b32.xlu0 %v2048, 48
        %v2636 = vpop.permute.xlu0 %2635
        %v2639 = vsel %vm2067, %v2634, 0
        %2641 = vmatprep.subr.mxu0 0.0
        %2642 = vmatpush1.msra.mxu0 %v2636
        %2643 = vmatprep.subr.mxu0 0.0
        %2644 = vmatpush1.msra.mxu0 0.0
        %2645 = vmatprep.subr.mxu0 0.0
        %2646 = vmatpush1.msra.mxu0 0.0
        %2647 = vmatprep.subr.mxu0 0.0
        %2648 = vmatpush1.msra.mxu0 0.0
        %2649 = vmatprep.subr.mxu0 0.0
        %2650 = vmatpush1.msra.mxu0 0.0
        %2651 = vmatprep.subr.mxu0 0.0
        %2652 = vmatpush1.msra.mxu0 0.0
        %2653 = vmatprep.subr.mxu0 0.0
        %2654 = vmatpush1.msra.mxu0 0.0
        %2655 = vmatprep.subr.mxu0 0.0
        %2656 = vmatpush1.msra.mxu0 0.0
        %2657 = vmatprep.subr.mxu0 0.0
        %2658 = vmatpush1.msra.mxu0 0.0
        %2659 = vmatprep.subr.mxu0 0.0
        %2660 = vmatpush1.msra.mxu0 0.0
        %2661 = vmatprep.subr.mxu0 0.0
        %2662 = vmatpush1.msra.mxu0 0.0
        %2663 = vmatprep.subr.mxu0 0.0
        %2664 = vmatpush1.msra.mxu0 0.0
        %2665 = vmatprep.subr.mxu0 0.0
        %2666 = vmatpush1.msra.mxu0 0.0
        %2667 = vmatprep.subr.mxu0 0.0
        %2668 = vmatpush1.msra.mxu0 0.0
        %2669 = vmatprep.subr.mxu0 0.0
        %2670 = vmatpush1.msra.mxu0 0.0
        %2671 = vmatprep.subr.mxu0 0.0
        %2672 = vmatpush1.msra.mxu0 0.0
        %2673 = vmatprep.subr.mxu0 0.0
        %2674 = vmatpush1.msra.mxu0 0.0
        %2675 = vmatprep.subr.mxu0 0.0
        %2676 = vmatpush1.msra.mxu0 0.0
        %2677 = vmatprep.subr.mxu0 0.0
        %2678 = vmatpush1.msra.mxu0 0.0
        %2679 = vmatprep.subr.mxu0 0.0
        %2680 = vmatpush1.msra.mxu0 0.0
        %2681 = vmatprep.subr.mxu0 0.0
        %2682 = vmatpush1.msra.mxu0 0.0
        %2683 = vmatprep.subr.mxu0 0.0
        %2684 = vmatpush1.msra.mxu0 0.0
        %2685 = vmatprep.subr.mxu0 0.0
        %2686 = vmatpush1.msra.mxu0 0.0
        %2687 = vmatprep.subr.mxu0 0.0
        %2688 = vmatpush1.msra.mxu0 0.0
        %2689 = vmatprep.subr.mxu0 0.0
        %2690 = vmatpush1.msra.mxu0 0.0
        %2691 = vmatprep.subr.mxu0 0.0
        %2692 = vmatpush1.msra.mxu0 0.0
        %2693 = vmatprep.subr.mxu0 0.0
        %2694 = vmatpush1.msra.mxu0 0.0
        %2695 = vmatprep.subr.mxu0 0.0
        %2696 = vmatpush1.msra.mxu0 0.0
        %2697 = vmatprep.subr.mxu0 0.0
        %2698 = vmatpush1.msra.mxu0 0.0
        %2699 = vmatprep.subr.mxu0 0.0
        %2700 = vmatpush1.msra.mxu0 0.0
        %2701 = vmatprep.subr.mxu0 0.0
        %2702 = vmatpush1.msra.mxu0 0.0
        %2703 = vmatprep.subr.mxu0 0.0
        %2704 = vmatpush1.msra.mxu0 0.0
        %2705 = vmatprep.mubr.f32.mxu0 0.0
        %2706 = vmatmul.mubr.f32.gmra.mrb[0].mxu0 %v2639
        %v2707 = vpop.f32.mrb[0].mxu0
        %v2708 = vadd.f32 0.0, %v2707
        %v2709 = vpop.f32.mrb[0].mxu0
        %2710 = vdwg.mxu0
        %v2712 = vsel %vm2067, %v2708, 0
        %2714 = vmatprep.subr.mxu0 0.0
        %2715 = vmatpush1.msra.mxu0 %v2062
        %2716 = vmatprep.subr.mxu0 0.0
        %2717 = vmatpush1.msra.mxu0 0.0
        %2718 = vmatprep.subr.mxu0 0.0
        %2719 = vmatpush1.msra.mxu0 0.0
        %2720 = vmatprep.subr.mxu0 0.0
        %2721 = vmatpush1.msra.mxu0 0.0
        %2722 = vmatprep.subr.mxu0 0.0
        %2723 = vmatpush1.msra.mxu0 0.0
        %2724 = vmatprep.subr.mxu0 0.0
        %2725 = vmatpush1.msra.mxu0 0.0
        %2726 = vmatprep.subr.mxu0 0.0
        %2727 = vmatpush1.msra.mxu0 0.0
        %2728 = vmatprep.subr.mxu0 0.0
        %2729 = vmatpush1.msra.mxu0 0.0
        %2730 = vmatprep.subr.mxu0 0.0
        %2731 = vmatpush1.msra.mxu0 0.0
        %2732 = vmatprep.subr.mxu0 0.0
        %2733 = vmatpush1.msra.mxu0 0.0
        %2734 = vmatprep.subr.mxu0 0.0
        %2735 = vmatpush1.msra.mxu0 0.0
        %2736 = vmatprep.subr.mxu0 0.0
        %2737 = vmatpush1.msra.mxu0 0.0
        %2738 = vmatprep.subr.mxu0 0.0
        %2739 = vmatpush1.msra.mxu0 0.0
        %2740 = vmatprep.subr.mxu0 0.0
        %2741 = vmatpush1.msra.mxu0 0.0
        %2742 = vmatprep.subr.mxu0 0.0
        %2743 = vmatpush1.msra.mxu0 0.0
        %2744 = vmatprep.subr.mxu0 0.0
        %2745 = vmatpush1.msra.mxu0 0.0
        %2746 = vmatprep.subr.mxu0 0.0
        %2747 = vmatpush1.msra.mxu0 0.0
        %2748 = vmatprep.subr.mxu0 0.0
        %2749 = vmatpush1.msra.mxu0 0.0
        %2750 = vmatprep.subr.mxu0 0.0
        %2751 = vmatpush1.msra.mxu0 0.0
        %2752 = vmatprep.subr.mxu0 0.0
        %2753 = vmatpush1.msra.mxu0 0.0
        %2754 = vmatprep.subr.mxu0 0.0
        %2755 = vmatpush1.msra.mxu0 0.0
        %2756 = vmatprep.subr.mxu0 0.0
        %2757 = vmatpush1.msra.mxu0 0.0
        %2758 = vmatprep.subr.mxu0 0.0
        %2759 = vmatpush1.msra.mxu0 0.0
        %2760 = vmatprep.subr.mxu0 0.0
        %2761 = vmatpush1.msra.mxu0 0.0
        %2762 = vmatprep.subr.mxu0 0.0
        %2763 = vmatpush1.msra.mxu0 0.0
        %2764 = vmatprep.subr.mxu0 0.0
        %2765 = vmatpush1.msra.mxu0 0.0
        %2766 = vmatprep.subr.mxu0 0.0
        %2767 = vmatpush1.msra.mxu0 0.0
        %2768 = vmatprep.subr.mxu0 0.0
        %2769 = vmatpush1.msra.mxu0 0.0
        %2770 = vmatprep.subr.mxu0 0.0
        %2771 = vmatpush1.msra.mxu0 0.0
        %2772 = vmatprep.subr.mxu0 0.0
        %2773 = vmatpush1.msra.mxu0 0.0
        %2774 = vmatprep.subr.mxu0 0.0
        %2775 = vmatpush1.msra.mxu0 0.0
        %2776 = vmatprep.subr.mxu0 0.0
        %2777 = vmatpush1.msra.mxu0 0.0
        %2778 = vmatprep.mubr.f32.mxu0 0.0
        %2779 = vmatmul.mubr.f32.gmra.mrb[0].mxu0 %v2712
        %v2780 = vpop.f32.mrb[0].mxu0
        %v2781 = vadd.f32 0.0, %v2780
        %v2782 = vpop.f32.mrb[0].mxu0
        %2783 = vdwg.mxu0
        %v2784 = vadd.f32 %v2541, %v2781
        %2785 = vrot.lane.b32.xlu0 %v2048, 104
        %v2786 = vpop.permute.xlu0 %2785
        %2787 = vrot.lane.b32.xlu0 %v2048, 72
        %v2788 = vpop.permute.xlu0 %2787
        %v2789 = vsel %vm2067, %v2786, 0
        %v2791 = vsel %vm2067, %v2788, 0
        %2793 = vmatprep.subr.mxu0 0.0
        %2794 = vmatpush1.xpose.msra.mxu0 %v2791
        %2795 = vmatprep.subr.mxu0 0.0
        %2796 = vmatpush1.xpose.msra.mxu0 0.0
        %2797 = vmatprep.subr.mxu0 0.0
        %2798 = vmatpush1.xpose.msra.mxu0 0.0
        %2799 = vmatprep.subr.mxu0 0.0
        %2800 = vmatpush1.xpose.msra.mxu0 0.0
        %2801 = vmatprep.subr.mxu0 0.0
        %2802 = vmatpush1.xpose.msra.mxu0 0.0
        %2803 = vmatprep.subr.mxu0 0.0
        %2804 = vmatpush1.xpose.msra.mxu0 0.0
        %2805 = vmatprep.subr.mxu0 0.0
        %2806 = vmatpush1.xpose.msra.mxu0 0.0
        %2807 = vmatprep.subr.mxu0 0.0
        %2808 = vmatpush1.xpose.msra.mxu0 0.0
        %2809 = vmatprep.subr.mxu0 0.0
        %2810 = vmatpush1.xpose.msra.mxu0 0.0
        %2811 = vmatprep.subr.mxu0 0.0
        %2812 = vmatpush1.xpose.msra.mxu0 0.0
        %2813 = vmatprep.subr.mxu0 0.0
        %2814 = vmatpush1.xpose.msra.mxu0 0.0
        %2815 = vmatprep.subr.mxu0 0.0
        %2816 = vmatpush1.xpose.msra.mxu0 0.0
        %2817 = vmatprep.subr.mxu0 0.0
        %2818 = vmatpush1.xpose.msra.mxu0 0.0
        %2819 = vmatprep.subr.mxu0 0.0
        %2820 = vmatpush1.xpose.msra.mxu0 0.0
        %2821 = vmatprep.subr.mxu0 0.0
        %2822 = vmatpush1.xpose.msra.mxu0 0.0
        %2823 = vmatprep.subr.mxu0 0.0
        %2824 = vmatpush1.xpose.msra.mxu0 0.0
        %2825 = vmatprep.subr.mxu0 0.0
        %2826 = vmatpush1.xpose.msra.mxu0 0.0
        %2827 = vmatprep.subr.mxu0 0.0
        %2828 = vmatpush1.xpose.msra.mxu0 0.0
        %2829 = vmatprep.subr.mxu0 0.0
        %2830 = vmatpush1.xpose.msra.mxu0 0.0
        %2831 = vmatprep.subr.mxu0 0.0
        %2832 = vmatpush1.xpose.msra.mxu0 0.0
        %2833 = vmatprep.subr.mxu0 0.0
        %2834 = vmatpush1.xpose.msra.mxu0 0.0
        %2835 = vmatprep.subr.mxu0 0.0
        %2836 = vmatpush1.xpose.msra.mxu0 0.0
        %2837 = vmatprep.subr.mxu0 0.0
        %2838 = vmatpush1.xpose.msra.mxu0 0.0
        %2839 = vmatprep.subr.mxu0 0.0
        %2840 = vmatpush1.xpose.msra.mxu0 0.0
        %2841 = vmatprep.subr.mxu0 0.0
        %2842 = vmatpush1.xpose.msra.mxu0 0.0
        %2843 = vmatprep.subr.mxu0 0.0
        %2844 = vmatpush1.xpose.msra.mxu0 0.0
        %2845 = vmatprep.subr.mxu0 0.0
        %2846 = vmatpush1.xpose.msra.mxu0 0.0
        %2847 = vmatprep.subr.mxu0 0.0
        %2848 = vmatpush1.xpose.msra.mxu0 0.0
        %2849 = vmatprep.subr.mxu0 0.0
        %2850 = vmatpush1.xpose.msra.mxu0 0.0
        %2851 = vmatprep.subr.mxu0 0.0
        %2852 = vmatpush1.xpose.msra.mxu0 0.0
        %2853 = vmatprep.subr.mxu0 0.0
        %2854 = vmatpush1.xpose.msra.mxu0 0.0
        %2855 = vmatprep.subr.mxu0 0.0
        %2856 = vmatpush1.xpose.msra.mxu0 0.0
        %2857 = vmatprep.mubr.f32.mxu0 0.0
        %2858 = vmatmul.mubr.f32.gmra.mrb[0].mxu0 %v2789
        %v2859 = vpop.f32.mrb[0].mxu0
        %v2860 = vadd.f32 0.0, %v2859
        %v2861 = vpop.f32.mrb[0].mxu0
        %2862 = vdwg.mxu0
        %v2863 = vmul.f32 %v2860, 0.35355338
        %v2864 = vadd.f32 %v2863, %v2059
        %v2865 = vsel %vm2067, %v2864, -inf
        %2866 = vmax.xlane.f32.xlu0 %v2865
        %v2867 = vpop.xlane.xlu0 %2866
        %v2868 = vsub.f32 %v2864, %v2867
        %v2869 = vmul.f32 %v2868, 1.442695
        %v2870 = vpow.pop %v2869
        %v2871 = vsel %vm2067, %v2870, 0.0
        %2872 = vadd.xlane.f32.xlu0 %v2871
        %v2873 = vpop.xlane.xlu0 %2872
        %v2874 = vrcp.pop %v2873
        %v2875 = vmul.f32 %v2870, %v2874
        %2876 = vrot.lane.b32.xlu0 %v2048, 40
        %v2877 = vpop.permute.xlu0 %2876
        %v2880 = vsel %vm2067, %v2875, 0
        %2882 = vmatprep.subr.mxu0 0.0
        %2883 = vmatpush1.msra.mxu0 %v2877
        %2884 = vmatprep.subr.mxu0 0.0
        %2885 = vmatpush1.msra.mxu0 0.0
        %2886 = vmatprep.subr.mxu0 0.0
        %2887 = vmatpush1.msra.mxu0 0.0
        %2888 = vmatprep.subr.mxu0 0.0
        %2889 = vmatpush1.msra.mxu0 0.0
        %2890 = vmatprep.subr.mxu0 0.0
        %2891 = vmatpush1.msra.mxu0 0.0
        %2892 = vmatprep.subr.mxu0 0.0
        %2893 = vmatpush1.msra.mxu0 0.0
        %2894 = vmatprep.subr.mxu0 0.0
        %2895 = vmatpush1.msra.mxu0 0.0
        %2896 = vmatprep.subr.mxu0 0.0
        %2897 = vmatpush1.msra.mxu0 0.0
        %2898 = vmatprep.subr.mxu0 0.0
        %2899 = vmatpush1.msra.mxu0 0.0
        %2900 = vmatprep.subr.mxu0 0.0
        %2901 = vmatpush1.msra.mxu0 0.0
        %2902 = vmatprep.subr.mxu0 0.0
        %2903 = vmatpush1.msra.mxu0 0.0
        %2904 = vmatprep.subr.mxu0 0.0
        %2905 = vmatpush1.msra.mxu0 0.0
        %2906 = vmatprep.subr.mxu0 0.0
        %2907 = vmatpush1.msra.mxu0 0.0
        %2908 = vmatprep.subr.mxu0 0.0
        %2909 = vmatpush1.msra.mxu0 0.0
        %2910 = vmatprep.subr.mxu0 0.0
        %2911 = vmatpush1.msra.mxu0 0.0
        %2912 = vmatprep.subr.mxu0 0.0
        %2913 = vmatpush1.msra.mxu0 0.0
        %2914 = vmatprep.subr.mxu0 0.0
        %2915 = vmatpush1.msra.mxu0 0.0
        %2916 = vmatprep.subr.mxu0 0.0
        %2917 = vmatpush1.msra.mxu0 0.0
        %2918 = vmatprep.subr.mxu0 0.0
        %2919 = vmatpush1.msra.mxu0 0.0
        %2920 = vmatprep.subr.mxu0 0.0
        %2921 = vmatpush1.msra.mxu0 0.0
        %2922 = vmatprep.subr.mxu0 0.0
        %2923 = vmatpush1.msra.mxu0 0.0
        %2924 = vmatprep.subr.mxu0 0.0
        %2925 = vmatpush1.msra.mxu0 0.0
        %2926 = vmatprep.subr.mxu0 0.0
        %2927 = vmatpush1.msra.mxu0 0.0
        %2928 = vmatprep.subr.mxu0 0.0
        %2929 = vmatpush1.msra.mxu0 0.0
        %2930 = vmatprep.subr.mxu0 0.0
        %2931 = vmatpush1.msra.mxu0 0.0
        %2932 = vmatprep.subr.mxu0 0.0
        %2933 = vmatpush1.msra.mxu0 0.0
        %2934 = vmatprep.subr.mxu0 0.0
        %2935 = vmatpush1.msra.mxu0 0.0
        %2936 = vmatprep.subr.mxu0 0.0
        %2937 = vmatpush1.msra.mxu0 0.0
        %2938 = vmatprep.subr.mxu0 0.0
        %2939 = vmatpush1.msra.mxu0 0.0
        %2940 = vmatprep.subr.mxu0 0.0
        %2941 = vmatpush1.msra.mxu0 0.0
        %2942 = vmatprep.subr.mxu0 0.0
        %2943 = vmatpush1.msra.mxu0 0.0
        %2944 = vmatprep.subr.mxu0 0.0
        %2945 = vmatpush1.msra.mxu0 0.0
        %2946 = vmatprep.mubr.f32.mxu0 0.0
        %2947 = vmatmul.mubr.f32.gmra.mrb[0].mxu0 %v2880
        %v2948 = vpop.f32.mrb[0].mxu0
        %v2949 = vadd.f32 0.0, %v2948
        %v2950 = vpop.f32.mrb[0].mxu0
        %2951 = vdwg.mxu0
        %v2953 = vsel %vm2067, %v2949, 0
        %2955 = vmatprep.subr.mxu0 0.0
        %2956 = vmatpush1.msra.mxu0 %v2063
        %2957 = vmatprep.subr.mxu0 0.0
        %2958 = vmatpush1.msra.mxu0 0.0
        %2959 = vmatprep.subr.mxu0 0.0
        %2960 = vmatpush1.msra.mxu0 0.0
        %2961 = vmatprep.subr.mxu0 0.0
        %2962 = vmatpush1.msra.mxu0 0.0
        %2963 = vmatprep.subr.mxu0 0.0
        %2964 = vmatpush1.msra.mxu0 0.0
        %2965 = vmatprep.subr.mxu0 0.0
        %2966 = vmatpush1.msra.mxu0 0.0
        %2967 = vmatprep.subr.mxu0 0.0
        %2968 = vmatpush1.msra.mxu0 0.0
        %2969 = vmatprep.subr.mxu0 0.0
        %2970 = vmatpush1.msra.mxu0 0.0
        %2971 = vmatprep.subr.mxu0 0.0
        %2972 = vmatpush1.msra.mxu0 0.0
        %2973 = vmatprep.subr.mxu0 0.0
        %2974 = vmatpush1.msra.mxu0 0.0
        %2975 = vmatprep.subr.mxu0 0.0
        %2976 = vmatpush1.msra.mxu0 0.0
        %2977 = vmatprep.subr.mxu0 0.0
        %2978 = vmatpush1.msra.mxu0 0.0
        %2979 = vmatprep.subr.mxu0 0.0
        %2980 = vmatpush1.msra.mxu0 0.0
        %2981 = vmatprep.subr.mxu0 0.0
        %2982 = vmatpush1.msra.mxu0 0.0
        %2983 = vmatprep.subr.mxu0 0.0
        %2984 = vmatpush1.msra.mxu0 0.0
        %2985 = vmatprep.subr.mxu0 0.0
        %2986 = vmatpush1.msra.mxu0 0.0
        %2987 = vmatprep.subr.mxu0 0.0
        %2988 = vmatpush1.msra.mxu0 0.0
        %2989 = vmatprep.subr.mxu0 0.0
        %2990 = vmatpush1.msra.mxu0 0.0
        %2991 = vmatprep.subr.mxu0 0.0
        %2992 = vmatpush1.msra.mxu0 0.0
        %2993 = vmatprep.subr.mxu0 0.0
        %2994 = vmatpush1.msra.mxu0 0.0
        %2995 = vmatprep.subr.mxu0 0.0
        %2996 = vmatpush1.msra.mxu0 0.0
        %2997 = vmatprep.subr.mxu0 0.0
        %2998 = vmatpush1.msra.mxu0 0.0
        %2999 = vmatprep.subr.mxu0 0.0
        %3000 = vmatpush1.msra.mxu0 0.0
        %3001 = vmatprep.subr.mxu0 0.0
        %3002 = vmatpush1.msra.mxu0 0.0
        %3003 = vmatprep.subr.mxu0 0.0
        %3004 = vmatpush1.msra.mxu0 0.0
        %3005 = vmatprep.subr.mxu0 0.0
        %3006 = vmatpush1.msra.mxu0 0.0
        %3007 = vmatprep.subr.mxu0 0.0
        %3008 = vmatpush1.msra.mxu0 0.0
        %3009 = vmatprep.subr.mxu0 0.0
        %3010 = vmatpush1.msra.mxu0 0.0
        %3011 = vmatprep.subr.mxu0 0.0
        %3012 = vmatpush1.msra.mxu0 0.0
        %3013 = vmatprep.subr.mxu0 0.0
        %3014 = vmatpush1.msra.mxu0 0.0
        %3015 = vmatprep.subr.mxu0 0.0
        %3016 = vmatpush1.msra.mxu0 0.0
        %3017 = vmatprep.subr.mxu0 0.0
        %3018 = vmatpush1.msra.mxu0 0.0
        %3019 = vmatprep.mubr.f32.mxu0 0.0
        %3020 = vmatmul.mubr.f32.gmra.mrb[0].mxu0 %v2953
        %v3021 = vpop.f32.mrb[0].mxu0
        %v3022 = vadd.f32 0.0, %v3021
        %v3023 = vpop.f32.mrb[0].mxu0
        %3024 = vdwg.mxu0
        %v3025 = vadd.f32 %v2784, %v3022
        %v3026 = vld [vmem:[%s1465] sm:$0x1]
        %v3028 = vlaneseq
        %v3029 = vshrl.u32 %v3028, 7
        %v3030 = vsub.s32 0, %v3029
        %v3031 = vrot.slane %v3026, %v3030
        %v3033 = vadd.f32 %v3025, %v3031
        %v3034 = vadd.f32 %v1963, %v3033
        %v3035 = vld [vmem:[%s1473] sm:$0x1]
        %v3036 = vld [vmem:[%s1481] sm:$0x1]
        %v3037 = vsel %vm1977, %v3034, 0.0
        %3038 = vadd.xlane.f32.xlu0 %v3037
        %v3039 = vpop.xlane.xlu0 %3038
        %v3040 = vrcp.pop 32.0
        %v3041 = vmul.f32 %v3039, %v3040
        %v3042 = vsub.f32 %v3034, %v3041
        %v3043 = vmul.f32 %v3042, %v3042
        %v3044 = vsel %vm1977, %v3043, 0.0
        %3045 = vadd.xlane.f32.xlu0 %v3044
        %v3046 = vpop.xlane.xlu0 %3045
        %v3047 = vmul.f32 %v3046, %v3040
        %v3048 = vadd.f32 %v3047, 1e-05
        %v3049 = vrsqrt.pop %v3048
        %v3050 = vmul.f32 %v3042, %v3049
        %v3052 = vlaneseq
        %v3053 = vshrl.u32 %v3052, 7
        %v3054 = vsub.s32 0, %v3053
        %v3055 = vrot.slane %v3035, %v3054
        %v3057 = vmul.f32 %v3050, %v3055
        %v3059 = vlaneseq
        %v3060 = vshrl.u32 %v3059, 7
        %v3061 = vsub.s32 0, %v3060
        %v3062 = vrot.slane %v3036, %v3061
        %v3064 = vadd.f32 %v3057, %v3062
        %v3065 = vld [vmem:[%s1718] sm:$0xff]
        %v3066 = vld [vmem:[%s1718 + $0x8] sm:$0xff]
        %v3067 = vld [vmem:[%s1718 + $0x10] sm:$0xff]
        %v3068 = vld [vmem:[%s1718 + $0x18] sm:$0xff]
        %v3069 = vld [vmem:[%s1489] sm:$0x1]
        %v3071 = vlaneseq
        %v3072 = vshrl.u32 %v3071, 7
        %v3073 = vsub.s32 0, %v3072
        %v3074 = vrot.slane %v3069, %v3073
        %v3077 = vsel %vm1977, %v3064, 0
        %3079 = vmatprep.subr.mxu0 0.0
        %3080 = vmatpush1.msra.mxu0 %v3065
        %3081 = vmatprep.subr.mxu0 0.0
        %3082 = vmatpush1.msra.mxu0 %v3066
        %3083 = vmatprep.subr.mxu0 0.0
        %3084 = vmatpush1.msra.mxu0 %v3067
        %3085 = vmatprep.subr.mxu0 0.0
        %3086 = vmatpush1.msra.mxu0 %v3068
        %3087 = vmatprep.subr.mxu0 0.0
        %3088 = vmatpush1.msra.mxu0 0.0
        %3089 = vmatprep.subr.mxu0 0.0
        %3090 = vmatpush1.msra.mxu0 0.0
        %3091 = vmatprep.subr.mxu0 0.0
        %3092 = vmatpush1.msra.mxu0 0.0
        %3093 = vmatprep.subr.mxu0 0.0
        %3094 = vmatpush1.msra.mxu0 0.0
        %3095 = vmatprep.subr.mxu0 0.0
        %3096 = vmatpush1.msra.mxu0 0.0
        %3097 = vmatprep.subr.mxu0 0.0
        %3098 = vmatpush1.msra.mxu0 0.0
        %3099 = vmatprep.subr.mxu0 0.0
        %3100 = vmatpush1.msra.mxu0 0.0
        %3101 = vmatprep.subr.mxu0 0.0
        %3102 = vmatpush1.msra.mxu0 0.0
        %3103 = vmatprep.subr.mxu0 0.0
        %3104 = vmatpush1.msra.mxu0 0.0
        %3105 = vmatprep.subr.mxu0 0.0
        %3106 = vmatpush1.msra.mxu0 0.0
        %3107 = vmatprep.subr.mxu0 0.0
        %3108 = vmatpush1.msra.mxu0 0.0
        %3109 = vmatprep.subr.mxu0 0.0
        %3110 = vmatpush1.msra.mxu0 0.0
        %3111 = vmatprep.subr.mxu0 0.0
        %3112 = vmatpush1.msra.mxu0 0.0
        %3113 = vmatprep.subr.mxu0 0.0
        %3114 = vmatpush1.msra.mxu0 0.0
        %3115 = vmatprep.subr.mxu0 0.0
        %3116 = vmatpush1.msra.mxu0 0.0
        %3117 = vmatprep.subr.mxu0 0.0
        %3118 = vmatpush1.msra.mxu0 0.0
        %3119 = vmatprep.subr.mxu0 0.0
        %3120 = vmatpush1.msra.mxu0 0.0
        %3121 = vmatprep.subr.mxu0 0.0
        %3122 = vmatpush1.msra.mxu0 0.0
        %3123 = vmatprep.subr.mxu0 0.0
        %3124 = vmatpush1.msra.mxu0 0.0
        %3125 = vmatprep.subr.mxu0 0.0
        %3126 = vmatpush1.msra.mxu0 0.0
        %3127 = vmatprep.subr.mxu0 0.0
        %3128 = vmatpush1.msra.mxu0 0.0
        %3129 = vmatprep.subr.mxu0 0.0
        %3130 = vmatpush1.msra.mxu0 0.0
        %3131 = vmatprep.subr.mxu0 0.0
        %3132 = vmatpush1.msra.mxu0 0.0
        %3133 = vmatprep.subr.mxu0 0.0
        %3134 = vmatpush1.msra.mxu0 0.0
        %3135 = vmatprep.subr.mxu0 0.0
        %3136 = vmatpush1.msra.mxu0 0.0
        %3137 = vmatprep.subr.mxu0 0.0
        %3138 = vmatpush1.msra.mxu0 0.0
        %3139 = vmatprep.subr.mxu0 0.0
        %3140 = vmatpush1.msra.mxu0 0.0
        %3141 = vmatprep.subr.mxu0 0.0
        %3142 = vmatpush1.msra.mxu0 0.0
        %3143 = vmatprep.mubr.f32.mxu0 0.0
        %3144 = vmatmul.mubr.f32.gmra.mrb[0].mxu0 %v3077
        %v3145 = vpop.f32.mrb[0].mxu0
        %v3146 = vadd.f32 %v3074, %v3145
        %v3147 = vpop.f32.mrb[0].mxu0
        %3148 = vdwg.mxu0
        %v3149 = vld [vmem:[%s1723] sm:$0xff]
        %v3150 = vld [vmem:[%s1723 + $0x8] sm:$0xff]
        %v3151 = vld [vmem:[%s1723 + $0x10] sm:$0xff]
        %v3152 = vld [vmem:[%s1723 + $0x18] sm:$0xff]
        %v3153 = vld [vmem:[%s1497] sm:$0x1]
        %v3155 = vlaneseq
        %v3156 = vshrl.u32 %v3155, 7
        %v3157 = vsub.s32 0, %v3156
        %v3158 = vrot.slane %v3153, %v3157
        %v3161 = vsel %vm1977, %v1964, 0
        %v3164 = vsel %vm1977, %v1965, 0
        %3166 = vmatprep.subr.mxu0 0.0
        %3167 = vmatpush1.msra.mxu0 %v3149
        %3168 = vmatprep.subr.mxu0 0.0
        %3169 = vmatpush1.msra.mxu0 %v3150
        %3170 = vmatprep.subr.mxu0 0.0
        %3171 = vmatpush1.msra.mxu0 %v3151
        %3172 = vmatprep.subr.mxu0 0.0
        %3173 = vmatpush1.msra.mxu0 %v3152
        %3174 = vmatprep.subr.mxu0 0.0
        %3175 = vmatpush1.msra.mxu0 0.0
        %3176 = vmatprep.subr.mxu0 0.0
        %3177 = vmatpush1.msra.mxu0 0.0
        %3178 = vmatprep.subr.mxu0 0.0
        %3179 = vmatpush1.msra.mxu0 0.0
        %3180 = vmatprep.subr.mxu0 0.0
        %3181 = vmatpush1.msra.mxu0 0.0
        %3182 = vmatprep.subr.mxu0 0.0
        %3183 = vmatpush1.msra.mxu0 0.0
        %3184 = vmatprep.subr.mxu0 0.0
        %3185 = vmatpush1.msra.mxu0 0.0
        %3186 = vmatprep.subr.mxu0 0.0
        %3187 = vmatpush1.msra.mxu0 0.0
        %3188 = vmatprep.subr.mxu0 0.0
        %3189 = vmatpush1.msra.mxu0 0.0
        %3190 = vmatprep.subr.mxu0 0.0
        %3191 = vmatpush1.msra.mxu0 0.0
        %3192 = vmatprep.subr.mxu0 0.0
        %3193 = vmatpush1.msra.mxu0 0.0
        %3194 = vmatprep.subr.mxu0 0.0
        %3195 = vmatpush1.msra.mxu0 0.0
        %3196 = vmatprep.subr.mxu0 0.0
        %3197 = vmatpush1.msra.mxu0 0.0
        %3198 = vmatprep.subr.mxu0 0.0
        %3199 = vmatpush1.msra.mxu0 0.0
        %3200 = vmatprep.subr.mxu0 0.0
        %3201 = vmatpush1.msra.mxu0 0.0
        %3202 = vmatprep.subr.mxu0 0.0
        %3203 = vmatpush1.msra.mxu0 0.0
        %3204 = vmatprep.subr.mxu0 0.0
        %3205 = vmatpush1.msra.mxu0 0.0
        %3206 = vmatprep.subr.mxu0 0.0
        %3207 = vmatpush1.msra.mxu0 0.0
        %3208 = vmatprep.subr.mxu0 0.0
        %3209 = vmatpush1.msra.mxu0 0.0
        %3210 = vmatprep.subr.mxu0 0.0
        %3211 = vmatpush1.msra.mxu0 0.0
        %3212 = vmatprep.subr.mxu0 0.0
        %3213 = vmatpush1.msra.mxu0 0.0
        %3214 = vmatprep.subr.mxu0 0.0
        %3215 = vmatpush1.msra.mxu0 0.0
        %3216 = vmatprep.subr.mxu0 0.0
        %3217 = vmatpush1.msra.mxu0 0.0
        %3218 = vmatprep.subr.mxu0 0.0
        %3219 = vmatpush1.msra.mxu0 0.0
        %3220 = vmatprep.subr.mxu0 0.0
        %3221 = vmatpush1.msra.mxu0 0.0
        %3222 = vmatprep.subr.mxu0 0.0
        %3223 = vmatpush1.msra.mxu0 0.0
        %3224 = vmatprep.subr.mxu0 0.0
        %3225 = vmatpush1.msra.mxu0 0.0
        %3226 = vmatprep.subr.mxu0 0.0
        %3227 = vmatpush1.msra.mxu0 0.0
        %3228 = vmatprep.subr.mxu0 0.0
        %3229 = vmatpush1.msra.mxu0 0.0
        %3230 = vmatprep.mubr.f32.mxu0 0.0
        %3231 = vmatmul.mubr.f32.gmra.mrb[0].mxu0 %v3161
        %v3232 = vpop.f32.mrb[0].mxu0
        %v3233 = vadd.f32 %v3158, %v3232
        %v3234 = vpop.f32.mrb[0].mxu0
        %3235 = vmatprep.mubr.f32.mxu0 0.0
        %3236 = vmatmul.mubr.f32.gmra.mrb[0].mxu0 %v3164
        %v3237 = vpop.f32.mrb[0].mxu0
        %v3238 = vadd.f32 %v3158, %v3237
        %v3239 = vpop.f32.mrb[0].mxu0
        %3240 = vdwg.mxu0
        %v3241 = vld [vmem:[%s1728] sm:$0xff]
        %v3242 = vld [vmem:[%s1728 + $0x8] sm:$0xff]
        %v3243 = vld [vmem:[%s1728 + $0x10] sm:$0xff]
        %v3244 = vld [vmem:[%s1728 + $0x18] sm:$0xff]
        %v3245 = vld [vmem:[%s1413] sm:$0x1]
        %v3247 = vsel %vm2067, %v3146, 0
        %v3250 = vsel %vm2067, %v3233, 0
        %v3253 = vsel %vm2067, %v3238, 0
        %3255 = vmatprep.subr.mxu0 0.0
        %3256 = vmatpush1.xpose.msra.mxu0 %v3250
        %3257 = vmatprep.subr.mxu0 0.0
        %3258 = vmatpush1.xpose.msra.mxu0 %v3253
        %3259 = vmatprep.subr.mxu0 0.0
        %3260 = vmatpush1.xpose.msra.mxu0 0.0
        %3261 = vmatprep.subr.mxu0 0.0
        %3262 = vmatpush1.xpose.msra.mxu0 0.0
        %3263 = vmatprep.subr.mxu0 0.0
        %3264 = vmatpush1.xpose.msra.mxu0 0.0
        %3265 = vmatprep.subr.mxu0 0.0
        %3266 = vmatpush1.xpose.msra.mxu0 0.0
        %3267 = vmatprep.subr.mxu0 0.0
        %3268 = vmatpush1.xpose.msra.mxu0 0.0
        %3269 = vmatprep.subr.mxu0 0.0
        %3270 = vmatpush1.xpose.msra.mxu0 0.0
        %3271 = vmatprep.subr.mxu0 0.0
        %3272 = vmatpush1.xpose.msra.mxu0 0.0
        %3273 = vmatprep.subr.mxu0 0.0
        %3274 = vmatpush1.xpose.msra.mxu0 0.0
        %3275 = vmatprep.subr.mxu0 0.0
        %3276 = vmatpush1.xpose.msra.mxu0 0.0
        %3277 = vmatprep.subr.mxu0 0.0
        %3278 = vmatpush1.xpose.msra.mxu0 0.0
        %3279 = vmatprep.subr.mxu0 0.0
        %3280 = vmatpush1.xpose.msra.mxu0 0.0
        %3281 = vmatprep.subr.mxu0 0.0
        %3282 = vmatpush1.xpose.msra.mxu0 0.0
        %3283 = vmatprep.subr.mxu0 0.0
        %3284 = vmatpush1.xpose.msra.mxu0 0.0
        %3285 = vmatprep.subr.mxu0 0.0
        %3286 = vmatpush1.xpose.msra.mxu0 0.0
        %3287 = vmatprep.subr.mxu0 0.0
        %3288 = vmatpush1.xpose.msra.mxu0 0.0
        %3289 = vmatprep.subr.mxu0 0.0
        %3290 = vmatpush1.xpose.msra.mxu0 0.0
        %3291 = vmatprep.subr.mxu0 0.0
        %3292 = vmatpush1.xpose.msra.mxu0 0.0
        %3293 = vmatprep.subr.mxu0 0.0
        %3294 = vmatpush1.xpose.msra.mxu0 0.0
        %3295 = vmatprep.subr.mxu0 0.0
        %3296 = vmatpush1.xpose.msra.mxu0 0.0
        %3297 = vmatprep.subr.mxu0 0.0
        %3298 = vmatpush1.xpose.msra.mxu0 0.0
        %3299 = vmatprep.subr.mxu0 0.0
        %3300 = vmatpush1.xpose.msra.mxu0 0.0
        %3301 = vmatprep.subr.mxu0 0.0
        %3302 = vmatpush1.xpose.msra.mxu0 0.0
        %3303 = vmatprep.subr.mxu0 0.0
        %3304 = vmatpush1.xpose.msra.mxu0 0.0
        %3305 = vmatprep.subr.mxu0 0.0
        %3306 = vmatpush1.xpose.msra.mxu0 0.0
        %3307 = vmatprep.subr.mxu0 0.0
        %3308 = vmatpush1.xpose.msra.mxu0 0.0
        %3309 = vmatprep.subr.mxu0 0.0
        %3310 = vmatpush1.xpose.msra.mxu0 0.0
        %3311 = vmatprep.subr.mxu0 0.0
        %3312 = vmatpush1.xpose.msra.mxu0 0.0
        %3313 = vmatprep.subr.mxu0 0.0
        %3314 = vmatpush1.xpose.msra.mxu0 0.0
        %3315 = vmatprep.subr.mxu0 0.0
        %3316 = vmatpush1.xpose.msra.mxu0 0.0
        %3317 = vmatprep.subr.mxu0 0.0
        %3318 = vmatpush1.xpose.msra.mxu0 0.0
        %3319 = vmatprep.mubr.f32.mxu0 0.0
        %3320 = vmatmul.mubr.f32.gmra.mrb[0].mxu0 %v3247
        %v3321 = vpop.f32.mrb[0].mxu0
        %v3322 = vadd.f32 0.0, %v3321
        %v3323 = vpop.f32.mrb[0].mxu0
        %3324 = vdwg.mxu0
        %v3325 = vmul.f32 %v3322, 0.35355338
        %v3327 = vlaneseq
        %v3328 = vshrl.u32 %v3327, 7
        %v3329 = vsub.s32 0, %v3328
        %v3330 = vrot.slane %v3245, %v3329
        %v3332 = vadd.f32 %v3325, %v3330
        %vm3333 = vcmask 130048
        %v3334 = vsel %vm3333, %v3332, -inf
        %3335 = vmax.xlane.f32.xlu0 %v3334
        %v3336 = vpop.xlane.xlu0 %3335
        %v3337 = vsub.f32 %v3332, %v3336
        %v3338 = vmul.f32 %v3337, 1.442695
        %v3339 = vpow.pop %v3338
        %v3340 = vsel %vm3333, %v3339, 0.0
        %3341 = vadd.xlane.f32.xlu0 %v3340
        %v3342 = vpop.xlane.xlu0 %3341
        %v3343 = vrcp.pop %v3342
        %v3344 = vmul.f32 %v3339, %v3343
        %3345 = vrot.lane.b32.xlu0 %v3233, 96
        %v3346 = vpop.permute.xlu0 %3345
        %3347 = vrot.lane.b32.xlu0 %v3238, 96
        %v3348 = vpop.permute.xlu0 %3347
        %v3352 = vsel %vm3333, %v3344, 0
        %3354 = vmatprep.subr.mxu0 0.0
        %3355 = vmatpush1.msra.mxu0 %v3346
        %3356 = vmatprep.subr.mxu0 0.0
        %3357 = vmatpush1.msra.mxu0 %v3348
        %3358 = vmatprep.subr.mxu0 0.0
        %3359 = vmatpush1.msra.mxu0 0.0
        %3360 = vmatprep.subr.mxu0 0.0
        %3361 = vmatpush1.msra.mxu0 0.0
        %3362 = vmatprep.subr.mxu0 0.0
        %3363 = vmatpush1.msra.mxu0 0.0
        %3364 = vmatprep.subr.mxu0 0.0
        %3365 = vmatpush1.msra.mxu0 0.0
        %3366 = vmatprep.subr.mxu0 0.0
        %3367 = vmatpush1.msra.mxu0 0.0
        %3368 = vmatprep.subr.mxu0 0.0
        %3369 = vmatpush1.msra.mxu0 0.0
        %3370 = vmatprep.subr.mxu0 0.0
        %3371 = vmatpush1.msra.mxu0 0.0
        %3372 = vmatprep.subr.mxu0 0.0
        %3373 = vmatpush1.msra.mxu0 0.0
        %3374 = vmatprep.subr.mxu0 0.0
        %3375 = vmatpush1.msra.mxu0 0.0
        %3376 = vmatprep.subr.mxu0 0.0
        %3377 = vmatpush1.msra.mxu0 0.0
        %3378 = vmatprep.subr.mxu0 0.0
        %3379 = vmatpush1.msra.mxu0 0.0
        %3380 = vmatprep.subr.mxu0 0.0
        %3381 = vmatpush1.msra.mxu0 0.0
        %3382 = vmatprep.subr.mxu0 0.0
        %3383 = vmatpush1.msra.mxu0 0.0
        %3384 = vmatprep.subr.mxu0 0.0
        %3385 = vmatpush1.msra.mxu0 0.0
        %3386 = vmatprep.subr.mxu0 0.0
        %3387 = vmatpush1.msra.mxu0 0.0
        %3388 = vmatprep.subr.mxu0 0.0
        %3389 = vmatpush1.msra.mxu0 0.0
        %3390 = vmatprep.subr.mxu0 0.0
        %3391 = vmatpush1.msra.mxu0 0.0
        %3392 = vmatprep.subr.mxu0 0.0
        %3393 = vmatpush1.msra.mxu0 0.0
        %3394 = vmatprep.subr.mxu0 0.0
        %3395 = vmatpush1.msra.mxu0 0.0
        %3396 = vmatprep.subr.mxu0 0.0
        %3397 = vmatpush1.msra.mxu0 0.0
        %3398 = vmatprep.subr.mxu0 0.0
        %3399 = vmatpush1.msra.mxu0 0.0
        %3400 = vmatprep.subr.mxu0 0.0
        %3401 = vmatpush1.msra.mxu0 0.0
        %3402 = vmatprep.subr.mxu0 0.0
        %3403 = vmatpush1.msra.mxu0 0.0
        %3404 = vmatprep.subr.mxu0 0.0
        %3405 = vmatpush1.msra.mxu0 0.0
        %3406 = vmatprep.subr.mxu0 0.0
        %3407 = vmatpush1.msra.mxu0 0.0
        %3408 = vmatprep.subr.mxu0 0.0
        %3409 = vmatpush1.msra.mxu0 0.0
        %3410 = vmatprep.subr.mxu0 0.0
        %3411 = vmatpush1.msra.mxu0 0.0
        %3412 = vmatprep.subr.mxu0 0.0
        %3413 = vmatpush1.msra.mxu0 0.0
        %3414 = vmatprep.subr.mxu0 0.0
        %3415 = vmatpush1.msra.mxu0 0.0
        %3416 = vmatprep.subr.mxu0 0.0
        %3417 = vmatpush1.msra.mxu0 0.0
        %3418 = vmatprep.mubr.f32.mxu0 0.0
        %3419 = vmatmul.mubr.f32.gmra.mrb[0].mxu0 %v3352
        %v3420 = vpop.f32.mrb[0].mxu0
        %v3421 = vadd.f32 0.0, %v3420
        %v3422 = vpop.f32.mrb[0].mxu0
        %3423 = vdwg.mxu0
        %3424 = vrot.lane.b32.xlu0 %v3146, 120
        %v3425 = vpop.permute.xlu0 %3424
        %3426 = vrot.lane.b32.xlu0 %v3233, 120
        %v3427 = vpop.permute.xlu0 %3426
        %3428 = vrot.lane.b32.xlu0 %v3238, 120
        %v3429 = vpop.permute.xlu0 %3428
        %v3430 = vsel %vm2067, %v3425, 0
        %v3432 = vsel %vm2067, %v3427, 0
        %v3434 = vsel %vm2067, %v3429, 0
        %3436 = vmatprep.subr.mxu0 0.0
        %3437 = vmatpush1.xpose.msra.mxu0 %v3432
        %3438 = vmatprep.subr.mxu0 0.0
        %3439 = vmatpush1.xpose.msra.mxu0 %v3434
        %3440 = vmatprep.subr.mxu0 0.0
        %3441 = vmatpush1.xpose.msra.mxu0 0.0
        %3442 = vmatprep.subr.mxu0 0.0
        %3443 = vmatpush1.xpose.msra.mxu0 0.0
        %3444 = vmatprep.subr.mxu0 0.0
        %3445 = vmatpush1.xpose.msra.mxu0 0.0
        %3446 = vmatprep.subr.mxu0 0.0
        %3447 = vmatpush1.xpose.msra.mxu0 0.0
        %3448 = vmatprep.subr.mxu0 0.0
        %3449 = vmatpush1.xpose.msra.mxu0 0.0
        %3450 = vmatprep.subr.mxu0 0.0
        %3451 = vmatpush1.xpose.msra.mxu0 0.0
        %3452 = vmatprep.subr.mxu0 0.0
        %3453 = vmatpush1.xpose.msra.mxu0 0.0
        %3454 = vmatprep.subr.mxu0 0.0
        %3455 = vmatpush1.xpose.msra.mxu0 0.0
        %3456 = vmatprep.subr.mxu0 0.0
        %3457 = vmatpush1.xpose.msra.mxu0 0.0
        %3458 = vmatprep.subr.mxu0 0.0
        %3459 = vmatpush1.xpose.msra.mxu0 0.0
        %3460 = vmatprep.subr.mxu0 0.0
        %3461 = vmatpush1.xpose.msra.mxu0 0.0
        %3462 = vmatprep.subr.mxu0 0.0
        %3463 = vmatpush1.xpose.msra.mxu0 0.0
        %3464 = vmatprep.subr.mxu0 0.0
        %3465 = vmatpush1.xpose.msra.mxu0 0.0
        %3466 = vmatprep.subr.mxu0 0.0
        %3467 = vmatpush1.xpose.msra.mxu0 0.0
        %3468 = vmatprep.subr.mxu0 0.0
        %3469 = vmatpush1.xpose.msra.mxu0 0.0
        %3470 = vmatprep.subr.mxu0 0.0
        %3471 = vmatpush1.xpose.msra.mxu0 0.0
        %3472 = vmatprep.subr.mxu0 0.0
        %3473 = vmatpush1.xpose.msra.mxu0 0.0
        %3474 = vmatprep.subr.mxu0 0.0
        %3475 = vmatpush1.xpose.msra.mxu0 0.0
        %3476 = vmatprep.subr.mxu0 0.0
        %3477 = vmatpush1.xpose.msra.mxu0 0.0
        %3478 = vmatprep.subr.mxu0 0.0
        %3479 = vmatpush1.xpose.msra.mxu0 0.0
        %3480 = vmatprep.subr.mxu0 0.0
        %3481 = vmatpush1.xpose.msra.mxu0 0.0
        %3482 = vmatprep.subr.mxu0 0.0
        %3483 = vmatpush1.xpose.msra.mxu0 0.0
        %3484 = vmatprep.subr.mxu0 0.0
        %3485 = vmatpush1.xpose.msra.mxu0 0.0
        %3486 = vmatprep.subr.mxu0 0.0
        %3487 = vmatpush1.xpose.msra.mxu0 0.0
        %3488 = vmatprep.subr.mxu0 0.0
        %3489 = vmatpush1.xpose.msra.mxu0 0.0
        %3490 = vmatprep.subr.mxu0 0.0
        %3491 = vmatpush1.xpose.msra.mxu0 0.0
        %3492 = vmatprep.subr.mxu0 0.0
        %3493 = vmatpush1.xpose.msra.mxu0 0.0
        %3494 = vmatprep.subr.mxu0 0.0
        %3495 = vmatpush1.xpose.msra.mxu0 0.0
        %3496 = vmatprep.subr.mxu0 0.0
        %3497 = vmatpush1.xpose.msra.mxu0 0.0
        %3498 = vmatprep.subr.mxu0 0.0
        %3499 = vmatpush1.xpose.msra.mxu0 0.0
        %3500 = vmatprep.mubr.f32.mxu0 0.0
        %3501 = vmatmul.mubr.f32.gmra.mrb[0].mxu0 %v3430
        %v3502 = vpop.f32.mrb[0].mxu0
        %v3503 = vadd.f32 0.0, %v3502
        %v3504 = vpop.f32.mrb[0].mxu0
        %3505 = vdwg.mxu0
        %v3506 = vmul.f32 %v3503, 0.35355338
        %v3507 = vadd.f32 %v3506, %v3330
        %v3508 = vsel %vm3333, %v3507, -inf
        %3509 = vmax.xlane.f32.xlu0 %v3508
        %v3510 = vpop.xlane.xlu0 %3509
        %v3511 = vsub.f32 %v3507, %v3510
        %v3512 = vmul.f32 %v3511, 1.442695
        %v3513 = vpow.pop %v3512
        %v3514 = vsel %vm3333, %v3513, 0.0
        %3515 = vadd.xlane.f32.xlu0 %v3514
        %v3516 = vpop.xlane.xlu0 %3515
        %v3517 = vrcp.pop %v3516
        %v3518 = vmul.f32 %v3513, %v3517
        %3519 = vrot.lane.b32.xlu0 %v3233, 88
        %v3520 = vpop.permute.xlu0 %3519
        %3521 = vrot.lane.b32.xlu0 %v3238, 88
        %v3522 = vpop.permute.xlu0 %3521
        %v3526 = vsel %vm3333, %v3518, 0
        %3528 = vmatprep.subr.mxu0 0.0
        %3529 = vmatpush1.msra.mxu0 %v3520
        %3530 = vmatprep.subr.mxu0 0.0
        %3531 = vmatpush1.msra.mxu0 %v3522
        %3532 = vmatprep.subr.mxu0 0.0
        %3533 = vmatpush1.msra.mxu0 0.0
        %3534 = vmatprep.subr.mxu0 0.0
        %3535 = vmatpush1.msra.mxu0 0.0
        %3536 = vmatprep.subr.mxu0 0.0
        %3537 = vmatpush1.msra.mxu0 0.0
        %3538 = vmatprep.subr.mxu0 0.0
        %3539 = vmatpush1.msra.mxu0 0.0
        %3540 = vmatprep.subr.mxu0 0.0
        %3541 = vmatpush1.msra.mxu0 0.0
        %3542 = vmatprep.subr.mxu0 0.0
        %3543 = vmatpush1.msra.mxu0 0.0
        %3544 = vmatprep.subr.mxu0 0.0
        %3545 = vmatpush1.msra.mxu0 0.0
        %3546 = vmatprep.subr.mxu0 0.0
        %3547 = vmatpush1.msra.mxu0 0.0
        %3548 = vmatprep.subr.mxu0 0.0
        %3549 = vmatpush1.msra.mxu0 0.0
        %3550 = vmatprep.subr.mxu0 0.0
        %3551 = vmatpush1.msra.mxu0 0.0
        %3552 = vmatprep.subr.mxu0 0.0
        %3553 = vmatpush1.msra.mxu0 0.0
        %3554 = vmatprep.subr.mxu0 0.0
        %3555 = vmatpush1.msra.mxu0 0.0
        %3556 = vmatprep.subr.mxu0 0.0
        %3557 = vmatpush1.msra.mxu0 0.0
        %3558 = vmatprep.subr.mxu0 0.0
        %3559 = vmatpush1.msra.mxu0 0.0
        %3560 = vmatprep.subr.mxu0 0.0
        %3561 = vmatpush1.msra.mxu0 0.0
        %3562 = vmatprep.subr.mxu0 0.0
        %3563 = vmatpush1.msra.mxu0 0.0
        %3564 = vmatprep.subr.mxu0 0.0
        %3565 = vmatpush1.msra.mxu0 0.0
        %3566 = vmatprep.subr.mxu0 0.0
        %3567 = vmatpush1.msra.mxu0 0.0
        %3568 = vmatprep.subr.mxu0 0.0
        %3569 = vmatpush1.msra.mxu0 0.0
        %3570 = vmatprep.subr.mxu0 0.0
        %3571 = vmatpush1.msra.mxu0 0.0
        %3572 = vmatprep.subr.mxu0 0.0
        %3573 = vmatpush1.msra.mxu0 0.0
        %3574 = vmatprep.subr.mxu0 0.0
        %3575 = vmatpush1.msra.mxu0 0.0
        %3576 = vmatprep.subr.mxu0 0.0
        %3577 = vmatpush1.msra.mxu0 0.0
        %3578 = vmatprep.subr.mxu0 0.0
        %3579 = vmatpush1.msra.mxu0 0.0
        %3580 = vmatprep.subr.mxu0 0.0
        %3581 = vmatpush1.msra.mxu0 0.0
        %3582 = vmatprep.subr.mxu0 0.0
        %3583 = vmatpush1.msra.mxu0 0.0
        %3584 = vmatprep.subr.mxu0 0.0
        %3585 = vmatpush1.msra.mxu0 0.0
        %3586 = vmatprep.subr.mxu0 0.0
        %3587 = vmatpush1.msra.mxu0 0.0
        %3588 = vmatprep.subr.mxu0 0.0
        %3589 = vmatpush1.msra.mxu0 0.0
        %3590 = vmatprep.subr.mxu0 0.0
        %3591 = vmatpush1.msra.mxu0 0.0
        %3592 = vmatprep.mubr.f32.mxu0 0.0
        %3593 = vmatmul.mubr.f32.gmra.mrb[0].mxu0 %v3526
        %v3594 = vpop.f32.mrb[0].mxu0
        %v3595 = vadd.f32 0.0, %v3594
        %v3596 = vpop.f32.mrb[0].mxu0
        %3597 = vdwg.mxu0
        %v3599 = vsel %vm2067, %v3595, 0
        %3601 = vmatprep.subr.mxu0 0.0
        %3602 = vmatpush1.msra.mxu0 %v3242
        %3603 = vmatprep.subr.mxu0 0.0
        %3604 = vmatpush1.msra.mxu0 0.0
        %3605 = vmatprep.subr.mxu0 0.0
        %3606 = vmatpush1.msra.mxu0 0.0
        %3607 = vmatprep.subr.mxu0 0.0
        %3608 = vmatpush1.msra.mxu0 0.0
        %3609 = vmatprep.subr.mxu0 0.0
        %3610 = vmatpush1.msra.mxu0 0.0
        %3611 = vmatprep.subr.mxu0 0.0
        %3612 = vmatpush1.msra.mxu0 0.0
        %3613 = vmatprep.subr.mxu0 0.0
        %3614 = vmatpush1.msra.mxu0 0.0
        %3615 = vmatprep.subr.mxu0 0.0
        %3616 = vmatpush1.msra.mxu0 0.0
        %3617 = vmatprep.subr.mxu0 0.0
        %3618 = vmatpush1.msra.mxu0 0.0
        %3619 = vmatprep.subr.mxu0 0.0
        %3620 = vmatpush1.msra.mxu0 0.0
        %3621 = vmatprep.subr.mxu0 0.0
        %3622 = vmatpush1.msra.mxu0 0.0
        %3623 = vmatprep.subr.mxu0 0.0
        %3624 = vmatpush1.msra.mxu0 0.0
        %3625 = vmatprep.subr.mxu0 0.0
        %3626 = vmatpush1.msra.mxu0 0.0
        %3627 = vmatprep.subr.mxu0 0.0
        %3628 = vmatpush1.msra.mxu0 0.0
        %3629 = vmatprep.subr.mxu0 0.0
        %3630 = vmatpush1.msra.mxu0 0.0
        %3631 = vmatprep.subr.mxu0 0.0
        %3632 = vmatpush1.msra.mxu0 0.0
        %3633 = vmatprep.subr.mxu0 0.0
        %3634 = vmatpush1.msra.mxu0 0.0
        %3635 = vmatprep.subr.mxu0 0.0
        %3636 = vmatpush1.msra.mxu0 0.0
        %3637 = vmatprep.subr.mxu0 0.0
        %3638 = vmatpush1.msra.mxu0 0.0
        %3639 = vmatprep.subr.mxu0 0.0
        %3640 = vmatpush1.msra.mxu0 0.0
        %3641 = vmatprep.subr.mxu0 0.0
        %3642 = vmatpush1.msra.mxu0 0.0
        %3643 = vmatprep.subr.mxu0 0.0
        %3644 = vmatpush1.msra.mxu0 0.0
        %3645 = vmatprep.subr.mxu0 0.0
        %3646 = vmatpush1.msra.mxu0 0.0
        %3647 = vmatprep.subr.mxu0 0.0
        %3648 = vmatpush1.msra.mxu0 0.0
        %3649 = vmatprep.subr.mxu0 0.0
        %3650 = vmatpush1.msra.mxu0 0.0
        %3651 = vmatprep.subr.mxu0 0.0
        %3652 = vmatpush1.msra.mxu0 0.0
        %3653 = vmatprep.subr.mxu0 0.0
        %3654 = vmatpush1.msra.mxu0 0.0
        %3655 = vmatprep.subr.mxu0 0.0
        %3656 = vmatpush1.msra.mxu0 0.0
        %3657 = vmatprep.subr.mxu0 0.0
        %3658 = vmatpush1.msra.mxu0 0.0
        %3659 = vmatprep.subr.mxu0 0.0
        %3660 = vmatpush1.msra.mxu0 0.0
        %3661 = vmatprep.subr.mxu0 0.0
        %3662 = vmatpush1.msra.mxu0 0.0
        %3663 = vmatprep.subr.mxu0 0.0
        %3664 = vmatpush1.msra.mxu0 0.0
        %3665 = vmatprep.mubr.f32.mxu0 0.0
        %3666 = vmatmul.mubr.f32.gmra.mrb[0].mxu0 %v3599
        %v3667 = vpop.f32.mrb[0].mxu0
        %v3668 = vadd.f32 0.0, %v3667
        %v3669 = vpop.f32.mrb[0].mxu0
        %3670 = vdwg.mxu0
        %v3672 = vsel %vm2067, %v3421, 0
        %3674 = vmatprep.subr.mxu0 0.0
        %3675 = vmatpush1.msra.mxu0 %v3241
        %3676 = vmatprep.subr.mxu0 0.0
        %3677 = vmatpush1.msra.mxu0 0.0
        %3678 = vmatprep.subr.mxu0 0.0
        %3679 = vmatpush1.msra.mxu0 0.0
        %3680 = vmatprep.subr.mxu0 0.0
        %3681 = vmatpush1.msra.mxu0 0.0
        %3682 = vmatprep.subr.mxu0 0.0
        %3683 = vmatpush1.msra.mxu0 0.0
        %3684 = vmatprep.subr.mxu0 0.0
        %3685 = vmatpush1.msra.mxu0 0.0
        %3686 = vmatprep.subr.mxu0 0.0
        %3687 = vmatpush1.msra.mxu0 0.0
        %3688 = vmatprep.subr.mxu0 0.0
        %3689 = vmatpush1.msra.mxu0 0.0
        %3690 = vmatprep.subr.mxu0 0.0
        %3691 = vmatpush1.msra.mxu0 0.0
        %3692 = vmatprep.subr.mxu0 0.0
        %3693 = vmatpush1.msra.mxu0 0.0
        %3694 = vmatprep.subr.mxu0 0.0
        %3695 = vmatpush1.msra.mxu0 0.0
        %3696 = vmatprep.subr.mxu0 0.0
        %3697 = vmatpush1.msra.mxu0 0.0
        %3698 = vmatprep.subr.mxu0 0.0
        %3699 = vmatpush1.msra.mxu0 0.0
        %3700 = vmatprep.subr.mxu0 0.0
        %3701 = vmatpush1.msra.mxu0 0.0
        %3702 = vmatprep.subr.mxu0 0.0
        %3703 = vmatpush1.msra.mxu0 0.0
        %3704 = vmatprep.subr.mxu0 0.0
        %3705 = vmatpush1.msra.mxu0 0.0
        %3706 = vmatprep.subr.mxu0 0.0
        %3707 = vmatpush1.msra.mxu0 0.0
        %3708 = vmatprep.subr.mxu0 0.0
        %3709 = vmatpush1.msra.mxu0 0.0
        %3710 = vmatprep.subr.mxu0 0.0
        %3711 = vmatpush1.msra.mxu0 0.0
        %3712 = vmatprep.subr.mxu0 0.0
        %3713 = vmatpush1.msra.mxu0 0.0
        %3714 = vmatprep.subr.mxu0 0.0
        %3715 = vmatpush1.msra.mxu0 0.0
        %3716 = vmatprep.subr.mxu0 0.0
        %3717 = vmatpush1.msra.mxu0 0.0
        %3718 = vmatprep.subr.mxu0 0.0
        %3719 = vmatpush1.msra.mxu0 0.0
        %3720 = vmatprep.subr.mxu0 0.0
        %3721 = vmatpush1.msra.mxu0 0.0
        %3722 = vmatprep.subr.mxu0 0.0
        %3723 = vmatpush1.msra.mxu0 0.0
        %3724 = vmatprep.subr.mxu0 0.0
        %3725 = vmatpush1.msra.mxu0 0.0
        %3726 = vmatprep.subr.mxu0 0.0
        %3727 = vmatpush1.msra.mxu0 0.0
        %3728 = vmatprep.subr.mxu0 0.0
        %3729 = vmatpush1.msra.mxu0 0.0
        %3730 = vmatprep.subr.mxu0 0.0
        %3731 = vmatpush1.msra.mxu0 0.0
        %3732 = vmatprep.subr.mxu0 0.0
        %3733 = vmatpush1.msra.mxu0 0.0
        %3734 = vmatprep.subr.mxu0 0.0
        %3735 = vmatpush1.msra.mxu0 0.0
        %3736 = vmatprep.subr.mxu0 0.0
        %3737 = vmatpush1.msra.mxu0 0.0
        %3738 = vmatprep.mubr.f32.mxu0 0.0
        %3739 = vmatmul.mubr.f32.gmra.mrb[0].mxu0 %v3672
        %v3740 = vpop.f32.mrb[0].mxu0
        %v3741 = vadd.f32 %v3668, %v3740
        %v3742 = vpop.f32.mrb[0].mxu0
        %3743 = vdwg.mxu0
        %3744 = vrot.lane.b32.xlu0 %v3146, 112
        %v3745 = vpop.permute.xlu0 %3744
        %3746 = vrot.lane.b32.xlu0 %v3233, 112
        %v3747 = vpop.permute.xlu0 %3746
        %3748 = vrot.lane.b32.xlu0 %v3238, 112
        %v3749 = vpop.permute.xlu0 %3748
        %v3750 = vsel %vm2067, %v3745, 0
        %v3752 = vsel %vm2067, %v3747, 0
        %v3754 = vsel %vm2067, %v3749, 0
        %3756 = vmatprep.subr.mxu0 0.0
        %3757 = vmatpush1.xpose.msra.mxu0 %v3752
        %3758 = vmatprep.subr.mxu0 0.0
        %3759 = vmatpush1.xpose.msra.mxu0 %v3754
        %3760 = vmatprep.subr.mxu0 0.0
        %3761 = vmatpush1.xpose.msra.mxu0 0.0
        %3762 = vmatprep.subr.mxu0 0.0
        %3763 = vmatpush1.xpose.msra.mxu0 0.0
        %3764 = vmatprep.subr.mxu0 0.0
        %3765 = vmatpush1.xpose.msra.mxu0 0.0
        %3766 = vmatprep.subr.mxu0 0.0
        %3767 = vmatpush1.xpose.msra.mxu0 0.0
        %3768 = vmatprep.subr.mxu0 0.0
        %3769 = vmatpush1.xpose.msra.mxu0 0.0
        %3770 = vmatprep.subr.mxu0 0.0
        %3771 = vmatpush1.xpose.msra.mxu0 0.0
        %3772 = vmatprep.subr.mxu0 0.0
        %3773 = vmatpush1.xpose.msra.mxu0 0.0
        %3774 = vmatprep.subr.mxu0 0.0
        %3775 = vmatpush1.xpose.msra.mxu0 0.0
        %3776 = vmatprep.subr.mxu0 0.0
        %3777 = vmatpush1.xpose.msra.mxu0 0.0
        %3778 = vmatprep.subr.mxu0 0.0
        %3779 = vmatpush1.xpose.msra.mxu0 0.0
        %3780 = vmatprep.subr.mxu0 0.0
        %3781 = vmatpush1.xpose.msra.mxu0 0.0
        %3782 = vmatprep.subr.mxu0 0.0
        %3783 = vmatpush1.xpose.msra.mxu0 0.0
        %3784 = vmatprep.subr.mxu0 0.0
        %3785 = vmatpush1.xpose.msra.mxu0 0.0
        %3786 = vmatprep.subr.mxu0 0.0
        %3787 = vmatpush1.xpose.msra.mxu0 0.0
        %3788 = vmatprep.subr.mxu0 0.0
        %3789 = vmatpush1.xpose.msra.mxu0 0.0
        %3790 = vmatprep.subr.mxu0 0.0
        %3791 = vmatpush1.xpose.msra.mxu0 0.0
        %3792 = vmatprep.subr.mxu0 0.0
        %3793 = vmatpush1.xpose.msra.mxu0 0.0
        %3794 = vmatprep.subr.mxu0 0.0
        %3795 = vmatpush1.xpose.msra.mxu0 0.0
        %3796 = vmatprep.subr.mxu0 0.0
        %3797 = vmatpush1.xpose.msra.mxu0 0.0
        %3798 = vmatprep.subr.mxu0 0.0
        %3799 = vmatpush1.xpose.msra.mxu0 0.0
        %3800 = vmatprep.subr.mxu0 0.0
        %3801 = vmatpush1.xpose.msra.mxu0 0.0
        %3802 = vmatprep.subr.mxu0 0.0
        %3803 = vmatpush1.xpose.msra.mxu0 0.0
        %3804 = vmatprep.subr.mxu0 0.0
        %3805 = vmatpush1.xpose.msra.mxu0 0.0
        %3806 = vmatprep.subr.mxu0 0.0
        %3807 = vmatpush1.xpose.msra.mxu0 0.0
        %3808 = vmatprep.subr.mxu0 0.0
        %3809 = vmatpush1.xpose.msra.mxu0 0.0
        %3810 = vmatprep.subr.mxu0 0.0
        %3811 = vmatpush1.xpose.msra.mxu0 0.0
        %3812 = vmatprep.subr.mxu0 0.0
        %3813 = vmatpush1.xpose.msra.mxu0 0.0
        %3814 = vmatprep.subr.mxu0 0.0
        %3815 = vmatpush1.xpose.msra.mxu0 0.0
        %3816 = vmatprep.subr.mxu0 0.0
        %3817 = vmatpush1.xpose.msra.mxu0 0.0
        %3818 = vmatprep.subr.mxu0 0.0
        %3819 = vmatpush1.xpose.msra.mxu0 0.0
        %3820 = vmatprep.mubr.f32.mxu0 0.0
        %3821 = vmatmul.mubr.f32.gmra.mrb[0].mxu0 %v3750
        %v3822 = vpop.f32.mrb[0].mxu0
        %v3823 = vadd.f32 0.0, %v3822
        %v3824 = vpop.f32.mrb[0].mxu0
        %3825 = vdwg.mxu0
        %v3826 = vmul.f32 %v3823, 0.35355338
        %v3827 = vadd.f32 %v3826, %v3330
        %v3828 = vsel %vm3333, %v3827, -inf
        %3829 = vmax.xlane.f32.xlu0 %v3828
        %v3830 = vpop.xlane.xlu0 %3829
        %v3831 = vsub.f32 %v3827, %v3830
        %v3832 = vmul.f32 %v3831, 1.442695
        %v3833 = vpow.pop %v3832
        %v3834 = vsel %vm3333, %v3833, 0.0
        %3835 = vadd.xlane.f32.xlu0 %v3834
        %v3836 = vpop.xlane.xlu0 %3835
        %v3837 = vrcp.pop %v3836
        %v3838 = vmul.f32 %v3833, %v3837
        %3839 = vrot.lane.b32.xlu0 %v3233, 80
        %v3840 = vpop.permute.xlu0 %3839
        %3841 = vrot.lane.b32.xlu0 %v3238, 80
        %v3842 = vpop.permute.xlu0 %3841
        %v3846 = vsel %vm3333, %v3838, 0
        %3848 = vmatprep.subr.mxu0 0.0
        %3849 = vmatpush1.msra.mxu0 %v3840
        %3850 = vmatprep.subr.mxu0 0.0
        %3851 = vmatpush1.msra.mxu0 %v3842
        %3852 = vmatprep.subr.mxu0 0.0
        %3853 = vmatpush1.msra.mxu0 0.0
        %3854 = vmatprep.subr.mxu0 0.0
        %3855 = vmatpush1.msra.mxu0 0.0
        %3856 = vmatprep.subr.mxu0 0.0
        %3857 = vmatpush1.msra.mxu0 0.0
        %3858 = vmatprep.subr.mxu0 0.0
        %3859 = vmatpush1.msra.mxu0 0.0
        %3860 = vmatprep.subr.mxu0 0.0
        %3861 = vmatpush1.msra.mxu0 0.0
        %3862 = vmatprep.subr.mxu0 0.0
        %3863 = vmatpush1.msra.mxu0 0.0
        %3864 = vmatprep.subr.mxu0 0.0
        %3865 = vmatpush1.msra.mxu0 0.0
        %3866 = vmatprep.subr.mxu0 0.0
        %3867 = vmatpush1.msra.mxu0 0.0
        %3868 = vmatprep.subr.mxu0 0.0
        %3869 = vmatpush1.msra.mxu0 0.0
        %3870 = vmatprep.subr.mxu0 0.0
        %3871 = vmatpush1.msra.mxu0 0.0
        %3872 = vmatprep.subr.mxu0 0.0
        %3873 = vmatpush1.msra.mxu0 0.0
        %3874 = vmatprep.subr.mxu0 0.0
        %3875 = vmatpush1.msra.mxu0 0.0
        %3876 = vmatprep.subr.mxu0 0.0
        %3877 = vmatpush1.msra.mxu0 0.0
        %3878 = vmatprep.subr.mxu0 0.0
        %3879 = vmatpush1.msra.mxu0 0.0
        %3880 = vmatprep.subr.mxu0 0.0
        %3881 = vmatpush1.msra.mxu0 0.0
        %3882 = vmatprep.subr.mxu0 0.0
        %3883 = vmatpush1.msra.mxu0 0.0
        %3884 = vmatprep.subr.mxu0 0.0
        %3885 = vmatpush1.msra.mxu0 0.0
        %3886 = vmatprep.subr.mxu0 0.0
        %3887 = vmatpush1.msra.mxu0 0.0
        %3888 = vmatprep.subr.mxu0 0.0
        %3889 = vmatpush1.msra.mxu0 0.0
        %3890 = vmatprep.subr.mxu0 0.0
        %3891 = vmatpush1.msra.mxu0 0.0
        %3892 = vmatprep.subr.mxu0 0.0
        %3893 = vmatpush1.msra.mxu0 0.0
        %3894 = vmatprep.subr.mxu0 0.0
        %3895 = vmatpush1.msra.mxu0 0.0
        %3896 = vmatprep.subr.mxu0 0.0
        %3897 = vmatpush1.msra.mxu0 0.0
        %3898 = vmatprep.subr.mxu0 0.0
        %3899 = vmatpush1.msra.mxu0 0.0
        %3900 = vmatprep.subr.mxu0 0.0
        %3901 = vmatpush1.msra.mxu0 0.0
        %3902 = vmatprep.subr.mxu0 0.0
        %3903 = vmatpush1.msra.mxu0 0.0
        %3904 = vmatprep.subr.mxu0 0.0
        %3905 = vmatpush1.msra.mxu0 0.0
        %3906 = vmatprep.subr.mxu0 0.0
        %3907 = vmatpush1.msra.mxu0 0.0
        %3908 = vmatprep.subr.mxu0 0.0
        %3909 = vmatpush1.msra.mxu0 0.0
        %3910 = vmatprep.subr.mxu0 0.0
        %3911 = vmatpush1.msra.mxu0 0.0
        %3912 = vmatprep.mubr.f32.mxu0 0.0
        %3913 = vmatmul.mubr.f32.gmra.mrb[0].mxu0 %v3846
        %v3914 = vpop.f32.mrb[0].mxu0
        %v3915 = vadd.f32 0.0, %v3914
        %v3916 = vpop.f32.mrb[0].mxu0
        %3917 = vdwg.mxu0
        %v3919 = vsel %vm2067, %v3915, 0
        %3921 = vmatprep.subr.mxu0 0.0
        %3922 = vmatpush1.msra.mxu0 %v3243
        %3923 = vmatprep.subr.mxu0 0.0
        %3924 = vmatpush1.msra.mxu0 0.0
        %3925 = vmatprep.subr.mxu0 0.0
        %3926 = vmatpush1.msra.mxu0 0.0
        %3927 = vmatprep.subr.mxu0 0.0
        %3928 = vmatpush1.msra.mxu0 0.0
        %3929 = vmatprep.subr.mxu0 0.0
        %3930 = vmatpush1.msra.mxu0 0.0
        %3931 = vmatprep.subr.mxu0 0.0
        %3932 = vmatpush1.msra.mxu0 0.0
        %3933 = vmatprep.subr.mxu0 0.0
        %3934 = vmatpush1.msra.mxu0 0.0
        %3935 = vmatprep.subr.mxu0 0.0
        %3936 = vmatpush1.msra.mxu0 0.0
        %3937 = vmatprep.subr.mxu0 0.0
        %3938 = vmatpush1.msra.mxu0 0.0
        %3939 = vmatprep.subr.mxu0 0.0
        %3940 = vmatpush1.msra.mxu0 0.0
        %3941 = vmatprep.subr.mxu0 0.0
        %3942 = vmatpush1.msra.mxu0 0.0
        %3943 = vmatprep.subr.mxu0 0.0
        %3944 = vmatpush1.msra.mxu0 0.0
        %3945 = vmatprep.subr.mxu0 0.0
        %3946 = vmatpush1.msra.mxu0 0.0
        %3947 = vmatprep.subr.mxu0 0.0
        %3948 = vmatpush1.msra.mxu0 0.0
        %3949 = vmatprep.subr.mxu0 0.0
        %3950 = vmatpush1.msra.mxu0 0.0
        %3951 = vmatprep.subr.mxu0 0.0
        %3952 = vmatpush1.msra.mxu0 0.0
        %3953 = vmatprep.subr.mxu0 0.0
        %3954 = vmatpush1.msra.mxu0 0.0
        %3955 = vmatprep.subr.mxu0 0.0
        %3956 = vmatpush1.msra.mxu0 0.0
        %3957 = vmatprep.subr.mxu0 0.0
        %3958 = vmatpush1.msra.mxu0 0.0
        %3959 = vmatprep.subr.mxu0 0.0
        %3960 = vmatpush1.msra.mxu0 0.0
        %3961 = vmatprep.subr.mxu0 0.0
        %3962 = vmatpush1.msra.mxu0 0.0
        %3963 = vmatprep.subr.mxu0 0.0
        %3964 = vmatpush1.msra.mxu0 0.0
        %3965 = vmatprep.subr.mxu0 0.0
        %3966 = vmatpush1.msra.mxu0 0.0
        %3967 = vmatprep.subr.mxu0 0.0
        %3968 = vmatpush1.msra.mxu0 0.0
        %3969 = vmatprep.subr.mxu0 0.0
        %3970 = vmatpush1.msra.mxu0 0.0
        %3971 = vmatprep.subr.mxu0 0.0
        %3972 = vmatpush1.msra.mxu0 0.0
        %3973 = vmatprep.subr.mxu0 0.0
        %3974 = vmatpush1.msra.mxu0 0.0
        %3975 = vmatprep.subr.mxu0 0.0
        %3976 = vmatpush1.msra.mxu0 0.0
        %3977 = vmatprep.subr.mxu0 0.0
        %3978 = vmatpush1.msra.mxu0 0.0
        %3979 = vmatprep.subr.mxu0 0.0
        %3980 = vmatpush1.msra.mxu0 0.0
        %3981 = vmatprep.subr.mxu0 0.0
        %3982 = vmatpush1.msra.mxu0 0.0
        %3983 = vmatprep.subr.mxu0 0.0
        %3984 = vmatpush1.msra.mxu0 0.0
        %3985 = vmatprep.mubr.f32.mxu0 0.0
        %3986 = vmatmul.mubr.f32.gmra.mrb[0].mxu0 %v3919
        %v3987 = vpop.f32.mrb[0].mxu0
        %v3988 = vadd.f32 0.0, %v3987
        %v3989 = vpop.f32.mrb[0].mxu0
        %3990 = vdwg.mxu0
        %v3991 = vadd.f32 %v3741, %v3988
        %3992 = vrot.lane.b32.xlu0 %v3146, 104
        %v3993 = vpop.permute.xlu0 %3992
        %3994 = vrot.lane.b32.xlu0 %v3233, 104
        %v3995 = vpop.permute.xlu0 %3994
        %3996 = vrot.lane.b32.xlu0 %v3238, 104
        %v3997 = vpop.permute.xlu0 %3996
        %v3998 = vsel %vm2067, %v3993, 0
        %v4000 = vsel %vm2067, %v3995, 0
        %v4002 = vsel %vm2067, %v3997, 0
        %4004 = vmatprep.subr.mxu0 0.0
        %4005 = vmatpush1.xpose.msra.mxu0 %v4000
        %4006 = vmatprep.subr.mxu0 0.0
        %4007 = vmatpush1.xpose.msra.mxu0 %v4002
        %4008 = vmatprep.subr.mxu0 0.0
        %4009 = vmatpush1.xpose.msra.mxu0 0.0
        %4010 = vmatprep.subr.mxu0 0.0
        %4011 = vmatpush1.xpose.msra.mxu0 0.0
        %4012 = vmatprep.subr.mxu0 0.0
        %4013 = vmatpush1.xpose.msra.mxu0 0.0
        %4014 = vmatprep.subr.mxu0 0.0
        %4015 = vmatpush1.xpose.msra.mxu0 0.0
        %4016 = vmatprep.subr.mxu0 0.0
        %4017 = vmatpush1.xpose.msra.mxu0 0.0
        %4018 = vmatprep.subr.mxu0 0.0
        %4019 = vmatpush1.xpose.msra.mxu0 0.0
        %4020 = vmatprep.subr.mxu0 0.0
        %4021 = vmatpush1.xpose.msra.mxu0 0.0
        %4022 = vmatprep.subr.mxu0 0.0
        %4023 = vmatpush1.xpose.msra.mxu0 0.0
        %4024 = vmatprep.subr.mxu0 0.0
        %4025 = vmatpush1.xpose.msra.mxu0 0.0
        %4026 = vmatprep.subr.mxu0 0.0
        %4027 = vmatpush1.xpose.msra.mxu0 0.0
        %4028 = vmatprep.subr.mxu0 0.0
        %4029 = vmatpush1.xpose.msra.mxu0 0.0
        %4030 = vmatprep.subr.mxu0 0.0
        %4031 = vmatpush1.xpose.msra.mxu0 0.0
        %4032 = vmatprep.subr.mxu0 0.0
        %4033 = vmatpush1.xpose.msra.mxu0 0.0
        %4034 = vmatprep.subr.mxu0 0.0
        %4035 = vmatpush1.xpose.msra.mxu0 0.0
        %4036 = vmatprep.subr.mxu0 0.0
        %4037 = vmatpush1.xpose.msra.mxu0 0.0
        %4038 = vmatprep.subr.mxu0 0.0
        %4039 = vmatpush1.xpose.msra.mxu0 0.0
        %4040 = vmatprep.subr.mxu0 0.0
        %4041 = vmatpush1.xpose.msra.mxu0 0.0
        %4042 = vmatprep.subr.mxu0 0.0
        %4043 = vmatpush1.xpose.msra.mxu0 0.0
        %4044 = vmatprep.subr.mxu0 0.0
        %4045 = vmatpush1.xpose.msra.mxu0 0.0
        %4046 = vmatprep.subr.mxu0 0.0
        %4047 = vmatpush1.xpose.msra.mxu0 0.0
        %4048 = vmatprep.subr.mxu0 0.0
        %4049 = vmatpush1.xpose.msra.mxu0 0.0
        %4050 = vmatprep.subr.mxu0 0.0
        %4051 = vmatpush1.xpose.msra.mxu0 0.0
        %4052 = vmatprep.subr.mxu0 0.0
        %4053 = vmatpush1.xpose.msra.mxu0 0.0
        %4054 = vmatprep.subr.mxu0 0.0
        %4055 = vmatpush1.xpose.msra.mxu0 0.0
        %4056 = vmatprep.subr.mxu0 0.0
        %4057 = vmatpush1.xpose.msra.mxu0 0.0
        %4058 = vmatprep.subr.mxu0 0.0
        %4059 = vmatpush1.xpose.msra.mxu0 0.0
        %4060 = vmatprep.subr.mxu0 0.0
        %4061 = vmatpush1.xpose.msra.mxu0 0.0
        %4062 = vmatprep.subr.mxu0 0.0
        %4063 = vmatpush1.xpose.msra.mxu0 0.0
        %4064 = vmatprep.subr.mxu0 0.0
        %4065 = vmatpush1.xpose.msra.mxu0 0.0
        %4066 = vmatprep.subr.mxu0 0.0
        %4067 = vmatpush1.xpose.msra.mxu0 0.0
        %4068 = vmatprep.mubr.f32.mxu0 0.0
        %4069 = vmatmul.mubr.f32.gmra.mrb[0].mxu0 %v3998
        %v4070 = vpop.f32.mrb[0].mxu0
        %v4071 = vadd.f32 0.0, %v4070
        %v4072 = vpop.f32.mrb[0].mxu0
        %4073 = vdwg.mxu0
        %v4074 = vmul.f32 %v4071, 0.35355338
        %v4075 = vadd.f32 %v4074, %v3330
        %v4076 = vsel %vm3333, %v4075, -inf
        %4077 = vmax.xlane.f32.xlu0 %v4076
        %v4078 = vpop.xlane.xlu0 %4077
        %v4079 = vsub.f32 %v4075, %v4078
        %v4080 = vmul.f32 %v4079, 1.442695
        %v4081 = vpow.pop %v4080
        %v4082 = vsel %vm3333, %v4081, 0.0
        %4083 = vadd.xlane.f32.xlu0 %v4082
        %v4084 = vpop.xlane.xlu0 %4083
        %v4085 = vrcp.pop %v4084
        %v4086 = vmul.f32 %v4081, %v4085
        %4087 = vrot.lane.b32.xlu0 %v3233, 72
        %v4088 = vpop.permute.xlu0 %4087
        %4089 = vrot.lane.b32.xlu0 %v3238, 72
        %v4090 = vpop.permute.xlu0 %4089
        %v4094 = vsel %vm3333, %v4086, 0
        %4096 = vmatprep.subr.mxu0 0.0
        %4097 = vmatpush1.msra.mxu0 %v4088
        %4098 = vmatprep.subr.mxu0 0.0
        %4099 = vmatpush1.msra.mxu0 %v4090
        %4100 = vmatprep.subr.mxu0 0.0
        %4101 = vmatpush1.msra.mxu0 0.0
        %4102 = vmatprep.subr.mxu0 0.0
        %4103 = vmatpush1.msra.mxu0 0.0
        %4104 = vmatprep.subr.mxu0 0.0
        %4105 = vmatpush1.msra.mxu0 0.0
        %4106 = vmatprep.subr.mxu0 0.0
        %4107 = vmatpush1.msra.mxu0 0.0
        %4108 = vmatprep.subr.mxu0 0.0
        %4109 = vmatpush1.msra.mxu0 0.0
        %4110 = vmatprep.subr.mxu0 0.0
        %4111 = vmatpush1.msra.mxu0 0.0
        %4112 = vmatprep.subr.mxu0 0.0
        %4113 = vmatpush1.msra.mxu0 0.0
        %4114 = vmatprep.subr.mxu0 0.0
        %4115 = vmatpush1.msra.mxu0 0.0
        %4116 = vmatprep.subr.mxu0 0.0
        %4117 = vmatpush1.msra.mxu0 0.0
        %4118 = vmatprep.subr.mxu0 0.0
        %4119 = vmatpush1.msra.mxu0 0.0
        %4120 = vmatprep.subr.mxu0 0.0
        %4121 = vmatpush1.msra.mxu0 0.0
        %4122 = vmatprep.subr.mxu0 0.0
        %4123 = vmatpush1.msra.mxu0 0.0
        %4124 = vmatprep.subr.mxu0 0.0
        %4125 = vmatpush1.msra.mxu0 0.0
        %4126 = vmatprep.subr.mxu0 0.0
        %4127 = vmatpush1.msra.mxu0 0.0
        %4128 = vmatprep.subr.mxu0 0.0
        %4129 = vmatpush1.msra.mxu0 0.0
        %4130 = vmatprep.subr.mxu0 0.0
        %4131 = vmatpush1.msra.mxu0 0.0
        %4132 = vmatprep.subr.mxu0 0.0
        %4133 = vmatpush1.msra.mxu0 0.0
        %4134 = vmatprep.subr.mxu0 0.0
        %4135 = vmatpush1.msra.mxu0 0.0
        %4136 = vmatprep.subr.mxu0 0.0
        %4137 = vmatpush1.msra.mxu0 0.0
        %4138 = vmatprep.subr.mxu0 0.0
        %4139 = vmatpush1.msra.mxu0 0.0
        %4140 = vmatprep.subr.mxu0 0.0
        %4141 = vmatpush1.msra.mxu0 0.0
        %4142 = vmatprep.subr.mxu0 0.0
        %4143 = vmatpush1.msra.mxu0 0.0
        %4144 = vmatprep.subr.mxu0 0.0
        %4145 = vmatpush1.msra.mxu0 0.0
        %4146 = vmatprep.subr.mxu0 0.0
        %4147 = vmatpush1.msra.mxu0 0.0
        %4148 = vmatprep.subr.mxu0 0.0
        %4149 = vmatpush1.msra.mxu0 0.0
        %4150 = vmatprep.subr.mxu0 0.0
        %4151 = vmatpush1.msra.mxu0 0.0
        %4152 = vmatprep.subr.mxu0 0.0
        %4153 = vmatpush1.msra.mxu0 0.0
        %4154 = vmatprep.subr.mxu0 0.0
        %4155 = vmatpush1.msra.mxu0 0.0
        %4156 = vmatprep.subr.mxu0 0.0
        %4157 = vmatpush1.msra.mxu0 0.0
        %4158 = vmatprep.subr.mxu0 0.0
        %4159 = vmatpush1.msra.mxu0 0.0
        %4160 = vmatprep.mubr.f32.mxu0 0.0
        %4161 = vmatmul.mubr.f32.gmra.mrb[0].mxu0 %v4094
        %v4162 = vpop.f32.mrb[0].mxu0
        %v4163 = vadd.f32 0.0, %v4162
        %v4164 = vpop.f32.mrb[0].mxu0
        %4165 = vdwg.mxu0
        %v4167 = vsel %vm2067, %v4163, 0
        %4169 = vmatprep.subr.mxu0 0.0
        %4170 = vmatpush1.msra.mxu0 %v3244
        %4171 = vmatprep.subr.mxu0 0.0
        %4172 = vmatpush1.msra.mxu0 0.0
        %4173 = vmatprep.subr.mxu0 0.0
        %4174 = vmatpush1.msra.mxu0 0.0
        %4175 = vmatprep.subr.mxu0 0.0
        %4176 = vmatpush1.msra.mxu0 0.0
        %4177 = vmatprep.subr.mxu0 0.0
        %4178 = vmatpush1.msra.mxu0 0.0
        %4179 = vmatprep.subr.mxu0 0.0
        %4180 = vmatpush1.msra.mxu0 0.0
        %4181 = vmatprep.subr.mxu0 0.0
        %4182 = vmatpush1.msra.mxu0 0.0
        %4183 = vmatprep.subr.mxu0 0.0
        %4184 = vmatpush1.msra.mxu0 0.0
        %4185 = vmatprep.subr.mxu0 0.0
        %4186 = vmatpush1.msra.mxu0 0.0
        %4187 = vmatprep.subr.mxu0 0.0
        %4188 = vmatpush1.msra.mxu0 0.0
        %4189 = vmatprep.subr.mxu0 0.0
        %4190 = vmatpush1.msra.mxu0 0.0
        %4191 = vmatprep.subr.mxu0 0.0
        %4192 = vmatpush1.msra.mxu0 0.0
        %4193 = vmatprep.subr.mxu0 0.0
        %4194 = vmatpush1.msra.mxu0 0.0
        %4195 = vmatprep.subr.mxu0 0.0
        %4196 = vmatpush1.msra.mxu0 0.0
        %4197 = vmatprep.subr.mxu0 0.0
        %4198 = vmatpush1.msra.mxu0 0.0
        %4199 = vmatprep.subr.mxu0 0.0
        %4200 = vmatpush1.msra.mxu0 0.0
        %4201 = vmatprep.subr.mxu0 0.0
        %4202 = vmatpush1.msra.mxu0 0.0
        %4203 = vmatprep.subr.mxu0 0.0
        %4204 = vmatpush1.msra.mxu0 0.0
        %4205 = vmatprep.subr.mxu0 0.0
        %4206 = vmatpush1.msra.mxu0 0.0
        %4207 = vmatprep.subr.mxu0 0.0
        %4208 = vmatpush1.msra.mxu0 0.0
        %4209 = vmatprep.subr.mxu0 0.0
        %4210 = vmatpush1.msra.mxu0 0.0
        %4211 = vmatprep.subr.mxu0 0.0
        %4212 = vmatpush1.msra.mxu0 0.0
        %4213 = vmatprep.subr.mxu0 0.0
        %4214 = vmatpush1.msra.mxu0 0.0
        %4215 = vmatprep.subr.mxu0 0.0
        %4216 = vmatpush1.msra.mxu0 0.0
        %4217 = vmatprep.subr.mxu0 0.0
        %4218 = vmatpush1.msra.mxu0 0.0
        %4219 = vmatprep.subr.mxu0 0.0
        %4220 = vmatpush1.msra.mxu0 0.0
        %4221 = vmatprep.subr.mxu0 0.0
        %4222 = vmatpush1.msra.mxu0 0.0
        %4223 = vmatprep.subr.mxu0 0.0
        %4224 = vmatpush1.msra.mxu0 0.0
        %4225 = vmatprep.subr.mxu0 0.0
        %4226 = vmatpush1.msra.mxu0 0.0
        %4227 = vmatprep.subr.mxu0 0.0
        %4228 = vmatpush1.msra.mxu0 0.0
        %4229 = vmatprep.subr.mxu0 0.0
        %4230 = vmatpush1.msra.mxu0 0.0
        %4231 = vmatprep.subr.mxu0 0.0
        %4232 = vmatpush1.msra.mxu0 0.0
        %4233 = vmatprep.mubr.f32.mxu0 0.0
        %4234 = vmatmul.mubr.f32.gmra.mrb[0].mxu0 %v4167
        %v4235 = vpop.f32.mrb[0].mxu0
        %v4236 = vadd.f32 0.0, %v4235
        %v4237 = vpop.f32.mrb[0].mxu0
        %4238 = vdwg.mxu0
        %v4239 = vadd.f32 %v3991, %v4236
        %v4240 = vld [vmem:[%s1505] sm:$0x1]
        %v4242 = vlaneseq
        %v4243 = vshrl.u32 %v4242, 7
        %v4244 = vsub.s32 0, %v4243
        %v4245 = vrot.slane %v4240, %v4244
        %v4247 = vadd.f32 %v4239, %v4245
        %v4248 = vadd.f32 %v3064, %v4247
        %v4249 = vld [vmem:[%s1513] sm:$0x1]
        %v4250 = vld [vmem:[%s1521] sm:$0x1]
        %v4251 = vsel %vm1977, %v4248, 0.0
        %4252 = vadd.xlane.f32.xlu0 %v4251
        %v4253 = vpop.xlane.xlu0 %4252
        %v4254 = vmul.f32 %v4253, %v3040
        %v4255 = vsub.f32 %v4248, %v4254
        %v4256 = vmul.f32 %v4255, %v4255
        %v4257 = vsel %vm1977, %v4256, 0.0
        %4258 = vadd.xlane.f32.xlu0 %v4257
        %v4259 = vpop.xlane.xlu0 %4258
        %v4260 = vmul.f32 %v4259, %v3040
        %v4261 = vadd.f32 %v4260, 1e-05
        %v4262 = vrsqrt.pop %v4261
        %v4263 = vmul.f32 %v4255, %v4262
        %v4265 = vlaneseq
        %v4266 = vshrl.u32 %v4265, 7
        %v4267 = vsub.s32 0, %v4266
        %v4268 = vrot.slane %v4249, %v4267
        %v4270 = vmul.f32 %v4263, %v4268
        %v4272 = vlaneseq
        %v4273 = vshrl.u32 %v4272, 7
        %v4274 = vsub.s32 0, %v4273
        %v4275 = vrot.slane %v4250, %v4274
        %v4277 = vadd.f32 %v4270, %v4275
        %v4278 = vld [vmem:[%s1733] sm:$0xff]
        %v4279 = vld [vmem:[%s1733 + $0x8] sm:$0xff]
        %v4280 = vld [vmem:[%s1733 + $0x10] sm:$0xff]
        %v4281 = vld [vmem:[%s1733 + $0x18] sm:$0xff]
        %v4282 = vld [vmem:[%s1736] sm:$0x1]
        %v4284 = vlaneseq
        %v4285 = vshrl.u32 %v4284, 7
        %v4286 = vsub.s32 0, %v4285
        %v4287 = vrot.slane %v4282, %v4286
        %v4290 = vsel %vm1977, %v4277, 0
        %4292 = vmatprep.subr.mxu0 0.0
        %4293 = vmatpush1.msra.mxu0 %v4278
        %4294 = vmatprep.subr.mxu0 0.0
        %4295 = vmatpush1.msra.mxu0 %v4279
        %4296 = vmatprep.subr.mxu0 0.0
        %4297 = vmatpush1.msra.mxu0 %v4280
        %4298 = vmatprep.subr.mxu0 0.0
        %4299 = vmatpush1.msra.mxu0 %v4281
        %4300 = vmatprep.subr.mxu0 0.0
        %4301 = vmatpush1.msra.mxu0 0.0
        %4302 = vmatprep.subr.mxu0 0.0
        %4303 = vmatpush1.msra.mxu0 0.0
        %4304 = vmatprep.subr.mxu0 0.0
        %4305 = vmatpush1.msra.mxu0 0.0
        %4306 = vmatprep.subr.mxu0 0.0
        %4307 = vmatpush1.msra.mxu0 0.0
        %4308 = vmatprep.subr.mxu0 0.0
        %4309 = vmatpush1.msra.mxu0 0.0
        %4310 = vmatprep.subr.mxu0 0.0
        %4311 = vmatpush1.msra.mxu0 0.0
        %4312 = vmatprep.subr.mxu0 0.0
        %4313 = vmatpush1.msra.mxu0 0.0
        %4314 = vmatprep.subr.mxu0 0.0
        %4315 = vmatpush1.msra.mxu0 0.0
        %4316 = vmatprep.subr.mxu0 0.0
        %4317 = vmatpush1.msra.mxu0 0.0
        %4318 = vmatprep.subr.mxu0 0.0
        %4319 = vmatpush1.msra.mxu0 0.0
        %4320 = vmatprep.subr.mxu0 0.0
        %4321 = vmatpush1.msra.mxu0 0.0
        %4322 = vmatprep.subr.mxu0 0.0
        %4323 = vmatpush1.msra.mxu0 0.0
        %4324 = vmatprep.subr.mxu0 0.0
        %4325 = vmatpush1.msra.mxu0 0.0
        %4326 = vmatprep.subr.mxu0 0.0
        %4327 = vmatpush1.msra.mxu0 0.0
        %4328 = vmatprep.subr.mxu0 0.0
        %4329 = vmatpush1.msra.mxu0 0.0
        %4330 = vmatprep.subr.mxu0 0.0
        %4331 = vmatpush1.msra.mxu0 0.0
        %4332 = vmatprep.subr.mxu0 0.0
        %4333 = vmatpush1.msra.mxu0 0.0
        %4334 = vmatprep.subr.mxu0 0.0
        %4335 = vmatpush1.msra.mxu0 0.0
        %4336 = vmatprep.subr.mxu0 0.0
        %4337 = vmatpush1.msra.mxu0 0.0
        %4338 = vmatprep.subr.mxu0 0.0
        %4339 = vmatpush1.msra.mxu0 0.0
        %4340 = vmatprep.subr.mxu0 0.0
        %4341 = vmatpush1.msra.mxu0 0.0
        %4342 = vmatprep.subr.mxu0 0.0
        %4343 = vmatpush1.msra.mxu0 0.0
        %4344 = vmatprep.subr.mxu0 0.0
        %4345 = vmatpush1.msra.mxu0 0.0
        %4346 = vmatprep.subr.mxu0 0.0
        %4347 = vmatpush1.msra.mxu0 0.0
        %4348 = vmatprep.subr.mxu0 0.0
        %4349 = vmatpush1.msra.mxu0 0.0
        %4350 = vmatprep.subr.mxu0 0.0
        %4351 = vmatpush1.msra.mxu0 0.0
        %4352 = vmatprep.subr.mxu0 0.0
        %4353 = vmatpush1.msra.mxu0 0.0
        %4354 = vmatprep.subr.mxu0 0.0
        %4355 = vmatpush1.msra.mxu0 0.0
        %4356 = vmatprep.mubr.f32.mxu0 0.0
        %4357 = vmatmul.mubr.f32.gmra.mrb[0].mxu0 %v4290
        %v4358 = vpop.f32.mrb[0].mxu0
        %v4359 = vadd.f32 %v4287, %v4358
        %v4360 = vpop.f32.mrb[0].mxu0
        %4361 = vdwg.mxu0
        %v4362 = vmul.f32 %v4359, 0.5
        %v4363 = vmul.f32 %v4359, 0.044715
        %v4364 = vmul.f32 %v4363, %v4359
        %v4365 = vmul.f32 %v4364, %v4359
        %v4366 = vadd.f32 %v4359, %v4365
        %v4367 = vmul.f32 %v4366, 0.7978846
        %v4368 = vtanh.pop %v4367
        %v4369 = vadd.f32 %v4368, 1.0
        %v4370 = vmul.f32 %v4362, %v4369
        %v4371 = vld [vmem:[%s1741] sm:$0xff]
        %v4372 = vld [vmem:[%s1741 + $0x8] sm:$0xff]
        %v4373 = vld [vmem:[%s1741 + $0x10] sm:$0xff]
        %v4374 = vld [vmem:[%s1741 + $0x18] sm:$0xff]
        %v4375 = vld [vmem:[%s1741 + $0x20] sm:$0xff]
        %v4376 = vld [vmem:[%s1741 + $0x28] sm:$0xff]
        %v4377 = vld [vmem:[%s1741 + $0x30] sm:$0xff]
        %v4378 = vld [vmem:[%s1741 + $0x38] sm:$0xff]
        %v4379 = vld [vmem:[%s1744] sm:$0x1]
        %v4381 = vlaneseq
        %v4382 = vshrl.u32 %v4381, 7
        %v4383 = vsub.s32 0, %v4382
        %v4384 = vrot.slane %v4379, %v4383
        %vm4386 = vcmask 523264
        %v4388 = vsel %vm4386, %v4370, 0
        %4390 = vmatprep.subr.mxu0 0.0
        %4391 = vmatpush1.msra.mxu0 %v4371
        %4392 = vmatprep.subr.mxu0 0.0
        %4393 = vmatpush1.msra.mxu0 %v4372
        %4394 = vmatprep.subr.mxu0 0.0
        %4395 = vmatpush1.msra.mxu0 %v4373
        %4396 = vmatprep.subr.mxu0 0.0
        %4397 = vmatpush1.msra.mxu0 %v4374
        %4398 = vmatprep.subr.mxu0 0.0
        %4399 = vmatpush1.msra.mxu0 %v4375
        %4400 = vmatprep.subr.mxu0 0.0
        %4401 = vmatpush1.msra.mxu0 %v4376
        %4402 = vmatprep.subr.mxu0 0.0
        %4403 = vmatpush1.msra.mxu0 %v4377
        %4404 = vmatprep.subr.mxu0 0.0
        %4405 = vmatpush1.msra.mxu0 %v4378
        %4406 = vmatprep.subr.mxu0 0.0
        %4407 = vmatpush1.msra.mxu0 0.0
        %4408 = vmatprep.subr.mxu0 0.0
        %4409 = vmatpush1.msra.mxu0 0.0
        %4410 = vmatprep.subr.mxu0 0.0
        %4411 = vmatpush1.msra.mxu0 0.0
        %4412 = vmatprep.subr.mxu0 0.0
        %4413 = vmatpush1.msra.mxu0 0.0
        %4414 = vmatprep.subr.mxu0 0.0
        %4415 = vmatpush1.msra.mxu0 0.0
        %4416 = vmatprep.subr.mxu0 0.0
        %4417 = vmatpush1.msra.mxu0 0.0
        %4418 = vmatprep.subr.mxu0 0.0
        %4419 = vmatpush1.msra.mxu0 0.0
        %4420 = vmatprep.subr.mxu0 0.0
        %4421 = vmatpush1.msra.mxu0 0.0
        %4422 = vmatprep.subr.mxu0 0.0
        %4423 = vmatpush1.msra.mxu0 0.0
        %4424 = vmatprep.subr.mxu0 0.0
        %4425 = vmatpush1.msra.mxu0 0.0
        %4426 = vmatprep.subr.mxu0 0.0
        %4427 = vmatpush1.msra.mxu0 0.0
        %4428 = vmatprep.subr.mxu0 0.0
        %4429 = vmatpush1.msra.mxu0 0.0
        %4430 = vmatprep.subr.mxu0 0.0
        %4431 = vmatpush1.msra.mxu0 0.0
        %4432 = vmatprep.subr.mxu0 0.0
        %4433 = vmatpush1.msra.mxu0 0.0
        %4434 = vmatprep.subr.mxu0 0.0
        %4435 = vmatpush1.msra.mxu0 0.0
        %4436 = vmatprep.subr.mxu0 0.0
        %4437 = vmatpush1.msra.mxu0 0.0
        %4438 = vmatprep.subr.mxu0 0.0
        %4439 = vmatpush1.msra.mxu0 0.0
        %4440 = vmatprep.subr.mxu0 0.0
        %4441 = vmatpush1.msra.mxu0 0.0
        %4442 = vmatprep.subr.mxu0 0.0
        %4443 = vmatpush1.msra.mxu0 0.0
        %4444 = vmatprep.subr.mxu0 0.0
        %4445 = vmatpush1.msra.mxu0 0.0
        %4446 = vmatprep.subr.mxu0 0.0
        %4447 = vmatpush1.msra.mxu0 0.0
        %4448 = vmatprep.subr.mxu0 0.0
        %4449 = vmatpush1.msra.mxu0 0.0
        %4450 = vmatprep.subr.mxu0 0.0
        %4451 = vmatpush1.msra.mxu0 0.0
        %4452 = vmatprep.subr.mxu0 0.0
        %4453 = vmatpush1.msra.mxu0 0.0
        %4454 = vmatprep.mubr.f32.mxu0 0.0
        %4455 = vmatmul.mubr.f32.gmra.mrb[0].mxu0 %v4388
        %v4456 = vpop.f32.mrb[0].mxu0
        %v4457 = vadd.f32 %v4384, %v4456
        %v4458 = vpop.f32.mrb[0].mxu0
        %4459 = vdwg.mxu0
        %v4460 = vadd.f32 %v4277, %v4457
        %v4461 = vld [vmem:[%s1747] sm:$0x1]
        %v4462 = vld [vmem:[%s1750] sm:$0x1]
        %v4463 = vsel %vm1977, %v4460, 0.0
        %4464 = vadd.xlane.f32.xlu0 %v4463
        %v4465 = vpop.xlane.xlu0 %4464
        %v4466 = vmul.f32 %v4465, %v3040
        %v4467 = vsub.f32 %v4460, %v4466
        %v4468 = vmul.f32 %v4467, %v4467
        %v4469 = vsel %vm1977, %v4468, 0.0
        %4470 = vadd.xlane.f32.xlu0 %v4469
        %v4471 = vpop.xlane.xlu0 %4470
        %v4472 = vmul.f32 %v4471, %v3040
        %v4473 = vadd.f32 %v4472, 1e-05
        %v4474 = vrsqrt.pop %v4473
        %v4475 = vmul.f32 %v4467, %v4474
        %v4477 = vlaneseq
        %v4478 = vshrl.u32 %v4477, 7
        %v4479 = vsub.s32 0, %v4478
        %v4480 = vrot.slane %v4461, %v4479
        %v4482 = vmul.f32 %v4475, %v4480
        %v4484 = vlaneseq
        %v4485 = vshrl.u32 %v4484, 7
        %v4486 = vsub.s32 0, %v4485
        %v4487 = vrot.slane %v4462, %v4486
        %v4489 = vadd.f32 %v4482, %v4487
        %4490 = vst.msk [vmem:[#allocation2] sm:$0xff] %vm1977, %v4489
        %p4491 = scmp.eq.s32.totalorder %s99, 1
        // Predicated region
        $region245: #{tpu_custom_call.1} parent=155 // pred_check
          %p4492 = pneg %p4491
        $region246: #{tpu_custom_call.1} parent=155 // pred_check_branch
          %4494 = sbr.rel (%p4492) target = $region248
        $region247: #{tpu_custom_call.1} parent=155 // pred_region
          %v4495 = vld [vmem:[#allocation18] sm:$0xff]
          %v4496 = vld [vmem:[#allocation18 + $0x8] sm:$0xff]
          %v4497 = vld [vmem:[#allocation18 + $0x10] sm:$0xff]
          %v4498 = vld [vmem:[#allocation18 + $0x18] sm:$0xff]
          %v4499 = vld [vmem:[#allocation19] sm:$0x1]
          %v4501 = vlaneseq
          %v4502 = vshrl.u32 %v4501, 7
          %v4503 = vsub.s32 0, %v4502
          %v4504 = vrot.slane %v4499, %v4503
          %v4507 = vsel %vm1977, %v4489, 0
          %4509 = vmatprep.subr.mxu0 0.0
          %4510 = vmatpush1.msra.mxu0 %v4495
          %4511 = vmatprep.subr.mxu0 0.0
          %4512 = vmatpush1.msra.mxu0 %v4496
          %4513 = vmatprep.subr.mxu0 0.0
          %4514 = vmatpush1.msra.mxu0 %v4497
          %4515 = vmatprep.subr.mxu0 0.0
          %4516 = vmatpush1.msra.mxu0 %v4498
          %4517 = vmatprep.subr.mxu0 0.0
          %4518 = vmatpush1.msra.mxu0 0.0
          %4519 = vmatprep.subr.mxu0 0.0
          %4520 = vmatpush1.msra.mxu0 0.0
          %4521 = vmatprep.subr.mxu0 0.0
          %4522 = vmatpush1.msra.mxu0 0.0
          %4523 = vmatprep.subr.mxu0 0.0
          %4524 = vmatpush1.msra.mxu0 0.0
          %4525 = vmatprep.subr.mxu0 0.0
          %4526 = vmatpush1.msra.mxu0 0.0
          %4527 = vmatprep.subr.mxu0 0.0
          %4528 = vmatpush1.msra.mxu0 0.0
          %4529 = vmatprep.subr.mxu0 0.0
          %4530 = vmatpush1.msra.mxu0 0.0
          %4531 = vmatprep.subr.mxu0 0.0
          %4532 = vmatpush1.msra.mxu0 0.0
          %4533 = vmatprep.subr.mxu0 0.0
          %4534 = vmatpush1.msra.mxu0 0.0
          %4535 = vmatprep.subr.mxu0 0.0
          %4536 = vmatpush1.msra.mxu0 0.0
          %4537 = vmatprep.subr.mxu0 0.0
          %4538 = vmatpush1.msra.mxu0 0.0
          %4539 = vmatprep.subr.mxu0 0.0
          %4540 = vmatpush1.msra.mxu0 0.0
          %4541 = vmatprep.subr.mxu0 0.0
          %4542 = vmatpush1.msra.mxu0 0.0
          %4543 = vmatprep.subr.mxu0 0.0
          %4544 = vmatpush1.msra.mxu0 0.0
          %4545 = vmatprep.subr.mxu0 0.0
          %4546 = vmatpush1.msra.mxu0 0.0
          %4547 = vmatprep.subr.mxu0 0.0
          %4548 = vmatpush1.msra.mxu0 0.0
          %4549 = vmatprep.subr.mxu0 0.0
          %4550 = vmatpush1.msra.mxu0 0.0
          %4551 = vmatprep.subr.mxu0 0.0
          %4552 = vmatpush1.msra.mxu0 0.0
          %4553 = vmatprep.subr.mxu0 0.0
          %4554 = vmatpush1.msra.mxu0 0.0
          %4555 = vmatprep.subr.mxu0 0.0
          %4556 = vmatpush1.msra.mxu0 0.0
          %4557 = vmatprep.subr.mxu0 0.0
          %4558 = vmatpush1.msra.mxu0 0.0
          %4559 = vmatprep.subr.mxu0 0.0
          %4560 = vmatpush1.msra.mxu0 0.0
          %4561 = vmatprep.subr.mxu0 0.0
          %4562 = vmatpush1.msra.mxu0 0.0
          %4563 = vmatprep.subr.mxu0 0.0
          %4564 = vmatpush1.msra.mxu0 0.0
          %4565 = vmatprep.subr.mxu0 0.0
          %4566 = vmatpush1.msra.mxu0 0.0
          %4567 = vmatprep.subr.mxu0 0.0
          %4568 = vmatpush1.msra.mxu0 0.0
          %4569 = vmatprep.subr.mxu0 0.0
          %4570 = vmatpush1.msra.mxu0 0.0
          %4571 = vmatprep.subr.mxu0 0.0
          %4572 = vmatpush1.msra.mxu0 0.0
          %4573 = vmatprep.mubr.f32.mxu0 0.0
          %4574 = vmatmul.mubr.f32.gmra.mrb[0].mxu0 %v4507
          %v4575 = vpop.f32.mrb[0].mxu0
          %v4576 = vadd.f32 %v4504, %v4575
          %v4577 = vpop.f32.mrb[0].mxu0
          %4578 = vdwg.mxu0
          %v4579 = vld [vmem:[%s19] sm:$0xff]
          %v4580 = vld [vmem:[%s19 + $0x8] sm:$0xff]
          %v4581 = vld [vmem:[%s19 + $0x10] sm:$0xff]
          %v4582 = vld [vmem:[%s19 + $0x18] sm:$0xff]
          %v4583 = vld [vmem:[%s19 + $0x20] sm:$0xff]
          %v4584 = vld [vmem:[%s19 + $0x28] sm:$0xff]
          %v4585 = vld [vmem:[%s19 + $0x30] sm:$0xff]
          %v4586 = vld [vmem:[%s19 + $0x38] sm:$0xff]
          %v4587 = vld [vmem:[%s19 + $0x40] sm:$0xff]
          %v4588 = vld [vmem:[%s19 + $0x48] sm:$0xff]
          %v4589 = vld [vmem:[%s19 + $0x50] sm:$0xff]
          %v4590 = vld [vmem:[%s19 + $0x58] sm:$0xff]
          %v4591 = vld [vmem:[%s19 + $0x60] sm:$0xff]
          %v4592 = vld [vmem:[%s19 + $0x68] sm:$0xff]
          %v4593 = vld [vmem:[%s19 + $0x70] sm:$0xff]
          %v4594 = vld [vmem:[%s19 + $0x78] sm:$0xff]
          %v4595 = vld [vmem:[#allocation21] sm:$0xff]
          %v4596 = vld [vmem:[#allocation21 + $0x8] sm:$0xff]
          %v4597 = vld [vmem:[#allocation21 + $0x10] sm:$0xff]
          %v4598 = vld [vmem:[#allocation21 + $0x18] sm:$0xff]
          %v4599 = vld [vmem:[#allocation22] sm:$0x1]
          %v4601 = vlaneseq
          %v4602 = vshrl.u32 %v4601, 7
          %v4603 = vsub.s32 0, %v4602
          %v4604 = vrot.slane %v4599, %v4603
          %v4607 = vsel %vm1977, %v4579, 0
          %v4610 = vsel %vm1977, %v4580, 0
          %v4613 = vsel %vm1977, %v4581, 0
          %v4616 = vsel %vm1977, %v4582, 0
          %v4619 = vsel %vm1977, %v4583, 0
          %v4622 = vsel %vm1977, %v4584, 0
          %v4625 = vsel %vm1977, %v4585, 0
          %v4628 = vsel %vm1977, %v4586, 0
          %v4631 = vsel %vm1977, %v4587, 0
          %v4634 = vsel %vm1977, %v4588, 0
          %v4637 = vsel %vm1977, %v4589, 0
          %v4640 = vsel %vm1977, %v4590, 0
          %v4643 = vsel %vm1977, %v4591, 0
          %v4646 = vsel %vm1977, %v4592, 0
          %v4649 = vsel %vm1977, %v4593, 0
          %v4652 = vsel %vm1977, %v4594, 0
          %4654 = vmatprep.subr.mxu0 0.0
          %4655 = vmatpush1.msra.mxu0 %v4595
          %4656 = vmatprep.subr.mxu0 0.0
          %4657 = vmatpush1.msra.mxu0 %v4596
          %4658 = vmatprep.subr.mxu0 0.0
          %4659 = vmatpush1.msra.mxu0 %v4597
          %4660 = vmatprep.subr.mxu0 0.0
          %4661 = vmatpush1.msra.mxu0 %v4598
          %4662 = vmatprep.subr.mxu0 0.0
          %4663 = vmatpush1.msra.mxu0 0.0
          %4664 = vmatprep.subr.mxu0 0.0
          %4665 = vmatpush1.msra.mxu0 0.0
          %4666 = vmatprep.subr.mxu0 0.0
          %4667 = vmatpush1.msra.mxu0 0.0
          %4668 = vmatprep.subr.mxu0 0.0
          %4669 = vmatpush1.msra.mxu0 0.0
          %4670 = vmatprep.subr.mxu0 0.0
          %4671 = vmatpush1.msra.mxu0 0.0
          %4672 = vmatprep.subr.mxu0 0.0
          %4673 = vmatpush1.msra.mxu0 0.0
          %4674 = vmatprep.subr.mxu0 0.0
          %4675 = vmatpush1.msra.mxu0 0.0
          %4676 = vmatprep.subr.mxu0 0.0
          %4677 = vmatpush1.msra.mxu0 0.0
          %4678 = vmatprep.subr.mxu0 0.0
          %4679 = vmatpush1.msra.mxu0 0.0
          %4680 = vmatprep.subr.mxu0 0.0
          %4681 = vmatpush1.msra.mxu0 0.0
          %4682 = vmatprep.subr.mxu0 0.0
          %4683 = vmatpush1.msra.mxu0 0.0
          %4684 = vmatprep.subr.mxu0 0.0
          %4685 = vmatpush1.msra.mxu0 0.0
          %4686 = vmatprep.subr.mxu0 0.0
          %4687 = vmatpush1.msra.mxu0 0.0
          %4688 = vmatprep.subr.mxu0 0.0
          %4689 = vmatpush1.msra.mxu0 0.0
          %4690 = vmatprep.subr.mxu0 0.0
          %4691 = vmatpush1.msra.mxu0 0.0
          %4692 = vmatprep.subr.mxu0 0.0
          %4693 = vmatpush1.msra.mxu0 0.0
          %4694 = vmatprep.subr.mxu0 0.0
          %4695 = vmatpush1.msra.mxu0 0.0
          %4696 = vmatprep.subr.mxu0 0.0
          %4697 = vmatpush1.msra.mxu0 0.0
          %4698 = vmatprep.subr.mxu0 0.0
          %4699 = vmatpush1.msra.mxu0 0.0
          %4700 = vmatprep.subr.mxu0 0.0
          %4701 = vmatpush1.msra.mxu0 0.0
          %4702 = vmatprep.subr.mxu0 0.0
          %4703 = vmatpush1.msra.mxu0 0.0
          %4704 = vmatprep.subr.mxu0 0.0
          %4705 = vmatpush1.msra.mxu0 0.0
          %4706 = vmatprep.subr.mxu0 0.0
          %4707 = vmatpush1.msra.mxu0 0.0
          %4708 = vmatprep.subr.mxu0 0.0
          %4709 = vmatpush1.msra.mxu0 0.0
          %4710 = vmatprep.subr.mxu0 0.0
          %4711 = vmatpush1.msra.mxu0 0.0
          %4712 = vmatprep.subr.mxu0 0.0
          %4713 = vmatpush1.msra.mxu0 0.0
          %4714 = vmatprep.subr.mxu0 0.0
          %4715 = vmatpush1.msra.mxu0 0.0
          %4716 = vmatprep.subr.mxu0 0.0
          %4717 = vmatpush1.msra.mxu0 0.0
          %4718 = vmatprep.mubr.f32.mxu0 0.0
          %4719 = vmatmul.mubr.f32.gmra.mrb[0].mxu0 %v4607
          %v4720 = vpop.f32.mrb[0].mxu0
          %v4721 = vadd.f32 %v4604, %v4720
          %v4722 = vpop.f32.mrb[0].mxu0
          %4723 = vmatprep.mubr.f32.mxu0 0.0
          %4724 = vmatmul.mubr.f32.gmra.mrb[0].mxu0 %v4610
          %v4725 = vpop.f32.mrb[0].mxu0
          %v4726 = vadd.f32 %v4604, %v4725
          %v4727 = vpop.f32.mrb[0].mxu0
          %4728 = vmatprep.mubr.f32.mxu0 0.0
          %4729 = vmatmul.mubr.f32.gmra.mrb[0].mxu0 %v4613
          %v4730 = vpop.f32.mrb[0].mxu0
          %v4731 = vadd.f32 %v4604, %v4730
          %v4732 = vpop.f32.mrb[0].mxu0
          %4733 = vmatprep.mubr.f32.mxu0 0.0
          %4734 = vmatmul.mubr.f32.gmra.mrb[0].mxu0 %v4616
          %v4735 = vpop.f32.mrb[0].mxu0
          %v4736 = vadd.f32 %v4604, %v4735
          %v4737 = vpop.f32.mrb[0].mxu0
          %4738 = vmatprep.mubr.f32.mxu0 0.0
          %4739 = vmatmul.mubr.f32.gmra.mrb[0].mxu0 %v4619
          %v4740 = vpop.f32.mrb[0].mxu0
          %v4741 = vadd.f32 %v4604, %v4740
          %v4742 = vpop.f32.mrb[0].mxu0
          %4743 = vmatprep.mubr.f32.mxu0 0.0
          %4744 = vmatmul.mubr.f32.gmra.mrb[0].mxu0 %v4622
          %v4745 = vpop.f32.mrb[0].mxu0
          %v4746 = vadd.f32 %v4604, %v4745
          %v4747 = vpop.f32.mrb[0].mxu0
          %4748 = vmatprep.mubr.f32.mxu0 0.0
          %4749 = vmatmul.mubr.f32.gmra.mrb[0].mxu0 %v4625
          %v4750 = vpop.f32.mrb[0].mxu0
          %v4751 = vadd.f32 %v4604, %v4750
          %v4752 = vpop.f32.mrb[0].mxu0
          %4753 = vmatprep.mubr.f32.mxu0 0.0
          %4754 = vmatmul.mubr.f32.gmra.mrb[0].mxu0 %v4628
          %v4755 = vpop.f32.mrb[0].mxu0
          %v4756 = vadd.f32 %v4604, %v4755
          %v4757 = vpop.f32.mrb[0].mxu0
          %4758 = vmatprep.mubr.f32.mxu0 0.0
          %4759 = vmatmul.mubr.f32.gmra.mrb[0].mxu0 %v4631
          %v4760 = vpop.f32.mrb[0].mxu0
          %v4761 = vadd.f32 %v4604, %v4760
          %v4762 = vpop.f32.mrb[0].mxu0
          %4763 = vmatprep.mubr.f32.mxu0 0.0
          %4764 = vmatmul.mubr.f32.gmra.mrb[0].mxu0 %v4634
          %v4765 = vpop.f32.mrb[0].mxu0
          %v4766 = vadd.f32 %v4604, %v4765
          %v4767 = vpop.f32.mrb[0].mxu0
          %4768 = vmatprep.mubr.f32.mxu0 0.0
          %4769 = vmatmul.mubr.f32.gmra.mrb[0].mxu0 %v4637
          %v4770 = vpop.f32.mrb[0].mxu0
          %v4771 = vadd.f32 %v4604, %v4770
          %v4772 = vpop.f32.mrb[0].mxu0
          %4773 = vmatprep.mubr.f32.mxu0 0.0
          %4774 = vmatmul.mubr.f32.gmra.mrb[0].mxu0 %v4640
          %v4775 = vpop.f32.mrb[0].mxu0
          %v4776 = vadd.f32 %v4604, %v4775
          %v4777 = vpop.f32.mrb[0].mxu0
          %4778 = vmatprep.mubr.f32.mxu0 0.0
          %4779 = vmatmul.mubr.f32.gmra.mrb[0].mxu0 %v4643
          %v4780 = vpop.f32.mrb[0].mxu0
          %v4781 = vadd.f32 %v4604, %v4780
          %v4782 = vpop.f32.mrb[0].mxu0
          %4783 = vmatprep.mubr.f32.mxu0 0.0
          %4784 = vmatmul.mubr.f32.gmra.mrb[0].mxu0 %v4646
          %v4785 = vpop.f32.mrb[0].mxu0
          %v4786 = vadd.f32 %v4604, %v4785
          %v4787 = vpop.f32.mrb[0].mxu0
          %4788 = vmatprep.mubr.f32.mxu0 0.0
          %4789 = vmatmul.mubr.f32.gmra.mrb[0].mxu0 %v4649
          %v4790 = vpop.f32.mrb[0].mxu0
          %v4791 = vadd.f32 %v4604, %v4790
          %v4792 = vpop.f32.mrb[0].mxu0
          %4793 = vmatprep.mubr.f32.mxu0 0.0
          %4794 = vmatmul.mubr.f32.gmra.mrb[0].mxu0 %v4652
          %v4795 = vpop.f32.mrb[0].mxu0
          %v4796 = vadd.f32 %v4604, %v4795
          %v4797 = vpop.f32.mrb[0].mxu0
          %4798 = vdwg.mxu0
          %v4800 = vsel %vm1977, %v4576, 0
          %v4803 = vsel %vm1977, %v4721, 0
          %v4806 = vsel %vm1977, %v4726, 0
          %v4809 = vsel %vm1977, %v4731, 0
          %v4812 = vsel %vm1977, %v4736, 0
          %v4815 = vsel %vm1977, %v4741, 0
          %v4818 = vsel %vm1977, %v4746, 0
          %v4821 = vsel %vm1977, %v4751, 0
          %v4824 = vsel %vm1977, %v4756, 0
          %v4827 = vsel %vm1977, %v4761, 0
          %v4830 = vsel %vm1977, %v4766, 0
          %v4833 = vsel %vm1977, %v4771, 0
          %v4836 = vsel %vm1977, %v4776, 0
          %v4839 = vsel %vm1977, %v4781, 0
          %v4842 = vsel %vm1977, %v4786, 0
          %v4845 = vsel %vm1977, %v4791, 0
          %v4848 = vsel %vm1977, %v4796, 0
          %4850 = vmatprep.subr.mxu0 0.0
          %4851 = vmatpush1.xpose.msra.mxu0 %v4803
          %4852 = vmatprep.subr.mxu0 0.0
          %4853 = vmatpush1.xpose.msra.mxu0 %v4806
          %4854 = vmatprep.subr.mxu0 0.0
          %4855 = vmatpush1.xpose.msra.mxu0 %v4809
          %4856 = vmatprep.subr.mxu0 0.0
          %4857 = vmatpush1.xpose.msra.mxu0 %v4812
          %4858 = vmatprep.subr.mxu0 0.0
          %4859 = vmatpush1.xpose.msra.mxu0 %v4815
          %4860 = vmatprep.subr.mxu0 0.0
          %4861 = vmatpush1.xpose.msra.mxu0 %v4818
          %4862 = vmatprep.subr.mxu0 0.0
          %4863 = vmatpush1.xpose.msra.mxu0 %v4821
          %4864 = vmatprep.subr.mxu0 0.0
          %4865 = vmatpush1.xpose.msra.mxu0 %v4824
          %4866 = vmatprep.subr.mxu0 0.0
          %4867 = vmatpush1.xpose.msra.mxu0 %v4827
          %4868 = vmatprep.subr.mxu0 0.0
          %4869 = vmatpush1.xpose.msra.mxu0 %v4830
          %4870 = vmatprep.subr.mxu0 0.0
          %4871 = vmatpush1.xpose.msra.mxu0 %v4833
          %4872 = vmatprep.subr.mxu0 0.0
          %4873 = vmatpush1.xpose.msra.mxu0 %v4836
          %4874 = vmatprep.subr.mxu0 0.0
          %4875 = vmatpush1.xpose.msra.mxu0 %v4839
          %4876 = vmatprep.subr.mxu0 0.0
          %4877 = vmatpush1.xpose.msra.mxu0 %v4842
          %4878 = vmatprep.subr.mxu0 0.0
          %4879 = vmatpush1.xpose.msra.mxu0 %v4845
          %4880 = vmatprep.subr.mxu0 0.0
          %4881 = vmatpush1.xpose.msra.mxu0 %v4848
          %4882 = vmatprep.subr.mxu0 0.0
          %4883 = vmatpush1.xpose.msra.mxu0 0.0
          %4884 = vmatprep.subr.mxu0 0.0
          %4885 = vmatpush1.xpose.msra.mxu0 0.0
          %4886 = vmatprep.subr.mxu0 0.0
          %4887 = vmatpush1.xpose.msra.mxu0 0.0
          %4888 = vmatprep.subr.mxu0 0.0
          %4889 = vmatpush1.xpose.msra.mxu0 0.0
          %4890 = vmatprep.subr.mxu0 0.0
          %4891 = vmatpush1.xpose.msra.mxu0 0.0
          %4892 = vmatprep.subr.mxu0 0.0
          %4893 = vmatpush1.xpose.msra.mxu0 0.0
          %4894 = vmatprep.subr.mxu0 0.0
          %4895 = vmatpush1.xpose.msra.mxu0 0.0
          %4896 = vmatprep.subr.mxu0 0.0
          %4897 = vmatpush1.xpose.msra.mxu0 0.0
          %4898 = vmatprep.subr.mxu0 0.0
          %4899 = vmatpush1.xpose.msra.mxu0 0.0
          %4900 = vmatprep.subr.mxu0 0.0
          %4901 = vmatpush1.xpose.msra.mxu0 0.0
          %4902 = vmatprep.subr.mxu0 0.0
          %4903 = vmatpush1.xpose.msra.mxu0 0.0
          %4904 = vmatprep.subr.mxu0 0.0
          %4905 = vmatpush1.xpose.msra.mxu0 0.0
          %4906 = vmatprep.subr.mxu0 0.0
          %4907 = vmatpush1.xpose.msra.mxu0 0.0
          %4908 = vmatprep.subr.mxu0 0.0
          %4909 = vmatpush1.xpose.msra.mxu0 0.0
          %4910 = vmatprep.subr.mxu0 0.0
          %4911 = vmatpush1.xpose.msra.mxu0 0.0
          %4912 = vmatprep.subr.mxu0 0.0
          %4913 = vmatpush1.xpose.msra.mxu0 0.0
          %4914 = vmatprep.mubr.f32.mxu0 0.0
          %4915 = vmatmul.mubr.f32.gmra.mrb[0].mxu0 %v4800
          %v4916 = vpop.f32.mrb[0].mxu0
          %v4917 = vadd.f32 0.0, %v4916
          %v4918 = vpop.f32.mrb[0].mxu0
          %4919 = vdwg.mxu0
          %v4920 = vmul.f32 %v4917, 0.35355338
          %4921 = vst [vmem:[%s1700] sm:$0xff] %v4920
        $region248: #{tpu_custom_call.1} parent=155 // pred_fallthru
          _
        %s4922 = sand.u32 %s948, 1
        %s4923 = scalar_lea.sflag [#allocation6], %s4922
        %s4924 = sand.u32 %s948, 1
        %s4925 = smul.addr %s4924, 8
        %s4926 = scalar_lea.vmem [#allocation33], %s4925
        // Predicated region
        $region249: #{tpu_custom_call.1} parent=155 // pred_check
          %p4927 = pneg %p958
        $region250: #{tpu_custom_call.1} parent=155 // pred_check_branch
          %4929 = sbr.rel (%p4927) target = $region252
        $region251: #{tpu_custom_call.1} parent=155 // pred_region
          %s4931 = ssub.s32 128, 128
          %4932 = vsyncadd %s4923, %s4931
          %s4933 = smul.addr %s98, 128
          %s4934 = scalar_lea.hbm %s69, %s4933
          %s4936 = sshll.u32 %s4926, 4
          %s4937 = int_to_ptr.vmem [resolvable:$true] %s4936
          %4939 = dma.vmem_to_hbm [thread:$0]  %s4937, 128, %s4934, %s4923
        $region252: #{tpu_custom_call.1} parent=155 // pred_fallthru
          _
      $region156: #{tpu_custom_call.1} parent=5 // pred_fallthru
        _
      %p4940 = scmp.le.s32.totalorder 2, %s89
      // Predicated region
      $region253: #{tpu_custom_call.1} parent=5 // pred_check
        %p4941 = pneg %p4940
      $region254: #{tpu_custom_call.1} parent=5 // pred_check_branch
        %4943 = sbr.rel (%p4941) target = $region256
      $region255: #{tpu_custom_call.1} parent=5 // pred_region
        %s4944 = ssub.s32 %s89, 2
        // Predicated region
        $region257: #{tpu_custom_call.1} parent=255 // pred_check
          %p4945 = pneg %p964
        $region258: #{tpu_custom_call.1} parent=255 // pred_check_branch
          %4947 = sbr.rel (%p4945) target = $region260
        $region259: #{tpu_custom_call.1} parent=255 // pred_region
          %s4948 = sand.u32 %s949, 1
          %s4949 = scalar_lea.sflag [#allocation6], %s4948
          %s4950 = sand.u32 %s949, 1
          %s4951 = smul.addr %s4950, 8
          %s4952 = scalar_lea.vmem [#allocation33], %s4951
          %4953 = dma.done %s4949, 128
        $region260: #{tpu_custom_call.1} parent=255 // pred_fallthru
          _
      $region256: #{tpu_custom_call.1} parent=5 // pred_fallthru
        _
    $region6: #{tpu_custom_call.1} parent=1 // loop_footer
      %s93 = sadd.s32 1, %s89
    $region7: #{tpu_custom_call.1} parent=1 // loop_footer_branch
      %88 = sbr.rel target = $region3
    $region8: #{tpu_custom_call.1} parent=1 // loop_exit
      _
    %4954 = vsyncpa [#allocation5], 1
    %s4955 = scalar_lea.sflag [#allocation5], 1
    %4956 = vsyncpa %s4955, 1
    %4957 = vsyncpa [#allocation8], 1
    %s4958 = scalar_lea.sflag [#allocation8], 1
    %4959 = vsyncpa %s4958, 1
    %4960 = vsyncpa [#allocation11], 1
    %4961 = vsyncpa [#allocation14], 1
    %4962 = vsyncpa [#allocation17], 1
    %4963 = vsyncpa [#allocation20], 1
    %4964 = vsyncpa [#allocation23], 1
    %4965 = vsyncpa [#allocation6], 1
    %s4966 = scalar_lea.sflag [#allocation6], 1
    %4967 = vsyncpa %s4966, 1

</llo_original>
